<compile_context>
chip_gen: v6e
topology: v6e:2x2x1
jax: 0.10.0
libtpu: 0.0.40
codegen_flags: <defaults>
</compile_context>

<pallas_src>
import jax
import jax.numpy as jnp
from jax.experimental import pallas as pl
from jax.experimental.pallas import tpu as pltpu

LANES = 128          # lane width / output-channel padding target
NUM_CLASSES = 3
VMEM_LIMIT = 32 * 1024 * 1024


def _round_up(n, m):
    return ((n + m - 1) // m) * m


def _pad_axis(x, axis, size):
    pad = size - x.shape[axis]
    if pad <= 0:
        return x
    widths = [(0, 0)] * x.ndim
    widths[axis] = (0, pad)
    return jnp.pad(x, widths)


# ----------------------------- Pallas kernels ------------------------------

def _conv_pool_relu_kernel(p_ref, w_ref, b_ref, o_ref):
    # p_ref: (4, TR, K)  bf16 -- im2col patches, one matrix per 2x2-pool candidate
    # w_ref: (K, 128)    bf16 -- conv weight, Cout zero-padded to 128 lanes
    # b_ref: (1, 128)    f32  -- conv bias, zero-padded
    # o_ref: (TR, 128)   f32  -- relu(maxpool(conv)) rows, lane-dense store
    w = w_ref[...]
    b = b_ref[...]

    def cand(c):
        return jnp.dot(p_ref[c], w, preferred_element_type=jnp.float32) + b

    y = jnp.maximum(jnp.maximum(cand(0), cand(1)),
                    jnp.maximum(cand(2), cand(3)))
    o_ref[...] = jnp.maximum(y, 0.0)            # relu(maxpool(.)) == maxpool(relu(.))


def _mlp_head_kernel(x_ref, w1_ref, b1_ref, w2_ref, b2_ref, w3_ref, b3_ref,
                     feas_ref, logits_ref, pred_ref, logpred_ref):
    # x_ref: (TB, 256) bf16; w*: bf16 weights padded to 128 output lanes; b*: f32.
    # fc1 + relu
    h1 = jnp.dot(x_ref[...], w1_ref[...], preferred_element_type=jnp.float32)
    h1 = jnp.maximum(h1 + b1_ref[...], 0.0)

    # fc2 -> dropout -> relu
    # TODO(synk): nn.Dropout training-mode stochastic masking not implemented;
    #             eval-mode dropout (identity) is used here.
    h2 = jnp.dot(h1.astype(jnp.bfloat16), w2_ref[...],
                 preferred_element_type=jnp.float32)
    feas = jnp.maximum(h2 + b2_ref[...], 0.0)
    feas_ref[...] = feas

    # fc_logits
    logits = jnp.dot(feas.astype(jnp.bfloat16), w3_ref[...],
                     preferred_element_type=jnp.float32) + b3_ref[...]
    logits_ref[...] = logits

    # masked softmax / log_softmax over the NUM_CLASSES valid lanes
    col = jax.lax.broadcasted_iota(jnp.int32, logits.shape, 1)
    valid = col < NUM_CLASSES
    m = jnp.max(jnp.where(valid, logits, jnp.float32(-1e30)), axis=1, keepdims=True)
    e = jnp.where(valid, jnp.exp(logits - m), 0.0)
    s = jnp.sum(e, axis=1, keepdims=True)
    pred_ref[...] = e * pl.reciprocal(s, approx=True)
    logpred_ref[...] = (logits - m) - jnp.log(s)


# ------------------------------ thin wrappers -------------------------------

def conv_pool_relu(patches, w_mat, bias, *, row_tile=256):
    """Fused conv-as-matmul + bias + 2x2 maxpool + relu.

    patches: (4, N, K) -- 4 pool-window candidates of im2col rows.
    w_mat:   (K, Cout); bias: (Cout,).  Returns (N, Cout) f32.
    """
    _, n, k = patches.shape
    cout = w_mat.shape[1]

    tr = min(row_tile, _round_up(n, 16))
    n_pad = _round_up(n, tr)

    p = _pad_axis(patches, 1, n_pad).astype(jnp.bfloat16)
    w = _pad_axis(w_mat, 1, LANES).astype(jnp.bfloat16)
    b = _pad_axis(bias.reshape(1, -1), 1, LANES).astype(jnp.float32)

    cost = pl.CostEstimate(
        flops=2 * 4 * n_pad * k * LANES,
        transcendentals=0,
        bytes_accessed=p.size * 2 + w.size * 2 + b.size * 4 + n_pad * LANES * 4,
    )
    out = pl.pallas_call(
        _conv_pool_relu_kernel,
        out_shape=jax.ShapeDtypeStruct((n_pad, LANES), jnp.float32),
        grid=(n_pad // tr,),
        in_specs=[
            pl.BlockSpec((4, tr, k), lambda i: (0, i, 0)),
            pl.BlockSpec((k, LANES), lambda i: (0, 0)),
            pl.BlockSpec((1, LANES), lambda i: (0, 0)),
        ],
        out_specs=pl.BlockSpec((tr, LANES), lambda i: (i, 0)),
        compiler_params=pltpu.CompilerParams(
            dimension_semantics=("parallel",),
            vmem_limit_bytes=VMEM_LIMIT,
        ),
        cost_estimate=cost,
    )(p, w, b)
    return out[:n, :cout]


def mlp_head(flat, params, *, row_tile=256):
    """Fused fc1+relu -> fc2+dropout(eval)+relu -> fc_logits -> softmax/log_softmax."""
    bsz, d_in = flat.shape                      # d_in = 256 (already lane-aligned)
    tb = min(row_tile, _round_up(bsz, 16))
    b_pad = _round_up(bsz, tb)

    x = _pad_axis(flat, 0, b_pad).astype(jnp.bfloat16)
    w1 = _pad_axis(params["fc1_w"], 1, LANES).astype(jnp.bfloat16)          # (256,128)
    b1 = _pad_axis(params["fc1_b"].reshape(1, -1), 1, LANES).astype(jnp.float32)
    w2 = _pad_axis(_pad_axis(params["fc2_w"], 0, LANES), 1, LANES).astype(jnp.bfloat16)
    b2 = _pad_axis(params["fc2_b"].reshape(1, -1), 1, LANES).astype(jnp.float32)
    w3 = _pad_axis(_pad_axis(params["fc_logits_w"], 0, LANES), 1, LANES).astype(jnp.bfloat16)
    b3 = _pad_axis(params["fc_logits_b"].reshape(1, -1), 1, LANES).astype(jnp.float32)

    row_spec = pl.BlockSpec((tb, LANES), lambda i: (i, 0))
    const2d = lambda i: (0, 0)
    out_sds = jax.ShapeDtypeStruct((b_pad, LANES), jnp.float32)
    cost = pl.CostEstimate(
        flops=2 * b_pad * (d_in + LANES + LANES) * LANES,
        transcendentals=2 * b_pad * LANES,
        bytes_accessed=(x.size * 2 + (w1.size + w2.size + w3.size) * 2
                        + 3 * LANES * 4 + 4 * b_pad * LANES * 4),
    )
    feas, logits, pred, logpred = pl.pallas_call(
        _mlp_head_kernel,
        out_shape=(out_sds, out_sds, out_sds, out_sds),
        grid=(b_pad // tb,),
        in_specs=[
            pl.BlockSpec((tb, d_in), lambda i: (i, 0)),
            pl.BlockSpec((d_in, LANES), const2d),
            pl.BlockSpec((1, LANES), const2d),
            pl.BlockSpec((LANES, LANES), const2d),
            pl.BlockSpec((1, LANES), const2d),
            pl.BlockSpec((LANES, LANES), const2d),
            pl.BlockSpec((1, LANES), const2d),
        ],
        out_specs=(row_spec, row_spec, row_spec, row_spec),
        compiler_params=pltpu.CompilerParams(
            dimension_semantics=("parallel",),
            vmem_limit_bytes=VMEM_LIMIT,
        ),
        cost_estimate=cost,
    )(x, w1, b1, w2, b2, w3, b3)

    feas = feas[:bsz, :params["fc2_w"].shape[1]]
    logits = logits[:bsz, :NUM_CLASSES]
    pred = pred[:bsz, :NUM_CLASSES]
    logpred = logpred[:bsz, :NUM_CLASSES]
    return logpred, pred, logits, feas


# ------------------------------ XLA-side glue --------------------------------
# TODO(synk): patch / pool-candidate extraction is still done in plain XLA (it
# materializes the im2col expansion in HBM); moving it inside the conv kernel
# (in-VMEM shifted slices) is the remaining recommended optimization.

def pooled_patches(x_nhwc, k):
    """im2col for a valid k x k conv followed by 2x2 stride-2 maxpool.
    Returns ((4, B*Hp*Wp, k*k*Cin), (B, Hp, Wp)) -- one patch matrix per
    pool-window candidate (di, dj) in {0,1}^2."""
    b, h, w, cin = x_nhwc.shape
    hp, wp = (h - k + 1) // 2, (w - k + 1) // 2
    cands = []
    for di in (0, 1):
        for dj in (0, 1):
            taps = [
                x_nhwc[:, di + ki: di + ki + 2 * hp: 2,
                          dj + kj: dj + kj + 2 * wp: 2, :]
                for ki in range(k) for kj in range(k)
            ]                                            # each (B, Hp, Wp, Cin)
            pt = jnp.stack(taps, axis=3)                 # (B, Hp, Wp, k*k, Cin)
            cands.append(pt.reshape(b * hp * wp, k * k * cin))
    return jnp.stack(cands, axis=0), (b, hp, wp)


def conv_weight_to_matrix(w_oihw):
    """PyTorch (Cout, Cin, K, K) -> (K*K*Cin, Cout), matching pooled_patches order."""
    cout, cin, kh, kw = w_oihw.shape
    return jnp.transpose(w_oihw, (2, 3, 1, 0)).reshape(kh * kw * cin, cout)


# ------------------------------- full forward -------------------------------

@jax.jit
def lenet_dropout_forward(x_nchw, params):
    x = jnp.transpose(x_nchw, (0, 2, 3, 1)).astype(jnp.float32)    # NHWC (B,28,28,1)

    # conv1 (1->6, 5x5) + relu + maxpool 2x2   -- single fused Pallas kernel
    p1, (bsz, h1, w1_) = pooled_patches(x, 5)                      # (4, B*144, 25)
    y1 = conv_pool_relu(p1, conv_weight_to_matrix(params["conv1_w"]),
                        params["conv1_b"])                         # (B*144, 6)
    y1 = y1.reshape(bsz, h1, w1_, 6)                               # (B,12,12,6)

    # conv2 (6->16, 5x5) + relu + maxpool 2x2  -- single fused Pallas kernel
    p2, (_, h2, w2_) = pooled_patches(y1, 5)                       # (4, B*16, 150)
    y2 = conv_pool_relu(p2, conv_weight_to_matrix(params["conv2_w"]),
                        params["conv2_b"])                         # (B*16, 16)
    y2 = y2.reshape(bsz, h2, w2_, 16)                              # (B,4,4,16)

    # flatten in PyTorch NCHW order: (B,16,4,4) -> (B,256)
    flat = jnp.transpose(y2, (0, 3, 1, 2)).reshape(bsz, 16 * h2 * w2_)

    # fc1+relu -> fc2+dropout(eval)+relu -> fc_logits -> softmax / log_softmax
    return mlp_head(flat, params)


# ---------------------------------- main ------------------------------------

if __name__ == "__main__":
    key = jax.random.PRNGKey(0)
    ks = jax.random.split(key, 12)

    # Deterministic synthetic parameters (shapes follow the PyTorch module).
    params = {
        "conv1_w":     jax.random.normal(ks[0], (6, 1, 5, 5), jnp.float32) * 0.1,
        "conv1_b":     jax.random.normal(ks[1], (6,), jnp.float32) * 0.1,
        "conv2_w":     jax.random.normal(ks[2], (16, 6, 5, 5), jnp.float32) * 0.1,
        "conv2_b":     jax.random.normal(ks[3], (16,), jnp.float32) * 0.1,
        "fc1_w":       jax.random.normal(ks[4], (256, 120), jnp.float32) * 0.05,
        "fc1_b":       jax.random.normal(ks[5], (120,), jnp.float32) * 0.05,
        "fc2_w":       jax.random.normal(ks[6], (120, 84), jnp.float32) * 0.05,
        "fc2_b":       jax.random.normal(ks[7], (84,), jnp.float32) * 0.05,
        "fc_logits_w": jax.random.normal(ks[8], (84, 3), jnp.float32) * 0.05,
        "fc_logits_b": jax.random.normal(ks[9], (3,), jnp.float32) * 0.05,
    }

    # LeNet geometry requires 28x28 single-channel input (fc1 expects 16*4*4).
    x = jax.random.normal(ks[10], (2, 1, 28, 28), jnp.float32)

    log_pred, pred, logits, feas = lenet_dropout_forward(x, params)
    jax.block_until_ready((log_pred, pred, logits, feas))

    assert log_pred.shape == (2, 3) and pred.shape == (2, 3)
    assert logits.shape == (2, 3) and feas.shape == (2, 84)
    assert bool(jnp.isfinite(logits).all()) and bool(jnp.isfinite(feas).all())
    assert bool(jnp.isfinite(log_pred).all()) and bool((pred >= 0.0).all())
    print("KERNEL_OK")
</pallas_src>

<mosaic_0001>
module attributes {stable_mosaic.version = 11 : i64} {
  func.func @_conv_pool_relu_kernel(%arg0: i32, %arg1: memref<4x256x25xbf16, #tpu.memory_space<vmem>>, %arg2: memref<25x128xbf16, #tpu.memory_space<vmem>>, %arg3: memref<1x128xf32, #tpu.memory_space<vmem>>, %arg4: memref<256x128xf32, #tpu.memory_space<vmem>>) attributes {dimension_semantics = [#tpu.dimension_semantics<parallel>], iteration_bounds = array<i64: 2>, scalar_prefetch = 0 : i64, scratch_operands = 0 : i64, tpu.core_type = #tpu.core_type<tc>, window_params = [{transform_indices = @transform_0, window_bounds = array<i64: 4, 256, 25>}, {pipeline_mode = #tpu.pipeline_mode<synchronous>, transform_indices = @transform_1, window_bounds = array<i64: 25, 128>}, {pipeline_mode = #tpu.pipeline_mode<synchronous>, transform_indices = @transform_2, window_bounds = array<i64: 1, 128>}, {transform_indices = @transform_3, window_bounds = array<i64: 256, 128>}]} {
    %c0 = arith.constant 0 : index
    %c0_0 = arith.constant 0 : index
    %0 = vector.load %arg2[%c0, %c0_0] : memref<25x128xbf16, #tpu.memory_space<vmem>>, vector<25x128xbf16>
    %c0_1 = arith.constant 0 : index
    %c0_2 = arith.constant 0 : index
    %1 = vector.load %arg3[%c0_1, %c0_2] : memref<1x128xf32, #tpu.memory_space<vmem>>, vector<1x128xf32>
    %c0_3 = arith.constant 0 : index
    %c0_4 = arith.constant 0 : index
    %c0_5 = arith.constant 0 : index
    %2 = vector.load %arg1[%c0_3, %c0_4, %c0_5] : memref<4x256x25xbf16, #tpu.memory_space<vmem>>, vector<1x256x25xbf16>
    %3 = vector.shape_cast %2 : vector<1x256x25xbf16> to vector<256x25xbf16>
    %cst = arith.constant dense<0.000000e+00> : vector<256x128xf32>
    %4 = tpu.matmul %3, %0, %cst {dimension_numbers = #tpu.dot_dimension_numbers<[1], [0], [0], [1], [0, 0, 1, 1], [], []>} : vector<256x25xbf16>, vector<25x128xbf16>, vector<256x128xf32> -> vector<256x128xf32>
    %5 = vector.broadcast %1 : vector<1x128xf32> to vector<256x128xf32>
    %6 = arith.addf %4, %5 : vector<256x128xf32>
    %c1 = arith.constant 1 : index
    %c0_6 = arith.constant 0 : index
    %c0_7 = arith.constant 0 : index
    %7 = vector.load %arg1[%c1, %c0_6, %c0_7] : memref<4x256x25xbf16, #tpu.memory_space<vmem>>, vector<1x256x25xbf16>
    %8 = vector.shape_cast %7 : vector<1x256x25xbf16> to vector<256x25xbf16>
    %cst_8 = arith.constant dense<0.000000e+00> : vector<256x128xf32>
    %9 = tpu.matmul %8, %0, %cst_8 {dimension_numbers = #tpu.dot_dimension_numbers<[1], [0], [0], [1], [0, 0, 1, 1], [], []>} : vector<256x25xbf16>, vector<25x128xbf16>, vector<256x128xf32> -> vector<256x128xf32>
    %10 = vector.broadcast %1 : vector<1x128xf32> to vector<256x128xf32>
    %11 = arith.addf %9, %10 : vector<256x128xf32>
    %12 = arith.maximumf %6, %11 : vector<256x128xf32>
    %c2 = arith.constant 2 : index
    %c0_9 = arith.constant 0 : index
    %c0_10 = arith.constant 0 : index
    %13 = vector.load %arg1[%c2, %c0_9, %c0_10] : memref<4x256x25xbf16, #tpu.memory_space<vmem>>, vector<1x256x25xbf16>
    %14 = vector.shape_cast %13 : vector<1x256x25xbf16> to vector<256x25xbf16>
    %cst_11 = arith.constant dense<0.000000e+00> : vector<256x128xf32>
    %15 = tpu.matmul %14, %0, %cst_11 {dimension_numbers = #tpu.dot_dimension_numbers<[1], [0], [0], [1], [0, 0, 1, 1], [], []>} : vector<256x25xbf16>, vector<25x128xbf16>, vector<256x128xf32> -> vector<256x128xf32>
    %16 = vector.broadcast %1 : vector<1x128xf32> to vector<256x128xf32>
    %17 = arith.addf %15, %16 : vector<256x128xf32>
    %c3 = arith.constant 3 : index
    %c0_12 = arith.constant 0 : index
    %c0_13 = arith.constant 0 : index
    %18 = vector.load %arg1[%c3, %c0_12, %c0_13] : memref<4x256x25xbf16, #tpu.memory_space<vmem>>, vector<1x256x25xbf16>
    %19 = vector.shape_cast %18 : vector<1x256x25xbf16> to vector<256x25xbf16>
    %cst_14 = arith.constant dense<0.000000e+00> : vector<256x128xf32>
    %20 = tpu.matmul %19, %0, %cst_14 {dimension_numbers = #tpu.dot_dimension_numbers<[1], [0], [0], [1], [0, 0, 1, 1], [], []>} : vector<256x25xbf16>, vector<25x128xbf16>, vector<256x128xf32> -> vector<256x128xf32>
    %21 = vector.broadcast %1 : vector<1x128xf32> to vector<256x128xf32>
    %22 = arith.addf %20, %21 : vector<256x128xf32>
    %23 = arith.maximumf %17, %22 : vector<256x128xf32>
    %24 = arith.maximumf %12, %23 : vector<256x128xf32>
    %cst_15 = arith.constant 0.000000e+00 : f32
    %25 = vector.broadcast %cst_15 : f32 to vector<256x128xf32>
    %26 = arith.maximumf %24, %25 : vector<256x128xf32>
    %c0_16 = arith.constant 0 : index
    %c0_17 = arith.constant 0 : index
    %27 = vector.load %arg4[%c0_16, %c0_17] : memref<256x128xf32, #tpu.memory_space<vmem>>, vector<256x128xf32>
    tpu.vector_store %arg4[%c0_16, %c0_17], %26 {strides = array<i32>} : memref<256x128xf32, #tpu.memory_space<vmem>>, vector<256x128xf32>,
    return
  }
  func.func @transform_0(%arg0: i32) -> (i32, i32, i32) {
    %c0_i32 = arith.constant 0 : i32
    %c0_i32_0 = arith.constant 0 : i32
    %c0_i32_1 = arith.constant 0 : i32
    return %c0_i32, %arg0, %c0_i32_0 : i32, i32, i32
  }
  func.func @transform_1(%arg0: i32) -> (i32, i32) {
    %c0_i32 = arith.constant 0 : i32
    %c0_i32_0 = arith.constant 0 : i32
    %c0_i32_1 = arith.constant 0 : i32
    return %c0_i32, %c0_i32_0 : i32, i32
  }
  func.func @transform_2(%arg0: i32) -> (i32, i32) {
    %c0_i32 = arith.constant 0 : i32
    %c0_i32_0 = arith.constant 0 : i32
    %c0_i32_1 = arith.constant 0 : i32
    return %c0_i32, %c0_i32_0 : i32, i32
  }
  func.func @transform_3(%arg0: i32) -> (i32, i32) {
    %c0_i32 = arith.constant 0 : i32
    %c0_i32_0 = arith.constant 0 : i32
    return %arg0, %c0_i32 : i32, i32
  }
}

module attributes {stable_mosaic.version = 11 : i64} {
  func.func @_conv_pool_relu_kernel(%arg0: i32, %arg1: memref<4x32x150xbf16, #tpu.memory_space<vmem>>, %arg2: memref<150x128xbf16, #tpu.memory_space<vmem>>, %arg3: memref<1x128xf32, #tpu.memory_space<vmem>>, %arg4: memref<32x128xf32, #tpu.memory_space<vmem>>) attributes {dimension_semantics = [#tpu.dimension_semantics<parallel>], iteration_bounds = array<i64: 1>, scalar_prefetch = 0 : i64, scratch_operands = 0 : i64, tpu.core_type = #tpu.core_type<tc>, window_params = [{transform_indices = @transform_0, window_bounds = array<i64: 4, 32, 150>}, {pipeline_mode = #tpu.pipeline_mode<synchronous>, transform_indices = @transform_1, window_bounds = array<i64: 150, 128>}, {pipeline_mode = #tpu.pipeline_mode<synchronous>, transform_indices = @transform_2, window_bounds = array<i64: 1, 128>}, {transform_indices = @transform_3, window_bounds = array<i64: 32, 128>}]} {
    %c0 = arith.constant 0 : index
    %c0_0 = arith.constant 0 : index
    %0 = vector.load %arg2[%c0, %c0_0] : memref<150x128xbf16, #tpu.memory_space<vmem>>, vector<150x128xbf16>
    %c0_1 = arith.constant 0 : index
    %c0_2 = arith.constant 0 : index
    %1 = vector.load %arg3[%c0_1, %c0_2] : memref<1x128xf32, #tpu.memory_space<vmem>>, vector<1x128xf32>
    %c0_3 = arith.constant 0 : index
    %c0_4 = arith.constant 0 : index
    %c0_5 = arith.constant 0 : index
    %2 = vector.load %arg1[%c0_3, %c0_4, %c0_5] : memref<4x32x150xbf16, #tpu.memory_space<vmem>>, vector<1x32x150xbf16>
    %3 = vector.shape_cast %2 : vector<1x32x150xbf16> to vector<32x150xbf16>
    %cst = arith.constant dense<0.000000e+00> : vector<32x128xf32>
    %4 = tpu.matmul %3, %0, %cst {dimension_numbers = #tpu.dot_dimension_numbers<[1], [0], [0], [1], [0, 0, 1, 1], [], []>} : vector<32x150xbf16>, vector<150x128xbf16>, vector<32x128xf32> -> vector<32x128xf32>
    %5 = vector.broadcast %1 : vector<1x128xf32> to vector<32x128xf32>
    %6 = arith.addf %4, %5 : vector<32x128xf32>
    %c1 = arith.constant 1 : index
    %c0_6 = arith.constant 0 : index
    %c0_7 = arith.constant 0 : index
    %7 = vector.load %arg1[%c1, %c0_6, %c0_7] : memref<4x32x150xbf16, #tpu.memory_space<vmem>>, vector<1x32x150xbf16>
    %8 = vector.shape_cast %7 : vector<1x32x150xbf16> to vector<32x150xbf16>
    %cst_8 = arith.constant dense<0.000000e+00> : vector<32x128xf32>
    %9 = tpu.matmul %8, %0, %cst_8 {dimension_numbers = #tpu.dot_dimension_numbers<[1], [0], [0], [1], [0, 0, 1, 1], [], []>} : vector<32x150xbf16>, vector<150x128xbf16>, vector<32x128xf32> -> vector<32x128xf32>
    %10 = vector.broadcast %1 : vector<1x128xf32> to vector<32x128xf32>
    %11 = arith.addf %9, %10 : vector<32x128xf32>
    %12 = arith.maximumf %6, %11 : vector<32x128xf32>
    %c2 = arith.constant 2 : index
    %c0_9 = arith.constant 0 : index
    %c0_10 = arith.constant 0 : index
    %13 = vector.load %arg1[%c2, %c0_9, %c0_10] : memref<4x32x150xbf16, #tpu.memory_space<vmem>>, vector<1x32x150xbf16>
    %14 = vector.shape_cast %13 : vector<1x32x150xbf16> to vector<32x150xbf16>
    %cst_11 = arith.constant dense<0.000000e+00> : vector<32x128xf32>
    %15 = tpu.matmul %14, %0, %cst_11 {dimension_numbers = #tpu.dot_dimension_numbers<[1], [0], [0], [1], [0, 0, 1, 1], [], []>} : vector<32x150xbf16>, vector<150x128xbf16>, vector<32x128xf32> -> vector<32x128xf32>
    %16 = vector.broadcast %1 : vector<1x128xf32> to vector<32x128xf32>
    %17 = arith.addf %15, %16 : vector<32x128xf32>
    %c3 = arith.constant 3 : index
    %c0_12 = arith.constant 0 : index
    %c0_13 = arith.constant 0 : index
    %18 = vector.load %arg1[%c3, %c0_12, %c0_13] : memref<4x32x150xbf16, #tpu.memory_space<vmem>>, vector<1x32x150xbf16>
    %19 = vector.shape_cast %18 : vector<1x32x150xbf16> to vector<32x150xbf16>
    %cst_14 = arith.constant dense<0.000000e+00> : vector<32x128xf32>
    %20 = tpu.matmul %19, %0, %cst_14 {dimension_numbers = #tpu.dot_dimension_numbers<[1], [0], [0], [1], [0, 0, 1, 1], [], []>} : vector<32x150xbf16>, vector<150x128xbf16>, vector<32x128xf32> -> vector<32x128xf32>
    %21 = vector.broadcast %1 : vector<1x128xf32> to vector<32x128xf32>
    %22 = arith.addf %20, %21 : vector<32x128xf32>
    %23 = arith.maximumf %17, %22 : vector<32x128xf32>
    %24 = arith.maximumf %12, %23 : vector<32x128xf32>
    %cst_15 = arith.constant 0.000000e+00 : f32
    %25 = vector.broadcast %cst_15 : f32 to vector<32x128xf32>
    %26 = arith.maximumf %24, %25 : vector<32x128xf32>
    %c0_16 = arith.constant 0 : index
    %c0_17 = arith.constant 0 : index
    %27 = vector.load %arg4[%c0_16, %c0_17] : memref<32x128xf32, #tpu.memory_space<vmem>>, vector<32x128xf32>
    tpu.vector_store %arg4[%c0_16, %c0_17], %26 {strides = array<i32>} : memref<32x128xf32, #tpu.memory_space<vmem>>, vector<32x128xf32>,
    return
  }
  func.func @transform_0(%arg0: i32) -> (i32, i32, i32) {
    %c0_i32 = arith.constant 0 : i32
    %c0_i32_0 = arith.constant 0 : i32
    %c0_i32_1 = arith.constant 0 : i32
    return %c0_i32, %arg0, %c0_i32_0 : i32, i32, i32
  }
  func.func @transform_1(%arg0: i32) -> (i32, i32) {
    %c0_i32 = arith.constant 0 : i32
    %c0_i32_0 = arith.constant 0 : i32
    %c0_i32_1 = arith.constant 0 : i32
    return %c0_i32, %c0_i32_0 : i32, i32
  }
  func.func @transform_2(%arg0: i32) -> (i32, i32) {
    %c0_i32 = arith.constant 0 : i32
    %c0_i32_0 = arith.constant 0 : i32
    %c0_i32_1 = arith.constant 0 : i32
    return %c0_i32, %c0_i32_0 : i32, i32
  }
  func.func @transform_3(%arg0: i32) -> (i32, i32) {
    %c0_i32 = arith.constant 0 : i32
    %c0_i32_0 = arith.constant 0 : i32
    return %arg0, %c0_i32 : i32, i32
  }
}

module attributes {stable_mosaic.version = 11 : i64} {
  func.func @_mlp_head_kernel(%arg0: i32, %arg1: memref<16x256xbf16, #tpu.memory_space<vmem>>, %arg2: memref<256x128xbf16, #tpu.memory_space<vmem>>, %arg3: memref<1x128xf32, #tpu.memory_space<vmem>>, %arg4: memref<128x128xbf16, #tpu.memory_space<vmem>>, %arg5: memref<1x128xf32, #tpu.memory_space<vmem>>, %arg6: memref<128x128xbf16, #tpu.memory_space<vmem>>, %arg7: memref<1x128xf32, #tpu.memory_space<vmem>>, %arg8: memref<16x128xf32, #tpu.memory_space<vmem>>, %arg9: memref<16x128xf32, #tpu.memory_space<vmem>>, %arg10: memref<16x128xf32, #tpu.memory_space<vmem>>, %arg11: memref<16x128xf32, #tpu.memory_space<vmem>>) attributes {dimension_semantics = [#tpu.dimension_semantics<parallel>], iteration_bounds = array<i64: 1>, scalar_prefetch = 0 : i64, scratch_operands = 0 : i64, tpu.core_type = #tpu.core_type<tc>, window_params = [{transform_indices = @transform_0, window_bounds = array<i64: 16, 256>}, {pipeline_mode = #tpu.pipeline_mode<synchronous>, transform_indices = @transform_1, window_bounds = array<i64: 256, 128>}, {pipeline_mode = #tpu.pipeline_mode<synchronous>, transform_indices = @transform_2, window_bounds = array<i64: 1, 128>}, {pipeline_mode = #tpu.pipeline_mode<synchronous>, transform_indices = @transform_3, window_bounds = array<i64: 128, 128>}, {pipeline_mode = #tpu.pipeline_mode<synchronous>, transform_indices = @transform_4, window_bounds = array<i64: 1, 128>}, {pipeline_mode = #tpu.pipeline_mode<synchronous>, transform_indices = @transform_5, window_bounds = array<i64: 128, 128>}, {pipeline_mode = #tpu.pipeline_mode<synchronous>, transform_indices = @transform_6, window_bounds = array<i64: 1, 128>}, {transform_indices = @transform_7, window_bounds = array<i64: 16, 128>}, {transform_indices = @transform_8, window_bounds = array<i64: 16, 128>}, {transform_indices = @transform_9, window_bounds = array<i64: 16, 128>}, {transform_indices = @transform_10, window_bounds = array<i64: 16, 128>}]} {
    %c0 = arith.constant 0 : index
    %c0_0 = arith.constant 0 : index
    %0 = vector.load %arg1[%c0, %c0_0] : memref<16x256xbf16, #tpu.memory_space<vmem>>, vector<16x256xbf16>
    %c0_1 = arith.constant 0 : index
    %c0_2 = arith.constant 0 : index
    %1 = vector.load %arg2[%c0_1, %c0_2] : memref<256x128xbf16, #tpu.memory_space<vmem>>, vector<256x128xbf16>
    %cst = arith.constant dense<0.000000e+00> : vector<16x128xf32>
    %2 = tpu.matmul %0, %1, %cst {dimension_numbers = #tpu.dot_dimension_numbers<[1], [0], [0], [1], [0, 0, 1, 1], [], []>} : vector<16x256xbf16>, vector<256x128xbf16>, vector<16x128xf32> -> vector<16x128xf32>
    %c0_3 = arith.constant 0 : index
    %c0_4 = arith.constant 0 : index
    %3 = vector.load %arg3[%c0_3, %c0_4] : memref<1x128xf32, #tpu.memory_space<vmem>>, vector<1x128xf32>
    %4 = vector.broadcast %3 : vector<1x128xf32> to vector<16x128xf32>
    %5 = arith.addf %2, %4 : vector<16x128xf32>
    %cst_5 = arith.constant 0.000000e+00 : f32
    %6 = vector.broadcast %cst_5 : f32 to vector<16x128xf32>
    %7 = arith.maximumf %5, %6 : vector<16x128xf32>
    %8 = arith.truncf %7 : vector<16x128xf32> to vector<16x128xbf16>
    %c0_6 = arith.constant 0 : index
    %c0_7 = arith.constant 0 : index
    %9 = vector.load %arg4[%c0_6, %c0_7] : memref<128x128xbf16, #tpu.memory_space<vmem>>, vector<128x128xbf16>
    %cst_8 = arith.constant dense<0.000000e+00> : vector<16x128xf32>
    %10 = tpu.matmul %8, %9, %cst_8 {dimension_numbers = #tpu.dot_dimension_numbers<[1], [0], [0], [1], [0, 0, 1, 1], [], []>} : vector<16x128xbf16>, vector<128x128xbf16>, vector<16x128xf32> -> vector<16x128xf32>
    %c0_9 = arith.constant 0 : index
    %c0_10 = arith.constant 0 : index
    %11 = vector.load %arg5[%c0_9, %c0_10] : memref<1x128xf32, #tpu.memory_space<vmem>>, vector<1x128xf32>
    %12 = vector.broadcast %11 : vector<1x128xf32> to vector<16x128xf32>
    %13 = arith.addf %10, %12 : vector<16x128xf32>
    %cst_11 = arith.constant 0.000000e+00 : f32
    %14 = vector.broadcast %cst_11 : f32 to vector<16x128xf32>
    %15 = arith.maximumf %13, %14 : vector<16x128xf32>
    %c0_12 = arith.constant 0 : index
    %c0_13 = arith.constant 0 : index
    %16 = vector.load %arg8[%c0_12, %c0_13] : memref<16x128xf32, #tpu.memory_space<vmem>>, vector<16x128xf32>
    tpu.vector_store %arg8[%c0_12, %c0_13], %15 {strides = array<i32>} : memref<16x128xf32, #tpu.memory_space<vmem>>, vector<16x128xf32>,
    %17 = arith.truncf %15 : vector<16x128xf32> to vector<16x128xbf16>
    %c0_14 = arith.constant 0 : index
    %c0_15 = arith.constant 0 : index
    %18 = vector.load %arg6[%c0_14, %c0_15] : memref<128x128xbf16, #tpu.memory_space<vmem>>, vector<128x128xbf16>
    %cst_16 = arith.constant dense<0.000000e+00> : vector<16x128xf32>
    %19 = tpu.matmul %17, %18, %cst_16 {dimension_numbers = #tpu.dot_dimension_numbers<[1], [0], [0], [1], [0, 0, 1, 1], [], []>} : vector<16x128xbf16>, vector<128x128xbf16>, vector<16x128xf32> -> vector<16x128xf32>
    %c0_17 = arith.constant 0 : index
    %c0_18 = arith.constant 0 : index
    %20 = vector.load %arg7[%c0_17, %c0_18] : memref<1x128xf32, #tpu.memory_space<vmem>>, vector<1x128xf32>
    %21 = vector.broadcast %20 : vector<1x128xf32> to vector<16x128xf32>
    %22 = arith.addf %19, %21 : vector<16x128xf32>
    %c0_19 = arith.constant 0 : index
    %c0_20 = arith.constant 0 : index
    %23 = vector.load %arg9[%c0_19, %c0_20] : memref<16x128xf32, #tpu.memory_space<vmem>>, vector<16x128xf32>
    tpu.vector_store %arg9[%c0_19, %c0_20], %22 {strides = array<i32>} : memref<16x128xf32, #tpu.memory_space<vmem>>, vector<16x128xf32>,
    %24 = tpu.iota {dimensions = array<i32: 1>} : vector<16x128xi32>
    %c3_i32 = arith.constant 3 : i32
    %25 = vector.broadcast %c3_i32 : i32 to vector<16x128xi32>
    %26 = arith.cmpi slt, %24, %25 : vector<16x128xi32>
    %cst_21 = arith.constant -1.000000e+30 : f32
    %27 = vector.broadcast %cst_21 : f32 to vector<16x128xf32>
    %28 = arith.select %26, %22, %27 : vector<16x128xi1>, vector<16x128xf32>
    %cst_22 = arith.constant dense<0xFF800000> : vector<16xf32>
    %29 = vector.multi_reduction <maximumf>, %28, %cst_22 [1] : vector<16x128xf32> to vector<16xf32>
    %30 = vector.shape_cast %29 : vector<16xf32> to vector<16x1xf32>
    %31 = vector.broadcast %30 : vector<16x1xf32> to vector<16x128xf32>
    %32 = arith.subf %22, %31 : vector<16x128xf32>
    %33 = math.exp %32 : vector<16x128xf32>
    %cst_23 = arith.constant 0.000000e+00 : f32
    %34 = vector.broadcast %cst_23 : f32 to vector<16x128xf32>
    %35 = arith.select %26, %33, %34 : vector<16x128xi1>, vector<16x128xf32>
    %cst_24 = arith.constant dense<0.000000e+00> : vector<16xf32>
    %36 = vector.multi_reduction <add>, %35, %cst_24 [1] : vector<16x128xf32> to vector<16xf32>
    %37 = vector.shape_cast %36 : vector<16xf32> to vector<16x1xf32>
    %38 = tpu.reciprocal %37 {approx = true} : vector<16x1xf32> -> vector<16x1xf32>
    %39 = vector.broadcast %38 : vector<16x1xf32> to vector<16x128xf32>
    %40 = arith.mulf %35, %39 : vector<16x128xf32>
    %c0_25 = arith.constant 0 : index
    %c0_26 = arith.constant 0 : index
    %41 = vector.load %arg10[%c0_25, %c0_26] : memref<16x128xf32, #tpu.memory_space<vmem>>, vector<16x128xf32>
    tpu.vector_store %arg10[%c0_25, %c0_26], %40 {strides = array<i32>} : memref<16x128xf32, #tpu.memory_space<vmem>>, vector<16x128xf32>,
    %42 = vector.broadcast %30 : vector<16x1xf32> to vector<16x128xf32>
    %43 = arith.subf %22, %42 : vector<16x128xf32>
    %44 = math.log %37 : vector<16x1xf32>
    %45 = vector.broadcast %44 : vector<16x1xf32> to vector<16x128xf32>
    %46 = arith.subf %43, %45 : vector<16x128xf32>
    %c0_27 = arith.constant 0 : index
    %c0_28 = arith.constant 0 : index
    %47 = vector.load %arg11[%c0_27, %c0_28] : memref<16x128xf32, #tpu.memory_space<vmem>>, vector<16x128xf32>
    tpu.vector_store %arg11[%c0_27, %c0_28], %46 {strides = array<i32>} : memref<16x128xf32, #tpu.memory_space<vmem>>, vector<16x128xf32>,
    return
  }
  func.func @transform_0(%arg0: i32) -> (i32, i32) {
    %c0_i32 = arith.constant 0 : i32
    %c0_i32_0 = arith.constant 0 : i32
    return %arg0, %c0_i32 : i32, i32
  }
  func.func @transform_1(%arg0: i32) -> (i32, i32) {
    %c0_i32 = arith.constant 0 : i32
    %c0_i32_0 = arith.constant 0 : i32
    %c0_i32_1 = arith.constant 0 : i32
    return %c0_i32, %c0_i32_0 : i32, i32
  }
  func.func @transform_2(%arg0: i32) -> (i32, i32) {
    %c0_i32 = arith.constant 0 : i32
    %c0_i32_0 = arith.constant 0 : i32
    %c0_i32_1 = arith.constant 0 : i32
    return %c0_i32, %c0_i32_0 : i32, i32
  }
  func.func @transform_3(%arg0: i32) -> (i32, i32) {
    %c0_i32 = arith.constant 0 : i32
    %c0_i32_0 = arith.constant 0 : i32
    %c0_i32_1 = arith.constant 0 : i32
    return %c0_i32, %c0_i32_0 : i32, i32
  }
  func.func @transform_4(%arg0: i32) -> (i32, i32) {
    %c0_i32 = arith.constant 0 : i32
    %c0_i32_0 = arith.constant 0 : i32
    %c0_i32_1 = arith.constant 0 : i32
    return %c0_i32, %c0_i32_0 : i32, i32
  }
  func.func @transform_5(%arg0: i32) -> (i32, i32) {
    %c0_i32 = arith.constant 0 : i32
    %c0_i32_0 = arith.constant 0 : i32
    %c0_i32_1 = arith.constant 0 : i32
    return %c0_i32, %c0_i32_0 : i32, i32
  }
  func.func @transform_6(%arg0: i32) -> (i32, i32) {
    %c0_i32 = arith.constant 0 : i32
    %c0_i32_0 = arith.constant 0 : i32
    %c0_i32_1 = arith.constant 0 : i32
    return %c0_i32, %c0_i32_0 : i32, i32
  }
  func.func @transform_7(%arg0: i32) -> (i32, i32) {
    %c0_i32 = arith.constant 0 : i32
    %c0_i32_0 = arith.constant 0 : i32
    return %arg0, %c0_i32 : i32, i32
  }
  func.func @transform_8(%arg0: i32) -> (i32, i32) {
    %c0_i32 = arith.constant 0 : i32
    %c0_i32_0 = arith.constant 0 : i32
    return %arg0, %c0_i32 : i32, i32
  }
  func.func @transform_9(%arg0: i32) -> (i32, i32) {
    %c0_i32 = arith.constant 0 : i32
    %c0_i32_0 = arith.constant 0 : i32
    return %arg0, %c0_i32 : i32, i32
  }
  func.func @transform_10(%arg0: i32) -> (i32, i32) {
    %c0_i32 = arith.constant 0 : i32
    %c0_i32_0 = arith.constant 0 : i32
    return %arg0, %c0_i32 : i32, i32
  }
}

</mosaic_0001>

<llo_original>
// kernel: lenet_dropout_forward.3
$region0: #{lenet_dropout_forward.3}
  #allocation0 [shape = 'u32[]', space=smem, size = 0x4, offset = 0x4, fixed_abs, tag = 'smem constant byte address 0x4 - core index']
  #allocation1 [shape = 'u32[144,128]{1,0:T(1,128)}', space=vmem, size = 0x12000, scoped, tag = 'internal scratch']
  %s0 = inlined_call_operand.vmem [shape: bf16[4,512,25], index: 0, kind: input, shape index: {}]
  %s1 = inlined_call_operand.vmem [shape: bf16[25,128], index: 1, kind: input, shape index: {}]
  %s2 = inlined_call_operand.vmem [shape: f32[1,128], index: 2, kind: input, shape index: {}]
  %s3 = inlined_call_operand.vmem [shape: f32[512,128], index: 3, kind: output, shape index: {}]
  %s4 = sld [smem:[#allocation0]]
  $region86: #{lenet_dropout_forward.3} parent=0
    _
  %s6 = ssub.s32 1, %s4
  %s7 = scalar_select 0, %s6, %s4
  $region1: #{lenet_dropout_forward.3} parent=0
    #allocation2 [shape = 'u8[524288]{0}', space=vmem, size = 0x80000, scoped, tag = 'input window, operand 0']
    loop: start=0, step=1, limit=4
    $region2: #{lenet_dropout_forward.3} parent=1 // loop_pre_header
      _
    $region3: #{lenet_dropout_forward.3} parent=1 // loop_header
      %s9 = sphi 0, %s13
      %p10 = scmp.ge.s32.totalorder %s9, 4
      %s19 = sphi 0, %s21
      %s22 = sphi 0, %s19
      %s23 = sphi 0, %s22
      %s39 = sphi 0, %s23
      %s43 = sphi 0, %s43
      %s45 = sphi 0, %s43
      %s46 = sphi 0, %s45
      %s60 = sphi 0, %s46
      %s64 = sphi 0, %s64
      %s66 = sphi 0, %s64
      %s67 = sphi 0, %s66
      %s81 = sphi 0, %s67
      %s87 = sphi 0, %s89
      %s90 = sphi 0, %s87
      %s91 = sphi 0, %s90
      %s107 = sphi 0, %s91
    $region4: #{lenet_dropout_forward.3} parent=1 // loop_header_branch
      %12 = sbr.rel (%p10) target = $region8
    $region5: #{lenet_dropout_forward.3} parent=1 // loop_body
      %s14 = ssub.s32 %s9, 1
      %s15 = ssub.s32 %s9, 2
      %s16 = sadd.s32 %s9, 1
      %s17 = ssub.s32 %s9, %s16
      %p18 = scmp.eq.s32.totalorder %s17, 0
      %s20 = sadd.s32 %s19, 1
      %s21 = scalar_select %p18, %s19, %s20
      %p24 = pneg %p18
      %p25 = scmp.eq.s32.totalorder %s9, 1
      %p26 = por %p24, %p25
      %p27 = scmp.ne.s32.totalorder %s19, %s22
      %p28 = scmp.eq.s32.totalorder %s9, 0
      %p29 = por %p27, %p28
      %p30 = scmp.ne.s32.totalorder %s19, %s22
      %p31 = scmp.eq.s32.totalorder %s14, 1
      %p32 = por %p30, %p31
      %p33 = scmp.ne.s32.totalorder %s22, %s23
      %p34 = scmp.eq.s32.totalorder %s14, 0
      %p35 = por %p33, %p34
      %p36 = scmp.ne.s32.totalorder %s22, %s23
      %p37 = scmp.eq.s32.totalorder %s15, 1
      %p38 = por %p36, %p37
      %p40 = scmp.ne.s32.totalorder %s23, %s39
      %p41 = scmp.eq.s32.totalorder %s15, 0
      %p42 = por %p40, %p41
      %s44 = sadd.s32 %s43, 1
      %p47 = scmp.eq.s32.totalorder %s9, 1
      %p48 = scmp.ne.s32.totalorder %s43, %s45
      %p49 = scmp.eq.s32.totalorder %s9, 0
      %p50 = por %p48, %p49
      %p51 = scmp.ne.s32.totalorder %s43, %s45
      %p52 = scmp.eq.s32.totalorder %s14, 1
      %p53 = por %p51, %p52
      %p54 = scmp.ne.s32.totalorder %s45, %s46
      %p55 = scmp.eq.s32.totalorder %s14, 0
      %p56 = por %p54, %p55
      %p57 = scmp.ne.s32.totalorder %s45, %s46
      %p58 = scmp.eq.s32.totalorder %s15, 1
      %p59 = por %p57, %p58
      %p61 = scmp.ne.s32.totalorder %s46, %s60
      %p62 = scmp.eq.s32.totalorder %s15, 0
      %p63 = por %p61, %p62
      %s65 = sadd.s32 %s64, 1
      %p68 = scmp.eq.s32.totalorder %s9, 1
      %p69 = scmp.ne.s32.totalorder %s64, %s66
      %p70 = scmp.eq.s32.totalorder %s9, 0
      %p71 = por %p69, %p70
      %p72 = scmp.ne.s32.totalorder %s64, %s66
      %p73 = scmp.eq.s32.totalorder %s14, 1
      %p74 = por %p72, %p73
      %p75 = scmp.ne.s32.totalorder %s66, %s67
      %p76 = scmp.eq.s32.totalorder %s14, 0
      %p77 = por %p75, %p76
      %p78 = scmp.ne.s32.totalorder %s66, %s67
      %p79 = scmp.eq.s32.totalorder %s15, 1
      %p80 = por %p78, %p79
      %p82 = scmp.ne.s32.totalorder %s67, %s81
      %p83 = scmp.eq.s32.totalorder %s15, 0
      %p84 = por %p82, %p83
      %s85 = ssub.s32 %s9, %s16
      %p86 = scmp.eq.s32.totalorder %s85, 0
      %s88 = sadd.s32 %s87, 1
      %s89 = scalar_select %p86, %s87, %s88
      %p92 = pneg %p86
      %p93 = scmp.eq.s32.totalorder %s9, 1
      %p94 = por %p92, %p93
      %p95 = scmp.ne.s32.totalorder %s87, %s90
      %p96 = scmp.eq.s32.totalorder %s9, 0
      %p97 = por %p95, %p96
      %p98 = scmp.ne.s32.totalorder %s87, %s90
      %p99 = scmp.eq.s32.totalorder %s14, 1
      %p100 = por %p98, %p99
      %p101 = scmp.ne.s32.totalorder %s90, %s91
      %p102 = scmp.eq.s32.totalorder %s14, 0
      %p103 = por %p101, %p102
      %p104 = scmp.ne.s32.totalorder %s90, %s91
      %p105 = scmp.eq.s32.totalorder %s15, 1
      %p106 = por %p104, %p105
      %p108 = scmp.ne.s32.totalorder %s91, %s107
      %p109 = scmp.eq.s32.totalorder %s15, 0
      %p110 = por %p108, %p109
      %p111 = scmp.le.s32.totalorder 1, %s9
      %p112 = scmp.lt.s32.totalorder %s9, 3
      %p113 = pnand %p111, %p112
      %p114 = pneg %p113
      // Predicated region
      $region9: #{lenet_dropout_forward.3} parent=5 // pred_check
        _
      $region10: #{lenet_dropout_forward.3} parent=5 // pred_check_branch
        %116 = sbr.rel (%p113) target = $region12
      $region11: #{lenet_dropout_forward.3} parent=5 // pred_region
        %s117 = ssub.s32 %s9, 1
        // Predicated region
        $region13: #{lenet_dropout_forward.3} parent=11 // pred_check
          %p118 = pneg %p56
        $region14: #{lenet_dropout_forward.3} parent=11 // pred_check_branch
          %120 = sbr.rel (%p118) target = $region16
        $region15: #{lenet_dropout_forward.3} parent=11 // pred_region
          _
        $region16: #{lenet_dropout_forward.3} parent=11 // pred_fallthru
          _
        // Predicated region
        $region17: #{lenet_dropout_forward.3} parent=11 // pred_check
          %p121 = pneg %p77
        $region18: #{lenet_dropout_forward.3} parent=11 // pred_check_branch
          %123 = sbr.rel (%p121) target = $region20
        $region19: #{lenet_dropout_forward.3} parent=11 // pred_region
          _
        $region20: #{lenet_dropout_forward.3} parent=11 // pred_fallthru
          _
      $region12: #{lenet_dropout_forward.3} parent=5 // pred_fallthru
        _
      %p124 = scmp.lt.s32.totalorder %s9, 2
      // Predicated region
      $region21: #{lenet_dropout_forward.3} parent=5 // pred_check
        %p125 = pneg %p124
      $region22: #{lenet_dropout_forward.3} parent=5 // pred_check_branch
        %127 = sbr.rel (%p125) target = $region24
      $region23: #{lenet_dropout_forward.3} parent=5 // pred_region
        // Predicated region
        $region25: #{lenet_dropout_forward.3} parent=23 // pred_check
          %p128 = pneg %p29
        $region26: #{lenet_dropout_forward.3} parent=23 // pred_check_branch
          %130 = sbr.rel (%p128) target = $region28
        $region27: #{lenet_dropout_forward.3} parent=23 // pred_region
          %s131 = sand.u32 %s19, 1
          %s132 = sand.u32 %s19, 1
          %s133 = smul.addr %s132, 512
          %s134 = scalar_lea.vmem [#allocation2], %s133
          %s135 = smul.u32 32, %s9
          %s136 = smul.addr %s135, 4
          %s137 = scalar_lea.vmem %s0, %s136
          // Predicated region
          $region29: #{lenet_dropout_forward.3} parent=27 // pred_check
            _
          $region30: #{lenet_dropout_forward.3} parent=27 // pred_check_branch
            %139 = sbr.rel (0) target = $region32
          $region31: #{lenet_dropout_forward.3} parent=27 // pred_region
            // Predicated region
            $region33: #{lenet_dropout_forward.3} parent=31 // pred_check
              _
            $region34: #{lenet_dropout_forward.3} parent=31 // pred_check_branch
              %141 = sbr.rel target = $region36
            $region35: #{lenet_dropout_forward.3} parent=31 // pred_region
              // Predicated region
              $region48: #{lenet_dropout_forward.3} parent=35 // pred_check
                _
              $region49: #{lenet_dropout_forward.3} parent=35 // pred_check_branch
                %411 = sbr.rel (0) target = $region51
              $region50: #{lenet_dropout_forward.3} parent=35 // pred_region
                loop: start=0, step=1, limit=1
                $region52: #{lenet_dropout_forward.3} parent=50 // loop_pre_header
                  _
                $region53: #{lenet_dropout_forward.3} parent=50 // loop_header
                  %s413 = sphi 0, %s417
                  %p414 = scmp.ge.s32.totalorder %s413, 1
                  %s418 = sphi %s137, %s137
                  %s419 = sphi %s134, %s134
                $region54: #{lenet_dropout_forward.3} parent=50 // loop_header_branch
                  %416 = sbr.rel (%p414) target = $region58
                $region55: #{lenet_dropout_forward.3} parent=50 // loop_body
                  _
                $region56: #{lenet_dropout_forward.3} parent=50 // loop_footer
                  %s417 = sadd.s32 1, %s413
                $region57: #{lenet_dropout_forward.3} parent=50 // loop_footer_branch
                  %412 = sbr.rel target = $region53
                $region58: #{lenet_dropout_forward.3} parent=50 // loop_exit
                  _
                %s421 = ssub.s32 16, 1
                loop: start=0, step=1, limit=1
                $region59: #{lenet_dropout_forward.3} parent=50 // loop_pre_header
                  _
                $region60: #{lenet_dropout_forward.3} parent=50 // loop_header
                  %s423 = sphi 0, %s427
                  %p424 = scmp.ge.s32.totalorder %s423, 1
                  %s428 = sphi %s137, %s137
                  %s429 = sphi %s134, %s134
                $region61: #{lenet_dropout_forward.3} parent=50 // loop_header_branch
                  %426 = sbr.rel (%p424) target = $region65
                $region62: #{lenet_dropout_forward.3} parent=50 // loop_body
                  %v430 = vld [vmem:[%s428] sm:%s421]
                  %431 = vst [vmem:[%s429] sm:%s421] %v430
                  %v432 = vld [vmem:[%s428 + $0x4] sm:%s421]
                  %433 = vst [vmem:[%s429 + $0x4] sm:%s421] %v432
                  %v434 = vld [vmem:[%s428 + $0x8] sm:%s421]
                  %435 = vst [vmem:[%s429 + $0x8] sm:%s421] %v434
                  %v436 = vld [vmem:[%s428 + $0xc] sm:%s421]
                  %437 = vst [vmem:[%s429 + $0xc] sm:%s421] %v436
                  %v438 = vld [vmem:[%s428 + $0x10] sm:%s421]
                  %439 = vst [vmem:[%s429 + $0x10] sm:%s421] %v438
                  %v440 = vld [vmem:[%s428 + $0x14] sm:%s421]
                  %441 = vst [vmem:[%s429 + $0x14] sm:%s421] %v440
                  %v442 = vld [vmem:[%s428 + $0x18] sm:%s421]
                  %443 = vst [vmem:[%s429 + $0x18] sm:%s421] %v442
                  %v444 = vld [vmem:[%s428 + $0x1c] sm:%s421]
                  %445 = vst [vmem:[%s429 + $0x1c] sm:%s421] %v444
                  %v446 = vld [vmem:[%s428 + $0x20] sm:%s421]
                  %447 = vst [vmem:[%s429 + $0x20] sm:%s421] %v446
                  %v448 = vld [vmem:[%s428 + $0x24] sm:%s421]
                  %449 = vst [vmem:[%s429 + $0x24] sm:%s421] %v448
                  %v450 = vld [vmem:[%s428 + $0x28] sm:%s421]
                  %451 = vst [vmem:[%s429 + $0x28] sm:%s421] %v450
                  %v452 = vld [vmem:[%s428 + $0x2c] sm:%s421]
                  %453 = vst [vmem:[%s429 + $0x2c] sm:%s421] %v452
                  %v454 = vld [vmem:[%s428 + $0x30] sm:%s421]
                  %455 = vst [vmem:[%s429 + $0x30] sm:%s421] %v454
                  %v456 = vld [vmem:[%s428 + $0x34] sm:%s421]
                  %457 = vst [vmem:[%s429 + $0x34] sm:%s421] %v456
                  %v458 = vld [vmem:[%s428 + $0x38] sm:%s421]
                  %459 = vst [vmem:[%s429 + $0x38] sm:%s421] %v458
                  %v460 = vld [vmem:[%s428 + $0x3c] sm:%s421]
                  %461 = vst [vmem:[%s429 + $0x3c] sm:%s421] %v460
                  %v462 = vld [vmem:[%s428 + $0x40] sm:%s421]
                  %463 = vst [vmem:[%s429 + $0x40] sm:%s421] %v462
                  %v464 = vld [vmem:[%s428 + $0x44] sm:%s421]
                  %465 = vst [vmem:[%s429 + $0x44] sm:%s421] %v464
                  %v466 = vld [vmem:[%s428 + $0x48] sm:%s421]
                  %467 = vst [vmem:[%s429 + $0x48] sm:%s421] %v466
                  %v468 = vld [vmem:[%s428 + $0x4c] sm:%s421]
                  %469 = vst [vmem:[%s429 + $0x4c] sm:%s421] %v468
                  %v470 = vld [vmem:[%s428 + $0x50] sm:%s421]
                  %471 = vst [vmem:[%s429 + $0x50] sm:%s421] %v470
                  %v472 = vld [vmem:[%s428 + $0x54] sm:%s421]
                  %473 = vst [vmem:[%s429 + $0x54] sm:%s421] %v472
                  %v474 = vld [vmem:[%s428 + $0x58] sm:%s421]
                  %475 = vst [vmem:[%s429 + $0x58] sm:%s421] %v474
                  %v476 = vld [vmem:[%s428 + $0x5c] sm:%s421]
                  %477 = vst [vmem:[%s429 + $0x5c] sm:%s421] %v476
                  %v478 = vld [vmem:[%s428 + $0x60] sm:%s421]
                  %479 = vst [vmem:[%s429 + $0x60] sm:%s421] %v478
                  %v480 = vld [vmem:[%s428 + $0x64] sm:%s421]
                  %481 = vst [vmem:[%s429 + $0x64] sm:%s421] %v480
                  %v482 = vld [vmem:[%s428 + $0x68] sm:%s421]
                  %483 = vst [vmem:[%s429 + $0x68] sm:%s421] %v482
                  %v484 = vld [vmem:[%s428 + $0x6c] sm:%s421]
                  %485 = vst [vmem:[%s429 + $0x6c] sm:%s421] %v484
                  %v486 = vld [vmem:[%s428 + $0x70] sm:%s421]
                  %487 = vst [vmem:[%s429 + $0x70] sm:%s421] %v486
                  %v488 = vld [vmem:[%s428 + $0x74] sm:%s421]
                  %489 = vst [vmem:[%s429 + $0x74] sm:%s421] %v488
                  %v490 = vld [vmem:[%s428 + $0x78] sm:%s421]
                  %491 = vst [vmem:[%s429 + $0x78] sm:%s421] %v490
                  %v492 = vld [vmem:[%s428 + $0x7c] sm:%s421]
                  %493 = vst [vmem:[%s429 + $0x7c] sm:%s421] %v492
                  %v494 = vld [vmem:[%s428 + $0x100] sm:%s421]
                  %495 = vst [vmem:[%s429 + $0x80] sm:%s421] %v494
                  %v496 = vld [vmem:[%s428 + $0x104] sm:%s421]
                  %497 = vst [vmem:[%s429 + $0x84] sm:%s421] %v496
                  %v498 = vld [vmem:[%s428 + $0x108] sm:%s421]
                  %499 = vst [vmem:[%s429 + $0x88] sm:%s421] %v498
                  %v500 = vld [vmem:[%s428 + $0x10c] sm:%s421]
                  %501 = vst [vmem:[%s429 + $0x8c] sm:%s421] %v500
                  %v502 = vld [vmem:[%s428 + $0x110] sm:%s421]
                  %503 = vst [vmem:[%s429 + $0x90] sm:%s421] %v502
                  %v504 = vld [vmem:[%s428 + $0x114] sm:%s421]
                  %505 = vst [vmem:[%s429 + $0x94] sm:%s421] %v504
                  %v506 = vld [vmem:[%s428 + $0x118] sm:%s421]
                  %507 = vst [vmem:[%s429 + $0x98] sm:%s421] %v506
                  %v508 = vld [vmem:[%s428 + $0x11c] sm:%s421]
                  %509 = vst [vmem:[%s429 + $0x9c] sm:%s421] %v508
                  %v510 = vld [vmem:[%s428 + $0x120] sm:%s421]
                  %511 = vst [vmem:[%s429 + $0xa0] sm:%s421] %v510
                  %v512 = vld [vmem:[%s428 + $0x124] sm:%s421]
                  %513 = vst [vmem:[%s429 + $0xa4] sm:%s421] %v512
                  %v514 = vld [vmem:[%s428 + $0x128] sm:%s421]
                  %515 = vst [vmem:[%s429 + $0xa8] sm:%s421] %v514
                  %v516 = vld [vmem:[%s428 + $0x12c] sm:%s421]
                  %517 = vst [vmem:[%s429 + $0xac] sm:%s421] %v516
                  %v518 = vld [vmem:[%s428 + $0x130] sm:%s421]
                  %519 = vst [vmem:[%s429 + $0xb0] sm:%s421] %v518
                  %v520 = vld [vmem:[%s428 + $0x134] sm:%s421]
                  %521 = vst [vmem:[%s429 + $0xb4] sm:%s421] %v520
                  %v522 = vld [vmem:[%s428 + $0x138] sm:%s421]
                  %523 = vst [vmem:[%s429 + $0xb8] sm:%s421] %v522
                  %v524 = vld [vmem:[%s428 + $0x13c] sm:%s421]
                  %525 = vst [vmem:[%s429 + $0xbc] sm:%s421] %v524
                  %v526 = vld [vmem:[%s428 + $0x140] sm:%s421]
                  %527 = vst [vmem:[%s429 + $0xc0] sm:%s421] %v526
                  %v528 = vld [vmem:[%s428 + $0x144] sm:%s421]
                  %529 = vst [vmem:[%s429 + $0xc4] sm:%s421] %v528
                  %v530 = vld [vmem:[%s428 + $0x148] sm:%s421]
                  %531 = vst [vmem:[%s429 + $0xc8] sm:%s421] %v530
                  %v532 = vld [vmem:[%s428 + $0x14c] sm:%s421]
                  %533 = vst [vmem:[%s429 + $0xcc] sm:%s421] %v532
                  %v534 = vld [vmem:[%s428 + $0x150] sm:%s421]
                  %535 = vst [vmem:[%s429 + $0xd0] sm:%s421] %v534
                  %v536 = vld [vmem:[%s428 + $0x154] sm:%s421]
                  %537 = vst [vmem:[%s429 + $0xd4] sm:%s421] %v536
                  %v538 = vld [vmem:[%s428 + $0x158] sm:%s421]
                  %539 = vst [vmem:[%s429 + $0xd8] sm:%s421] %v538
                  %v540 = vld [vmem:[%s428 + $0x15c] sm:%s421]
                  %541 = vst [vmem:[%s429 + $0xdc] sm:%s421] %v540
                  %v542 = vld [vmem:[%s428 + $0x160] sm:%s421]
                  %543 = vst [vmem:[%s429 + $0xe0] sm:%s421] %v542
                  %v544 = vld [vmem:[%s428 + $0x164] sm:%s421]
                  %545 = vst [vmem:[%s429 + $0xe4] sm:%s421] %v544
                  %v546 = vld [vmem:[%s428 + $0x168] sm:%s421]
                  %547 = vst [vmem:[%s429 + $0xe8] sm:%s421] %v546
                  %v548 = vld [vmem:[%s428 + $0x16c] sm:%s421]
                  %549 = vst [vmem:[%s429 + $0xec] sm:%s421] %v548
                  %v550 = vld [vmem:[%s428 + $0x170] sm:%s421]
                  %551 = vst [vmem:[%s429 + $0xf0] sm:%s421] %v550
                  %v552 = vld [vmem:[%s428 + $0x174] sm:%s421]
                  %553 = vst [vmem:[%s429 + $0xf4] sm:%s421] %v552
                  %v554 = vld [vmem:[%s428 + $0x178] sm:%s421]
                  %555 = vst [vmem:[%s429 + $0xf8] sm:%s421] %v554
                  %v556 = vld [vmem:[%s428 + $0x17c] sm:%s421]
                  %557 = vst [vmem:[%s429 + $0xfc] sm:%s421] %v556
                  %v558 = vld [vmem:[%s428 + $0x200] sm:%s421]
                  %559 = vst [vmem:[%s429 + $0x100] sm:%s421] %v558
                  %v560 = vld [vmem:[%s428 + $0x204] sm:%s421]
                  %561 = vst [vmem:[%s429 + $0x104] sm:%s421] %v560
                  %v562 = vld [vmem:[%s428 + $0x208] sm:%s421]
                  %563 = vst [vmem:[%s429 + $0x108] sm:%s421] %v562
                  %v564 = vld [vmem:[%s428 + $0x20c] sm:%s421]
                  %565 = vst [vmem:[%s429 + $0x10c] sm:%s421] %v564
                  %v566 = vld [vmem:[%s428 + $0x210] sm:%s421]
                  %567 = vst [vmem:[%s429 + $0x110] sm:%s421] %v566
                  %v568 = vld [vmem:[%s428 + $0x214] sm:%s421]
                  %569 = vst [vmem:[%s429 + $0x114] sm:%s421] %v568
                  %v570 = vld [vmem:[%s428 + $0x218] sm:%s421]
                  %571 = vst [vmem:[%s429 + $0x118] sm:%s421] %v570
                  %v572 = vld [vmem:[%s428 + $0x21c] sm:%s421]
                  %573 = vst [vmem:[%s429 + $0x11c] sm:%s421] %v572
                  %v574 = vld [vmem:[%s428 + $0x220] sm:%s421]
                  %575 = vst [vmem:[%s429 + $0x120] sm:%s421] %v574
                  %v576 = vld [vmem:[%s428 + $0x224] sm:%s421]
                  %577 = vst [vmem:[%s429 + $0x124] sm:%s421] %v576
                  %v578 = vld [vmem:[%s428 + $0x228] sm:%s421]
                  %579 = vst [vmem:[%s429 + $0x128] sm:%s421] %v578
                  %v580 = vld [vmem:[%s428 + $0x22c] sm:%s421]
                  %581 = vst [vmem:[%s429 + $0x12c] sm:%s421] %v580
                  %v582 = vld [vmem:[%s428 + $0x230] sm:%s421]
                  %583 = vst [vmem:[%s429 + $0x130] sm:%s421] %v582
                  %v584 = vld [vmem:[%s428 + $0x234] sm:%s421]
                  %585 = vst [vmem:[%s429 + $0x134] sm:%s421] %v584
                  %v586 = vld [vmem:[%s428 + $0x238] sm:%s421]
                  %587 = vst [vmem:[%s429 + $0x138] sm:%s421] %v586
                  %v588 = vld [vmem:[%s428 + $0x23c] sm:%s421]
                  %589 = vst [vmem:[%s429 + $0x13c] sm:%s421] %v588
                  %v590 = vld [vmem:[%s428 + $0x240] sm:%s421]
                  %591 = vst [vmem:[%s429 + $0x140] sm:%s421] %v590
                  %v592 = vld [vmem:[%s428 + $0x244] sm:%s421]
                  %593 = vst [vmem:[%s429 + $0x144] sm:%s421] %v592
                  %v594 = vld [vmem:[%s428 + $0x248] sm:%s421]
                  %595 = vst [vmem:[%s429 + $0x148] sm:%s421] %v594
                  %v596 = vld [vmem:[%s428 + $0x24c] sm:%s421]
                  %597 = vst [vmem:[%s429 + $0x14c] sm:%s421] %v596
                  %v598 = vld [vmem:[%s428 + $0x250] sm:%s421]
                  %599 = vst [vmem:[%s429 + $0x150] sm:%s421] %v598
                  %v600 = vld [vmem:[%s428 + $0x254] sm:%s421]
                  %601 = vst [vmem:[%s429 + $0x154] sm:%s421] %v600
                  %v602 = vld [vmem:[%s428 + $0x258] sm:%s421]
                  %603 = vst [vmem:[%s429 + $0x158] sm:%s421] %v602
                  %v604 = vld [vmem:[%s428 + $0x25c] sm:%s421]
                  %605 = vst [vmem:[%s429 + $0x15c] sm:%s421] %v604
                  %v606 = vld [vmem:[%s428 + $0x260] sm:%s421]
                  %607 = vst [vmem:[%s429 + $0x160] sm:%s421] %v606
                  %v608 = vld [vmem:[%s428 + $0x264] sm:%s421]
                  %609 = vst [vmem:[%s429 + $0x164] sm:%s421] %v608
                  %v610 = vld [vmem:[%s428 + $0x268] sm:%s421]
                  %611 = vst [vmem:[%s429 + $0x168] sm:%s421] %v610
                  %v612 = vld [vmem:[%s428 + $0x26c] sm:%s421]
                  %613 = vst [vmem:[%s429 + $0x16c] sm:%s421] %v612
                  %v614 = vld [vmem:[%s428 + $0x270] sm:%s421]
                  %615 = vst [vmem:[%s429 + $0x170] sm:%s421] %v614
                  %v616 = vld [vmem:[%s428 + $0x274] sm:%s421]
                  %617 = vst [vmem:[%s429 + $0x174] sm:%s421] %v616
                  %v618 = vld [vmem:[%s428 + $0x278] sm:%s421]
                  %619 = vst [vmem:[%s429 + $0x178] sm:%s421] %v618
                  %v620 = vld [vmem:[%s428 + $0x27c] sm:%s421]
                  %621 = vst [vmem:[%s429 + $0x17c] sm:%s421] %v620
                  %v622 = vld [vmem:[%s428 + $0x300] sm:%s421]
                  %623 = vst [vmem:[%s429 + $0x180] sm:%s421] %v622
                  %v624 = vld [vmem:[%s428 + $0x304] sm:%s421]
                  %625 = vst [vmem:[%s429 + $0x184] sm:%s421] %v624
                  %v626 = vld [vmem:[%s428 + $0x308] sm:%s421]
                  %627 = vst [vmem:[%s429 + $0x188] sm:%s421] %v626
                  %v628 = vld [vmem:[%s428 + $0x30c] sm:%s421]
                  %629 = vst [vmem:[%s429 + $0x18c] sm:%s421] %v628
                  %v630 = vld [vmem:[%s428 + $0x310] sm:%s421]
                  %631 = vst [vmem:[%s429 + $0x190] sm:%s421] %v630
                  %v632 = vld [vmem:[%s428 + $0x314] sm:%s421]
                  %633 = vst [vmem:[%s429 + $0x194] sm:%s421] %v632
                  %v634 = vld [vmem:[%s428 + $0x318] sm:%s421]
                  %635 = vst [vmem:[%s429 + $0x198] sm:%s421] %v634
                  %v636 = vld [vmem:[%s428 + $0x31c] sm:%s421]
                  %637 = vst [vmem:[%s429 + $0x19c] sm:%s421] %v636
                  %v638 = vld [vmem:[%s428 + $0x320] sm:%s421]
                  %639 = vst [vmem:[%s429 + $0x1a0] sm:%s421] %v638
                  %v640 = vld [vmem:[%s428 + $0x324] sm:%s421]
                  %641 = vst [vmem:[%s429 + $0x1a4] sm:%s421] %v640
                  %v642 = vld [vmem:[%s428 + $0x328] sm:%s421]
                  %643 = vst [vmem:[%s429 + $0x1a8] sm:%s421] %v642
                  %v644 = vld [vmem:[%s428 + $0x32c] sm:%s421]
                  %645 = vst [vmem:[%s429 + $0x1ac] sm:%s421] %v644
                  %v646 = vld [vmem:[%s428 + $0x330] sm:%s421]
                  %647 = vst [vmem:[%s429 + $0x1b0] sm:%s421] %v646
                  %v648 = vld [vmem:[%s428 + $0x334] sm:%s421]
                  %649 = vst [vmem:[%s429 + $0x1b4] sm:%s421] %v648
                  %v650 = vld [vmem:[%s428 + $0x338] sm:%s421]
                  %651 = vst [vmem:[%s429 + $0x1b8] sm:%s421] %v650
                  %v652 = vld [vmem:[%s428 + $0x33c] sm:%s421]
                  %653 = vst [vmem:[%s429 + $0x1bc] sm:%s421] %v652
                  %v654 = vld [vmem:[%s428 + $0x340] sm:%s421]
                  %655 = vst [vmem:[%s429 + $0x1c0] sm:%s421] %v654
                  %v656 = vld [vmem:[%s428 + $0x344] sm:%s421]
                  %657 = vst [vmem:[%s429 + $0x1c4] sm:%s421] %v656
                  %v658 = vld [vmem:[%s428 + $0x348] sm:%s421]
                  %659 = vst [vmem:[%s429 + $0x1c8] sm:%s421] %v658
                  %v660 = vld [vmem:[%s428 + $0x34c] sm:%s421]
                  %661 = vst [vmem:[%s429 + $0x1cc] sm:%s421] %v660
                  %v662 = vld [vmem:[%s428 + $0x350] sm:%s421]
                  %663 = vst [vmem:[%s429 + $0x1d0] sm:%s421] %v662
                  %v664 = vld [vmem:[%s428 + $0x354] sm:%s421]
                  %665 = vst [vmem:[%s429 + $0x1d4] sm:%s421] %v664
                  %v666 = vld [vmem:[%s428 + $0x358] sm:%s421]
                  %667 = vst [vmem:[%s429 + $0x1d8] sm:%s421] %v666
                  %v668 = vld [vmem:[%s428 + $0x35c] sm:%s421]
                  %669 = vst [vmem:[%s429 + $0x1dc] sm:%s421] %v668
                  %v670 = vld [vmem:[%s428 + $0x360] sm:%s421]
                  %671 = vst [vmem:[%s429 + $0x1e0] sm:%s421] %v670
                  %v672 = vld [vmem:[%s428 + $0x364] sm:%s421]
                  %673 = vst [vmem:[%s429 + $0x1e4] sm:%s421] %v672
                  %v674 = vld [vmem:[%s428 + $0x368] sm:%s421]
                  %675 = vst [vmem:[%s429 + $0x1e8] sm:%s421] %v674
                  %v676 = vld [vmem:[%s428 + $0x36c] sm:%s421]
                  %677 = vst [vmem:[%s429 + $0x1ec] sm:%s421] %v676
                  %v678 = vld [vmem:[%s428 + $0x370] sm:%s421]
                  %679 = vst [vmem:[%s429 + $0x1f0] sm:%s421] %v678
                  %v680 = vld [vmem:[%s428 + $0x374] sm:%s421]
                  %681 = vst [vmem:[%s429 + $0x1f4] sm:%s421] %v680
                  %v682 = vld [vmem:[%s428 + $0x378] sm:%s421]
                  %683 = vst [vmem:[%s429 + $0x1f8] sm:%s421] %v682
                  %v684 = vld [vmem:[%s428 + $0x37c] sm:%s421]
                  %685 = vst [vmem:[%s429 + $0x1fc] sm:%s421] %v684
                $region63: #{lenet_dropout_forward.3} parent=50 // loop_footer
                  %s427 = sadd.s32 1, %s423
                $region64: #{lenet_dropout_forward.3} parent=50 // loop_footer_branch
                  %422 = sbr.rel target = $region60
                $region65: #{lenet_dropout_forward.3} parent=50 // loop_exit
                  _
              $region51: #{lenet_dropout_forward.3} parent=35 // pred_fallthru
                _
            $region36: #{lenet_dropout_forward.3} parent=31 // pred_fallthru
              _
            // Predicated region
            $region37: #{lenet_dropout_forward.3} parent=31 // pred_check
              _
            $region38: #{lenet_dropout_forward.3} parent=31 // pred_check_branch
              %143 = sbr.rel (0) target = $region40
            $region39: #{lenet_dropout_forward.3} parent=31 // pred_region
              %s145 = ssub.s32 16, 1
              loop: start=0, step=1, limit=1
              $region41: #{lenet_dropout_forward.3} parent=39 // loop_pre_header
                _
              $region42: #{lenet_dropout_forward.3} parent=39 // loop_header
                %s147 = sphi 0, %s151
                %p148 = scmp.ge.s32.totalorder %s147, 1
                %s152 = sphi %s137, %s137
                %s153 = sphi %s134, %s134
              $region43: #{lenet_dropout_forward.3} parent=39 // loop_header_branch
                %150 = sbr.rel (%p148) target = $region47
              $region44: #{lenet_dropout_forward.3} parent=39 // loop_body
                %v154 = vld [vmem:[%s152] sm:%s145]
                %155 = vst [vmem:[%s153] sm:%s145] %v154
                %v156 = vld [vmem:[%s152 + $0x4] sm:%s145]
                %157 = vst [vmem:[%s153 + $0x4] sm:%s145] %v156
                %v158 = vld [vmem:[%s152 + $0x8] sm:%s145]
                %159 = vst [vmem:[%s153 + $0x8] sm:%s145] %v158
                %v160 = vld [vmem:[%s152 + $0xc] sm:%s145]
                %161 = vst [vmem:[%s153 + $0xc] sm:%s145] %v160
                %v162 = vld [vmem:[%s152 + $0x10] sm:%s145]
                %163 = vst [vmem:[%s153 + $0x10] sm:%s145] %v162
                %v164 = vld [vmem:[%s152 + $0x14] sm:%s145]
                %165 = vst [vmem:[%s153 + $0x14] sm:%s145] %v164
                %v166 = vld [vmem:[%s152 + $0x18] sm:%s145]
                %167 = vst [vmem:[%s153 + $0x18] sm:%s145] %v166
                %v168 = vld [vmem:[%s152 + $0x1c] sm:%s145]
                %169 = vst [vmem:[%s153 + $0x1c] sm:%s145] %v168
                %v170 = vld [vmem:[%s152 + $0x20] sm:%s145]
                %171 = vst [vmem:[%s153 + $0x20] sm:%s145] %v170
                %v172 = vld [vmem:[%s152 + $0x24] sm:%s145]
                %173 = vst [vmem:[%s153 + $0x24] sm:%s145] %v172
                %v174 = vld [vmem:[%s152 + $0x28] sm:%s145]
                %175 = vst [vmem:[%s153 + $0x28] sm:%s145] %v174
                %v176 = vld [vmem:[%s152 + $0x2c] sm:%s145]
                %177 = vst [vmem:[%s153 + $0x2c] sm:%s145] %v176
                %v178 = vld [vmem:[%s152 + $0x30] sm:%s145]
                %179 = vst [vmem:[%s153 + $0x30] sm:%s145] %v178
                %v180 = vld [vmem:[%s152 + $0x34] sm:%s145]
                %181 = vst [vmem:[%s153 + $0x34] sm:%s145] %v180
                %v182 = vld [vmem:[%s152 + $0x38] sm:%s145]
                %183 = vst [vmem:[%s153 + $0x38] sm:%s145] %v182
                %v184 = vld [vmem:[%s152 + $0x3c] sm:%s145]
                %185 = vst [vmem:[%s153 + $0x3c] sm:%s145] %v184
                %v186 = vld [vmem:[%s152 + $0x40] sm:%s145]
                %187 = vst [vmem:[%s153 + $0x40] sm:%s145] %v186
                %v188 = vld [vmem:[%s152 + $0x44] sm:%s145]
                %189 = vst [vmem:[%s153 + $0x44] sm:%s145] %v188
                %v190 = vld [vmem:[%s152 + $0x48] sm:%s145]
                %191 = vst [vmem:[%s153 + $0x48] sm:%s145] %v190
                %v192 = vld [vmem:[%s152 + $0x4c] sm:%s145]
                %193 = vst [vmem:[%s153 + $0x4c] sm:%s145] %v192
                %v194 = vld [vmem:[%s152 + $0x50] sm:%s145]
                %195 = vst [vmem:[%s153 + $0x50] sm:%s145] %v194
                %v196 = vld [vmem:[%s152 + $0x54] sm:%s145]
                %197 = vst [vmem:[%s153 + $0x54] sm:%s145] %v196
                %v198 = vld [vmem:[%s152 + $0x58] sm:%s145]
                %199 = vst [vmem:[%s153 + $0x58] sm:%s145] %v198
                %v200 = vld [vmem:[%s152 + $0x5c] sm:%s145]
                %201 = vst [vmem:[%s153 + $0x5c] sm:%s145] %v200
                %v202 = vld [vmem:[%s152 + $0x60] sm:%s145]
                %203 = vst [vmem:[%s153 + $0x60] sm:%s145] %v202
                %v204 = vld [vmem:[%s152 + $0x64] sm:%s145]
                %205 = vst [vmem:[%s153 + $0x64] sm:%s145] %v204
                %v206 = vld [vmem:[%s152 + $0x68] sm:%s145]
                %207 = vst [vmem:[%s153 + $0x68] sm:%s145] %v206
                %v208 = vld [vmem:[%s152 + $0x6c] sm:%s145]
                %209 = vst [vmem:[%s153 + $0x6c] sm:%s145] %v208
                %v210 = vld [vmem:[%s152 + $0x70] sm:%s145]
                %211 = vst [vmem:[%s153 + $0x70] sm:%s145] %v210
                %v212 = vld [vmem:[%s152 + $0x74] sm:%s145]
                %213 = vst [vmem:[%s153 + $0x74] sm:%s145] %v212
                %v214 = vld [vmem:[%s152 + $0x78] sm:%s145]
                %215 = vst [vmem:[%s153 + $0x78] sm:%s145] %v214
                %v216 = vld [vmem:[%s152 + $0x7c] sm:%s145]
                %217 = vst [vmem:[%s153 + $0x7c] sm:%s145] %v216
                %v218 = vld [vmem:[%s152 + $0x100] sm:%s145]
                %219 = vst [vmem:[%s153 + $0x80] sm:%s145] %v218
                %v220 = vld [vmem:[%s152 + $0x104] sm:%s145]
                %221 = vst [vmem:[%s153 + $0x84] sm:%s145] %v220
                %v222 = vld [vmem:[%s152 + $0x108] sm:%s145]
                %223 = vst [vmem:[%s153 + $0x88] sm:%s145] %v222
                %v224 = vld [vmem:[%s152 + $0x10c] sm:%s145]
                %225 = vst [vmem:[%s153 + $0x8c] sm:%s145] %v224
                %v226 = vld [vmem:[%s152 + $0x110] sm:%s145]
                %227 = vst [vmem:[%s153 + $0x90] sm:%s145] %v226
                %v228 = vld [vmem:[%s152 + $0x114] sm:%s145]
                %229 = vst [vmem:[%s153 + $0x94] sm:%s145] %v228
                %v230 = vld [vmem:[%s152 + $0x118] sm:%s145]
                %231 = vst [vmem:[%s153 + $0x98] sm:%s145] %v230
                %v232 = vld [vmem:[%s152 + $0x11c] sm:%s145]
                %233 = vst [vmem:[%s153 + $0x9c] sm:%s145] %v232
                %v234 = vld [vmem:[%s152 + $0x120] sm:%s145]
                %235 = vst [vmem:[%s153 + $0xa0] sm:%s145] %v234
                %v236 = vld [vmem:[%s152 + $0x124] sm:%s145]
                %237 = vst [vmem:[%s153 + $0xa4] sm:%s145] %v236
                %v238 = vld [vmem:[%s152 + $0x128] sm:%s145]
                %239 = vst [vmem:[%s153 + $0xa8] sm:%s145] %v238
                %v240 = vld [vmem:[%s152 + $0x12c] sm:%s145]
                %241 = vst [vmem:[%s153 + $0xac] sm:%s145] %v240
                %v242 = vld [vmem:[%s152 + $0x130] sm:%s145]
                %243 = vst [vmem:[%s153 + $0xb0] sm:%s145] %v242
                %v244 = vld [vmem:[%s152 + $0x134] sm:%s145]
                %245 = vst [vmem:[%s153 + $0xb4] sm:%s145] %v244
                %v246 = vld [vmem:[%s152 + $0x138] sm:%s145]
                %247 = vst [vmem:[%s153 + $0xb8] sm:%s145] %v246
                %v248 = vld [vmem:[%s152 + $0x13c] sm:%s145]
                %249 = vst [vmem:[%s153 + $0xbc] sm:%s145] %v248
                %v250 = vld [vmem:[%s152 + $0x140] sm:%s145]
                %251 = vst [vmem:[%s153 + $0xc0] sm:%s145] %v250
                %v252 = vld [vmem:[%s152 + $0x144] sm:%s145]
                %253 = vst [vmem:[%s153 + $0xc4] sm:%s145] %v252
                %v254 = vld [vmem:[%s152 + $0x148] sm:%s145]
                %255 = vst [vmem:[%s153 + $0xc8] sm:%s145] %v254
                %v256 = vld [vmem:[%s152 + $0x14c] sm:%s145]
                %257 = vst [vmem:[%s153 + $0xcc] sm:%s145] %v256
                %v258 = vld [vmem:[%s152 + $0x150] sm:%s145]
                %259 = vst [vmem:[%s153 + $0xd0] sm:%s145] %v258
                %v260 = vld [vmem:[%s152 + $0x154] sm:%s145]
                %261 = vst [vmem:[%s153 + $0xd4] sm:%s145] %v260
                %v262 = vld [vmem:[%s152 + $0x158] sm:%s145]
                %263 = vst [vmem:[%s153 + $0xd8] sm:%s145] %v262
                %v264 = vld [vmem:[%s152 + $0x15c] sm:%s145]
                %265 = vst [vmem:[%s153 + $0xdc] sm:%s145] %v264
                %v266 = vld [vmem:[%s152 + $0x160] sm:%s145]
                %267 = vst [vmem:[%s153 + $0xe0] sm:%s145] %v266
                %v268 = vld [vmem:[%s152 + $0x164] sm:%s145]
                %269 = vst [vmem:[%s153 + $0xe4] sm:%s145] %v268
                %v270 = vld [vmem:[%s152 + $0x168] sm:%s145]
                %271 = vst [vmem:[%s153 + $0xe8] sm:%s145] %v270
                %v272 = vld [vmem:[%s152 + $0x16c] sm:%s145]
                %273 = vst [vmem:[%s153 + $0xec] sm:%s145] %v272
                %v274 = vld [vmem:[%s152 + $0x170] sm:%s145]
                %275 = vst [vmem:[%s153 + $0xf0] sm:%s145] %v274
                %v276 = vld [vmem:[%s152 + $0x174] sm:%s145]
                %277 = vst [vmem:[%s153 + $0xf4] sm:%s145] %v276
                %v278 = vld [vmem:[%s152 + $0x178] sm:%s145]
                %279 = vst [vmem:[%s153 + $0xf8] sm:%s145] %v278
                %v280 = vld [vmem:[%s152 + $0x17c] sm:%s145]
                %281 = vst [vmem:[%s153 + $0xfc] sm:%s145] %v280
                %v282 = vld [vmem:[%s152 + $0x200] sm:%s145]
                %283 = vst [vmem:[%s153 + $0x100] sm:%s145] %v282
                %v284 = vld [vmem:[%s152 + $0x204] sm:%s145]
                %285 = vst [vmem:[%s153 + $0x104] sm:%s145] %v284
                %v286 = vld [vmem:[%s152 + $0x208] sm:%s145]
                %287 = vst [vmem:[%s153 + $0x108] sm:%s145] %v286
                %v288 = vld [vmem:[%s152 + $0x20c] sm:%s145]
                %289 = vst [vmem:[%s153 + $0x10c] sm:%s145] %v288
                %v290 = vld [vmem:[%s152 + $0x210] sm:%s145]
                %291 = vst [vmem:[%s153 + $0x110] sm:%s145] %v290
                %v292 = vld [vmem:[%s152 + $0x214] sm:%s145]
                %293 = vst [vmem:[%s153 + $0x114] sm:%s145] %v292
                %v294 = vld [vmem:[%s152 + $0x218] sm:%s145]
                %295 = vst [vmem:[%s153 + $0x118] sm:%s145] %v294
                %v296 = vld [vmem:[%s152 + $0x21c] sm:%s145]
                %297 = vst [vmem:[%s153 + $0x11c] sm:%s145] %v296
                %v298 = vld [vmem:[%s152 + $0x220] sm:%s145]
                %299 = vst [vmem:[%s153 + $0x120] sm:%s145] %v298
                %v300 = vld [vmem:[%s152 + $0x224] sm:%s145]
                %301 = vst [vmem:[%s153 + $0x124] sm:%s145] %v300
                %v302 = vld [vmem:[%s152 + $0x228] sm:%s145]
                %303 = vst [vmem:[%s153 + $0x128] sm:%s145] %v302
                %v304 = vld [vmem:[%s152 + $0x22c] sm:%s145]
                %305 = vst [vmem:[%s153 + $0x12c] sm:%s145] %v304
                %v306 = vld [vmem:[%s152 + $0x230] sm:%s145]
                %307 = vst [vmem:[%s153 + $0x130] sm:%s145] %v306
                %v308 = vld [vmem:[%s152 + $0x234] sm:%s145]
                %309 = vst [vmem:[%s153 + $0x134] sm:%s145] %v308
                %v310 = vld [vmem:[%s152 + $0x238] sm:%s145]
                %311 = vst [vmem:[%s153 + $0x138] sm:%s145] %v310
                %v312 = vld [vmem:[%s152 + $0x23c] sm:%s145]
                %313 = vst [vmem:[%s153 + $0x13c] sm:%s145] %v312
                %v314 = vld [vmem:[%s152 + $0x240] sm:%s145]
                %315 = vst [vmem:[%s153 + $0x140] sm:%s145] %v314
                %v316 = vld [vmem:[%s152 + $0x244] sm:%s145]
                %317 = vst [vmem:[%s153 + $0x144] sm:%s145] %v316
                %v318 = vld [vmem:[%s152 + $0x248] sm:%s145]
                %319 = vst [vmem:[%s153 + $0x148] sm:%s145] %v318
                %v320 = vld [vmem:[%s152 + $0x24c] sm:%s145]
                %321 = vst [vmem:[%s153 + $0x14c] sm:%s145] %v320
                %v322 = vld [vmem:[%s152 + $0x250] sm:%s145]
                %323 = vst [vmem:[%s153 + $0x150] sm:%s145] %v322
                %v324 = vld [vmem:[%s152 + $0x254] sm:%s145]
                %325 = vst [vmem:[%s153 + $0x154] sm:%s145] %v324
                %v326 = vld [vmem:[%s152 + $0x258] sm:%s145]
                %327 = vst [vmem:[%s153 + $0x158] sm:%s145] %v326
                %v328 = vld [vmem:[%s152 + $0x25c] sm:%s145]
                %329 = vst [vmem:[%s153 + $0x15c] sm:%s145] %v328
                %v330 = vld [vmem:[%s152 + $0x260] sm:%s145]
                %331 = vst [vmem:[%s153 + $0x160] sm:%s145] %v330
                %v332 = vld [vmem:[%s152 + $0x264] sm:%s145]
                %333 = vst [vmem:[%s153 + $0x164] sm:%s145] %v332
                %v334 = vld [vmem:[%s152 + $0x268] sm:%s145]
                %335 = vst [vmem:[%s153 + $0x168] sm:%s145] %v334
                %v336 = vld [vmem:[%s152 + $0x26c] sm:%s145]
                %337 = vst [vmem:[%s153 + $0x16c] sm:%s145] %v336
                %v338 = vld [vmem:[%s152 + $0x270] sm:%s145]
                %339 = vst [vmem:[%s153 + $0x170] sm:%s145] %v338
                %v340 = vld [vmem:[%s152 + $0x274] sm:%s145]
                %341 = vst [vmem:[%s153 + $0x174] sm:%s145] %v340
                %v342 = vld [vmem:[%s152 + $0x278] sm:%s145]
                %343 = vst [vmem:[%s153 + $0x178] sm:%s145] %v342
                %v344 = vld [vmem:[%s152 + $0x27c] sm:%s145]
                %345 = vst [vmem:[%s153 + $0x17c] sm:%s145] %v344
                %v346 = vld [vmem:[%s152 + $0x300] sm:%s145]
                %347 = vst [vmem:[%s153 + $0x180] sm:%s145] %v346
                %v348 = vld [vmem:[%s152 + $0x304] sm:%s145]
                %349 = vst [vmem:[%s153 + $0x184] sm:%s145] %v348
                %v350 = vld [vmem:[%s152 + $0x308] sm:%s145]
                %351 = vst [vmem:[%s153 + $0x188] sm:%s145] %v350
                %v352 = vld [vmem:[%s152 + $0x30c] sm:%s145]
                %353 = vst [vmem:[%s153 + $0x18c] sm:%s145] %v352
                %v354 = vld [vmem:[%s152 + $0x310] sm:%s145]
                %355 = vst [vmem:[%s153 + $0x190] sm:%s145] %v354
                %v356 = vld [vmem:[%s152 + $0x314] sm:%s145]
                %357 = vst [vmem:[%s153 + $0x194] sm:%s145] %v356
                %v358 = vld [vmem:[%s152 + $0x318] sm:%s145]
                %359 = vst [vmem:[%s153 + $0x198] sm:%s145] %v358
                %v360 = vld [vmem:[%s152 + $0x31c] sm:%s145]
                %361 = vst [vmem:[%s153 + $0x19c] sm:%s145] %v360
                %v362 = vld [vmem:[%s152 + $0x320] sm:%s145]
                %363 = vst [vmem:[%s153 + $0x1a0] sm:%s145] %v362
                %v364 = vld [vmem:[%s152 + $0x324] sm:%s145]
                %365 = vst [vmem:[%s153 + $0x1a4] sm:%s145] %v364
                %v366 = vld [vmem:[%s152 + $0x328] sm:%s145]
                %367 = vst [vmem:[%s153 + $0x1a8] sm:%s145] %v366
                %v368 = vld [vmem:[%s152 + $0x32c] sm:%s145]
                %369 = vst [vmem:[%s153 + $0x1ac] sm:%s145] %v368
                %v370 = vld [vmem:[%s152 + $0x330] sm:%s145]
                %371 = vst [vmem:[%s153 + $0x1b0] sm:%s145] %v370
                %v372 = vld [vmem:[%s152 + $0x334] sm:%s145]
                %373 = vst [vmem:[%s153 + $0x1b4] sm:%s145] %v372
                %v374 = vld [vmem:[%s152 + $0x338] sm:%s145]
                %375 = vst [vmem:[%s153 + $0x1b8] sm:%s145] %v374
                %v376 = vld [vmem:[%s152 + $0x33c] sm:%s145]
                %377 = vst [vmem:[%s153 + $0x1bc] sm:%s145] %v376
                %v378 = vld [vmem:[%s152 + $0x340] sm:%s145]
                %379 = vst [vmem:[%s153 + $0x1c0] sm:%s145] %v378
                %v380 = vld [vmem:[%s152 + $0x344] sm:%s145]
                %381 = vst [vmem:[%s153 + $0x1c4] sm:%s145] %v380
                %v382 = vld [vmem:[%s152 + $0x348] sm:%s145]
                %383 = vst [vmem:[%s153 + $0x1c8] sm:%s145] %v382
                %v384 = vld [vmem:[%s152 + $0x34c] sm:%s145]
                %385 = vst [vmem:[%s153 + $0x1cc] sm:%s145] %v384
                %v386 = vld [vmem:[%s152 + $0x350] sm:%s145]
                %387 = vst [vmem:[%s153 + $0x1d0] sm:%s145] %v386
                %v388 = vld [vmem:[%s152 + $0x354] sm:%s145]
                %389 = vst [vmem:[%s153 + $0x1d4] sm:%s145] %v388
                %v390 = vld [vmem:[%s152 + $0x358] sm:%s145]
                %391 = vst [vmem:[%s153 + $0x1d8] sm:%s145] %v390
                %v392 = vld [vmem:[%s152 + $0x35c] sm:%s145]
                %393 = vst [vmem:[%s153 + $0x1dc] sm:%s145] %v392
                %v394 = vld [vmem:[%s152 + $0x360] sm:%s145]
                %395 = vst [vmem:[%s153 + $0x1e0] sm:%s145] %v394
                %v396 = vld [vmem:[%s152 + $0x364] sm:%s145]
                %397 = vst [vmem:[%s153 + $0x1e4] sm:%s145] %v396
                %v398 = vld [vmem:[%s152 + $0x368] sm:%s145]
                %399 = vst [vmem:[%s153 + $0x1e8] sm:%s145] %v398
                %v400 = vld [vmem:[%s152 + $0x36c] sm:%s145]
                %401 = vst [vmem:[%s153 + $0x1ec] sm:%s145] %v400
                %v402 = vld [vmem:[%s152 + $0x370] sm:%s145]
                %403 = vst [vmem:[%s153 + $0x1f0] sm:%s145] %v402
                %v404 = vld [vmem:[%s152 + $0x374] sm:%s145]
                %405 = vst [vmem:[%s153 + $0x1f4] sm:%s145] %v404
                %v406 = vld [vmem:[%s152 + $0x378] sm:%s145]
                %407 = vst [vmem:[%s153 + $0x1f8] sm:%s145] %v406
                %v408 = vld [vmem:[%s152 + $0x37c] sm:%s145]
                %409 = vst [vmem:[%s153 + $0x1fc] sm:%s145] %v408
              $region45: #{lenet_dropout_forward.3} parent=39 // loop_footer
                %s151 = sadd.s32 1, %s147
              $region46: #{lenet_dropout_forward.3} parent=39 // loop_footer_branch
                %146 = sbr.rel target = $region42
              $region47: #{lenet_dropout_forward.3} parent=39 // loop_exit
                _
            $region40: #{lenet_dropout_forward.3} parent=31 // pred_fallthru
              _
          $region32: #{lenet_dropout_forward.3} parent=27 // pred_fallthru
            _
          %686 = vnop
        $region28: #{lenet_dropout_forward.3} parent=23 // pred_fallthru
          _
      $region24: #{lenet_dropout_forward.3} parent=5 // pred_fallthru
        _
      %p687 = scmp.le.s32.totalorder 1, %s9
      %p688 = scmp.lt.s32.totalorder %s9, 3
      %p689 = pnand %p687, %p688
      %p690 = pneg %p689
      // Predicated region
      $region66: #{lenet_dropout_forward.3} parent=5 // pred_check
        _
      $region67: #{lenet_dropout_forward.3} parent=5 // pred_check_branch
        %692 = sbr.rel (%p689) target = $region69
      $region68: #{lenet_dropout_forward.3} parent=5 // pred_region
        %s693 = ssub.s32 %s9, 1
        %s694 = sand.u32 %s22, 1
        %s695 = sand.u32 %s22, 1
        %s696 = smul.addr %s695, 512
        %s697 = scalar_lea.vmem [#allocation2], %s696
        // Predicated region
        $region70: #{lenet_dropout_forward.3} parent=68 // pred_check
          %p698 = pneg %p35
        $region71: #{lenet_dropout_forward.3} parent=68 // pred_check_branch
          %700 = sbr.rel (%p698) target = $region73
        $region72: #{lenet_dropout_forward.3} parent=68 // pred_region
          _
        $region73: #{lenet_dropout_forward.3} parent=68 // pred_fallthru
          _
        %s701 = sand.u32 %s22, 1
        %s702 = sand.u32 %s22, 1
        %s703 = smul.addr %s702, 512
        %s704 = scalar_lea.vmem [#allocation2], %s703
        %p705 = pneg %p35
        %p706 = pneg %p32
        %p707 = pneg %p56
        %p708 = pneg %p53
        %p709 = pneg %p77
        %p710 = pneg %p74
        %p711 = pneg %p103
        %p712 = pneg %p100
        %s713 = smul.u32 32, %s14
        %p714 = scmp.lt.s32.totalorder %s713, 63
        %s715 = scalar_select %p714, %s713, 63
        %s716 = smul.addr %s715, 8
        %s717 = scalar_lea.vmem %s3, %s716
        %s718 = smul.u32 32, %s14
        %s719 = smul.u32 32, %s14
        %p720 = scmp.lt.s32.totalorder %s719, 63
        %s721 = scalar_select %p720, %s719, 63
        %s722 = smul.addr %s721, 8
        %s723 = scalar_lea.vmem %s3, %s722
        %s724 = smul.u32 32, %s14
        %v726 = vld [vmem:[%s1] sm:$0xf]
        %v727 = vld [vmem:[%s1 + $0x4] sm:$0xf]
        %v728 = vld [vmem:[%s1 + $0x8] sm:$0xf]
        %v729 = vld [vmem:[%s1 + $0xc] sm:$0x1]
        %v730 = vld [vmem:[%s2] sm:$0x1]
        %v731 = vld [vmem:[%s697] sm:$0xf]
        %v732 = vld [vmem:[%s697 + $0x4] sm:$0xf]
        %v733 = vld [vmem:[%s697 + $0x8] sm:$0xf]
        %v734 = vld [vmem:[%s697 + $0xc] sm:$0xf]
        %v735 = vld [vmem:[%s697 + $0x10] sm:$0xf]
        %v736 = vld [vmem:[%s697 + $0x14] sm:$0xf]
        %v737 = vld [vmem:[%s697 + $0x18] sm:$0xf]
        %v738 = vld [vmem:[%s697 + $0x1c] sm:$0xf]
        %v739 = vld [vmem:[%s697 + $0x20] sm:$0xf]
        %v740 = vld [vmem:[%s697 + $0x24] sm:$0xf]
        %v741 = vld [vmem:[%s697 + $0x28] sm:$0xf]
        %v742 = vld [vmem:[%s697 + $0x2c] sm:$0xf]
        %v743 = vld [vmem:[%s697 + $0x30] sm:$0xf]
        %v744 = vld [vmem:[%s697 + $0x34] sm:$0xf]
        %v745 = vld [vmem:[%s697 + $0x38] sm:$0xf]
        %v746 = vld [vmem:[%s697 + $0x3c] sm:$0xf]
        %v747 = vld [vmem:[%s697 + $0x40] sm:$0xf]
        %v748 = vld [vmem:[%s697 + $0x44] sm:$0xf]
        %v749 = vld [vmem:[%s697 + $0x48] sm:$0xf]
        %v750 = vld [vmem:[%s697 + $0x4c] sm:$0xf]
        %v751 = vld [vmem:[%s697 + $0x50] sm:$0xf]
        %v752 = vld [vmem:[%s697 + $0x54] sm:$0xf]
        %v753 = vld [vmem:[%s697 + $0x58] sm:$0xf]
        %v754 = vld [vmem:[%s697 + $0x5c] sm:$0xf]
        %v755 = vld [vmem:[%s697 + $0x60] sm:$0xf]
        %v756 = vld [vmem:[%s697 + $0x64] sm:$0xf]
        %v757 = vld [vmem:[%s697 + $0x68] sm:$0xf]
        %v758 = vld [vmem:[%s697 + $0x6c] sm:$0xf]
        %v759 = vld [vmem:[%s697 + $0x70] sm:$0xf]
        %v760 = vld [vmem:[%s697 + $0x74] sm:$0xf]
        %v761 = vld [vmem:[%s697 + $0x78] sm:$0xf]
        %v762 = vld [vmem:[%s697 + $0x7c] sm:$0xf]
        %v764 = vlaneseq
        %v765 = vshrl.u32 %v764, 7
        %v766 = vsub.s32 0, %v765
        %v767 = vrot.slane %v730, %v766
        %v801 = vunpack.c.l.b16 %v731
        %v802 = vunpack.c.l.b16 %v732
        %v803 = vunpack.c.l.b16 %v733
        %v804 = vunpack.c.l.b16 %v734
        %v805 = vunpack.c.l.b16 %v735
        %v806 = vunpack.c.l.b16 %v736
        %v807 = vunpack.c.l.b16 %v737
        %v808 = vunpack.c.l.b16 %v738
        %v809 = vunpack.c.l.b16 %v739
        %v810 = vunpack.c.l.b16 %v740
        %v811 = vunpack.c.l.b16 %v741
        %v812 = vunpack.c.l.b16 %v742
        %v813 = vunpack.c.l.b16 %v743
        %v814 = vunpack.c.l.b16 %v744
        %v815 = vunpack.c.l.b16 %v745
        %v816 = vunpack.c.l.b16 %v746
        %v817 = vunpack.c.l.b16 %v747
        %v818 = vunpack.c.l.b16 %v748
        %v819 = vunpack.c.l.b16 %v749
        %v820 = vunpack.c.l.b16 %v750
        %v821 = vunpack.c.l.b16 %v751
        %v822 = vunpack.c.l.b16 %v752
        %v823 = vunpack.c.l.b16 %v753
        %v824 = vunpack.c.l.b16 %v754
        %v825 = vunpack.c.l.b16 %v755
        %v826 = vunpack.c.l.b16 %v756
        %v827 = vunpack.c.l.b16 %v757
        %v828 = vunpack.c.l.b16 %v758
        %v829 = vunpack.c.l.b16 %v759
        %v830 = vunpack.c.l.b16 %v760
        %v831 = vunpack.c.l.b16 %v761
        %v832 = vunpack.c.l.b16 %v762
        %v833 = vpack.c.b16 %v802, %v801
        %v834 = vpack.c.b16 %v804, %v803
        %v835 = vpack.c.b16 %v806, %v805
        %v836 = vpack.c.b16 %v808, %v807
        %v837 = vpack.c.b16 %v810, %v809
        %v838 = vpack.c.b16 %v812, %v811
        %v839 = vpack.c.b16 %v814, %v813
        %v840 = vpack.c.b16 %v816, %v815
        %v841 = vpack.c.b16 %v818, %v817
        %v842 = vpack.c.b16 %v820, %v819
        %v843 = vpack.c.b16 %v822, %v821
        %v844 = vpack.c.b16 %v824, %v823
        %v845 = vpack.c.b16 %v826, %v825
        %v846 = vpack.c.b16 %v828, %v827
        %v847 = vpack.c.b16 %v830, %v829
        %v848 = vpack.c.b16 %v832, %v831
        %v853 = vunpack.c.l.b16 %v726
        %v854 = vunpack.c.l.b16 %v727
        %v855 = vunpack.c.l.b16 %v728
        %v856 = vunpack.c.l.b16 %v729
        %v857 = vpack.c.b16 %v854, %v853
        %v858 = vpack.c.b16 %v856, %v855
        %vm860 = vcmask 203776
        %v862 = vsel %vm860, %v833, 0
        %v865 = vsel %vm860, %v834, 0
        %v868 = vsel %vm860, %v835, 0
        %v871 = vsel %vm860, %v836, 0
        %v874 = vsel %vm860, %v837, 0
        %v877 = vsel %vm860, %v838, 0
        %v880 = vsel %vm860, %v839, 0
        %v883 = vsel %vm860, %v840, 0
        %v886 = vsel %vm860, %v841, 0
        %v889 = vsel %vm860, %v842, 0
        %v892 = vsel %vm860, %v843, 0
        %v895 = vsel %vm860, %v844, 0
        %v898 = vsel %vm860, %v845, 0
        %v901 = vsel %vm860, %v846, 0
        %v904 = vsel %vm860, %v847, 0
        %v907 = vsel %vm860, %v848, 0
        %vm909 = vcmask 1043456
        %vm910 = vcmask 1044480
        %v911 = vsel %vm909, 4294967295, 65535
        %v912 = vsel %vm910, %v911, 0
        %v914 = vand.u32 %v858, %v912
        %916 = vmatprep.subr.bf16.mxu0 0
        %917 = vmatpush1.bf16.msra.mxu0 0
        %918 = vmatprep.subr.bf16.mxu0 0
        %919 = vmatpush1.bf16.msra.mxu0 0
        %920 = vmatprep.subr.bf16.mxu0 0
        %921 = vmatpush1.bf16.msra.mxu0 0
        %922 = vmatprep.subr.bf16.mxu0 0
        %923 = vmatpush1.bf16.msra.mxu0 0
        %924 = vmatprep.subr.bf16.mxu0 0
        %925 = vmatpush1.bf16.msra.mxu0 0
        %926 = vmatprep.subr.bf16.mxu0 0
        %927 = vmatpush1.bf16.msra.mxu0 0
        %928 = vmatprep.subr.bf16.mxu0 0
        %929 = vmatpush1.bf16.msra.mxu0 %v914
        %930 = vmatprep.subr.bf16.mxu0 0
        %931 = vmatpush1.bf16.msra.mxu0 %v857
        %932 = vmatprep.subr.bf16.mxu0 0
        %933 = vmatpush2.bf16.msra.mxu0 0
        %934 = vmatprep.subr.bf16.mxu0 0
        %935 = vmatpush2.bf16.msra.mxu0 0
        %936 = vmatprep.subr.bf16.mxu0 0
        %937 = vmatpush2.bf16.msra.mxu0 0
        %938 = vmatprep.subr.bf16.mxu0 0
        %939 = vmatpush2.bf16.msra.mxu0 0
        %940 = vmatprep.subr.bf16.mxu0 0
        %941 = vmatpush2.bf16.msra.mxu0 0
        %942 = vmatprep.subr.bf16.mxu0 0
        %943 = vmatpush2.bf16.msra.mxu0 0
        %944 = vmatprep.subr.bf16.mxu0 0
        %945 = vmatpush2.bf16.msra.mxu0 0
        %946 = vmatprep.subr.bf16.mxu0 0
        %947 = vmatpush2.bf16.msra.mxu0 0
        %948 = vmatprep.mubr.bf16.mxu0 0
        %949 = vmatmul.mubr.bf16.gmra.mxu0 %v862
        %v950 = vpop.f32.mrf.mxu0
        %v951 = vadd.f32 %v767, %v950
        %v952 = vpop.f32.mrf.mxu0
        %v953 = vpop.f32.mrf.mxu0
        %v954 = vadd.f32 %v767, %v953
        %v955 = vpop.f32.mrf.mxu0
        %956 = vmatprep.mubr.bf16.mxu0 0
        %957 = vmatmul.mubr.bf16.gmra.mxu0 %v865
        %v958 = vpop.f32.mrf.mxu0
        %v959 = vadd.f32 %v767, %v958
        %v960 = vpop.f32.mrf.mxu0
        %v961 = vpop.f32.mrf.mxu0
        %v962 = vadd.f32 %v767, %v961
        %v963 = vpop.f32.mrf.mxu0
        %964 = vmatprep.mubr.bf16.mxu0 0
        %965 = vmatmul.mubr.bf16.gmra.mxu0 %v868
        %v966 = vpop.f32.mrf.mxu0
        %v967 = vadd.f32 %v767, %v966
        %v968 = vpop.f32.mrf.mxu0
        %v969 = vpop.f32.mrf.mxu0
        %v970 = vadd.f32 %v767, %v969
        %v971 = vpop.f32.mrf.mxu0
        %972 = vmatprep.mubr.bf16.mxu0 0
        %973 = vmatmul.mubr.bf16.gmra.mxu0 %v871
        %v974 = vpop.f32.mrf.mxu0
        %v975 = vadd.f32 %v767, %v974
        %v976 = vpop.f32.mrf.mxu0
        %v977 = vpop.f32.mrf.mxu0
        %v978 = vadd.f32 %v767, %v977
        %v979 = vpop.f32.mrf.mxu0
        %980 = vmatprep.mubr.bf16.mxu0 0
        %981 = vmatmul.mubr.bf16.gmra.mxu0 %v874
        %v982 = vpop.f32.mrf.mxu0
        %v983 = vadd.f32 %v767, %v982
        %v984 = vpop.f32.mrf.mxu0
        %v985 = vpop.f32.mrf.mxu0
        %v986 = vadd.f32 %v767, %v985
        %v987 = vpop.f32.mrf.mxu0
        %988 = vmatprep.mubr.bf16.mxu0 0
        %989 = vmatmul.mubr.bf16.gmra.mxu0 %v877
        %v990 = vpop.f32.mrf.mxu0
        %v991 = vadd.f32 %v767, %v990
        %v992 = vpop.f32.mrf.mxu0
        %v993 = vpop.f32.mrf.mxu0
        %v994 = vadd.f32 %v767, %v993
        %v995 = vpop.f32.mrf.mxu0
        %996 = vmatprep.mubr.bf16.mxu0 0
        %997 = vmatmul.mubr.bf16.gmra.mxu0 %v880
        %v998 = vpop.f32.mrf.mxu0
        %v999 = vadd.f32 %v767, %v998
        %v1000 = vpop.f32.mrf.mxu0
        %v1001 = vpop.f32.mrf.mxu0
        %v1002 = vadd.f32 %v767, %v1001
        %v1003 = vpop.f32.mrf.mxu0
        %1004 = vmatprep.mubr.bf16.mxu0 0
        %1005 = vmatmul.mubr.bf16.gmra.mxu0 %v883
        %v1006 = vpop.f32.mrf.mxu0
        %v1007 = vadd.f32 %v767, %v1006
        %v1008 = vpop.f32.mrf.mxu0
        %v1009 = vpop.f32.mrf.mxu0
        %v1010 = vadd.f32 %v767, %v1009
        %v1011 = vpop.f32.mrf.mxu0
        %1012 = vmatprep.mubr.bf16.mxu0 0
        %1013 = vmatmul.mubr.bf16.gmra.mxu0 %v886
        %v1014 = vpop.f32.mrf.mxu0
        %v1015 = vadd.f32 %v767, %v1014
        %v1016 = vpop.f32.mrf.mxu0
        %v1017 = vpop.f32.mrf.mxu0
        %v1018 = vadd.f32 %v767, %v1017
        %v1019 = vpop.f32.mrf.mxu0
        %1020 = vmatprep.mubr.bf16.mxu0 0
        %1021 = vmatmul.mubr.bf16.gmra.mxu0 %v889
        %v1022 = vpop.f32.mrf.mxu0
        %v1023 = vadd.f32 %v767, %v1022
        %v1024 = vpop.f32.mrf.mxu0
        %v1025 = vpop.f32.mrf.mxu0
        %v1026 = vadd.f32 %v767, %v1025
        %v1027 = vpop.f32.mrf.mxu0
        %1028 = vmatprep.mubr.bf16.mxu0 0
        %1029 = vmatmul.mubr.bf16.gmra.mxu0 %v892
        %v1030 = vpop.f32.mrf.mxu0
        %v1031 = vadd.f32 %v767, %v1030
        %v1032 = vpop.f32.mrf.mxu0
        %v1033 = vpop.f32.mrf.mxu0
        %v1034 = vadd.f32 %v767, %v1033
        %v1035 = vpop.f32.mrf.mxu0
        %1036 = vmatprep.mubr.bf16.mxu0 0
        %1037 = vmatmul.mubr.bf16.gmra.mxu0 %v895
        %v1038 = vpop.f32.mrf.mxu0
        %v1039 = vadd.f32 %v767, %v1038
        %v1040 = vpop.f32.mrf.mxu0
        %v1041 = vpop.f32.mrf.mxu0
        %v1042 = vadd.f32 %v767, %v1041
        %v1043 = vpop.f32.mrf.mxu0
        %1044 = vmatprep.mubr.bf16.mxu0 0
        %1045 = vmatmul.mubr.bf16.gmra.mxu0 %v898
        %v1046 = vpop.f32.mrf.mxu0
        %v1047 = vadd.f32 %v767, %v1046
        %v1048 = vpop.f32.mrf.mxu0
        %v1049 = vpop.f32.mrf.mxu0
        %v1050 = vadd.f32 %v767, %v1049
        %v1051 = vpop.f32.mrf.mxu0
        %1052 = vmatprep.mubr.bf16.mxu0 0
        %1053 = vmatmul.mubr.bf16.gmra.mxu0 %v901
        %v1054 = vpop.f32.mrf.mxu0
        %v1055 = vadd.f32 %v767, %v1054
        %v1056 = vpop.f32.mrf.mxu0
        %v1057 = vpop.f32.mrf.mxu0
        %v1058 = vadd.f32 %v767, %v1057
        %v1059 = vpop.f32.mrf.mxu0
        %1060 = vmatprep.mubr.bf16.mxu0 0
        %1061 = vmatmul.mubr.bf16.gmra.mxu0 %v904
        %v1062 = vpop.f32.mrf.mxu0
        %v1063 = vadd.f32 %v767, %v1062
        %v1064 = vpop.f32.mrf.mxu0
        %v1065 = vpop.f32.mrf.mxu0
        %v1066 = vadd.f32 %v767, %v1065
        %v1067 = vpop.f32.mrf.mxu0
        %1068 = vmatprep.mubr.bf16.mxu0 0
        %1069 = vmatmul.mubr.bf16.gmra.mxu0 %v907
        %v1070 = vpop.f32.mrf.mxu0
        %v1071 = vadd.f32 %v767, %v1070
        %v1072 = vpop.f32.mrf.mxu0
        %v1073 = vpop.f32.mrf.mxu0
        %v1074 = vadd.f32 %v767, %v1073
        %v1075 = vpop.f32.mrf.mxu0
        %1076 = vdwg.mxu0
        %s1077 = scalar_lea.vmem %s697, 128 [#allocation2]
        %v1078 = vld [vmem:[%s1077] sm:$0xf]
        %v1079 = vld [vmem:[%s1077 + $0x4] sm:$0xf]
        %v1080 = vld [vmem:[%s1077 + $0x8] sm:$0xf]
        %v1081 = vld [vmem:[%s1077 + $0xc] sm:$0xf]
        %v1082 = vld [vmem:[%s1077 + $0x10] sm:$0xf]
        %v1083 = vld [vmem:[%s1077 + $0x14] sm:$0xf]
        %v1084 = vld [vmem:[%s1077 + $0x18] sm:$0xf]
        %v1085 = vld [vmem:[%s1077 + $0x1c] sm:$0xf]
        %v1086 = vld [vmem:[%s1077 + $0x20] sm:$0xf]
        %v1087 = vld [vmem:[%s1077 + $0x24] sm:$0xf]
        %v1088 = vld [vmem:[%s1077 + $0x28] sm:$0xf]
        %v1089 = vld [vmem:[%s1077 + $0x2c] sm:$0xf]
        %v1090 = vld [vmem:[%s1077 + $0x30] sm:$0xf]
        %v1091 = vld [vmem:[%s1077 + $0x34] sm:$0xf]
        %v1092 = vld [vmem:[%s1077 + $0x38] sm:$0xf]
        %v1093 = vld [vmem:[%s1077 + $0x3c] sm:$0xf]
        %v1094 = vld [vmem:[%s1077 + $0x40] sm:$0xf]
        %v1095 = vld [vmem:[%s1077 + $0x44] sm:$0xf]
        %v1096 = vld [vmem:[%s1077 + $0x48] sm:$0xf]
        %v1097 = vld [vmem:[%s1077 + $0x4c] sm:$0xf]
        %v1098 = vld [vmem:[%s1077 + $0x50] sm:$0xf]
        %v1099 = vld [vmem:[%s1077 + $0x54] sm:$0xf]
        %v1100 = vld [vmem:[%s1077 + $0x58] sm:$0xf]
        %v1101 = vld [vmem:[%s1077 + $0x5c] sm:$0xf]
        %v1102 = vld [vmem:[%s1077 + $0x60] sm:$0xf]
        %v1103 = vld [vmem:[%s1077 + $0x64] sm:$0xf]
        %v1104 = vld [vmem:[%s1077 + $0x68] sm:$0xf]
        %v1105 = vld [vmem:[%s1077 + $0x6c] sm:$0xf]
        %v1106 = vld [vmem:[%s1077 + $0x70] sm:$0xf]
        %v1107 = vld [vmem:[%s1077 + $0x74] sm:$0xf]
        %v1108 = vld [vmem:[%s1077 + $0x78] sm:$0xf]
        %v1109 = vld [vmem:[%s1077 + $0x7c] sm:$0xf]
        %v1142 = vunpack.c.l.b16 %v1078
        %v1143 = vunpack.c.l.b16 %v1079
        %v1144 = vunpack.c.l.b16 %v1080
        %v1145 = vunpack.c.l.b16 %v1081
        %v1146 = vunpack.c.l.b16 %v1082
        %v1147 = vunpack.c.l.b16 %v1083
        %v1148 = vunpack.c.l.b16 %v1084
        %v1149 = vunpack.c.l.b16 %v1085
        %v1150 = vunpack.c.l.b16 %v1086
        %v1151 = vunpack.c.l.b16 %v1087
        %v1152 = vunpack.c.l.b16 %v1088
        %v1153 = vunpack.c.l.b16 %v1089
        %v1154 = vunpack.c.l.b16 %v1090
        %v1155 = vunpack.c.l.b16 %v1091
        %v1156 = vunpack.c.l.b16 %v1092
        %v1157 = vunpack.c.l.b16 %v1093
        %v1158 = vunpack.c.l.b16 %v1094
        %v1159 = vunpack.c.l.b16 %v1095
        %v1160 = vunpack.c.l.b16 %v1096
        %v1161 = vunpack.c.l.b16 %v1097
        %v1162 = vunpack.c.l.b16 %v1098
        %v1163 = vunpack.c.l.b16 %v1099
        %v1164 = vunpack.c.l.b16 %v1100
        %v1165 = vunpack.c.l.b16 %v1101
        %v1166 = vunpack.c.l.b16 %v1102
        %v1167 = vunpack.c.l.b16 %v1103
        %v1168 = vunpack.c.l.b16 %v1104
        %v1169 = vunpack.c.l.b16 %v1105
        %v1170 = vunpack.c.l.b16 %v1106
        %v1171 = vunpack.c.l.b16 %v1107
        %v1172 = vunpack.c.l.b16 %v1108
        %v1173 = vunpack.c.l.b16 %v1109
        %v1174 = vpack.c.b16 %v1143, %v1142
        %v1175 = vpack.c.b16 %v1145, %v1144
        %v1176 = vpack.c.b16 %v1147, %v1146
        %v1177 = vpack.c.b16 %v1149, %v1148
        %v1178 = vpack.c.b16 %v1151, %v1150
        %v1179 = vpack.c.b16 %v1153, %v1152
        %v1180 = vpack.c.b16 %v1155, %v1154
        %v1181 = vpack.c.b16 %v1157, %v1156
        %v1182 = vpack.c.b16 %v1159, %v1158
        %v1183 = vpack.c.b16 %v1161, %v1160
        %v1184 = vpack.c.b16 %v1163, %v1162
        %v1185 = vpack.c.b16 %v1165, %v1164
        %v1186 = vpack.c.b16 %v1167, %v1166
        %v1187 = vpack.c.b16 %v1169, %v1168
        %v1188 = vpack.c.b16 %v1171, %v1170
        %v1189 = vpack.c.b16 %v1173, %v1172
        %v1191 = vsel %vm860, %v1174, 0
        %v1194 = vsel %vm860, %v1175, 0
        %v1197 = vsel %vm860, %v1176, 0
        %v1200 = vsel %vm860, %v1177, 0
        %v1203 = vsel %vm860, %v1178, 0
        %v1206 = vsel %vm860, %v1179, 0
        %v1209 = vsel %vm860, %v1180, 0
        %v1212 = vsel %vm860, %v1181, 0
        %v1215 = vsel %vm860, %v1182, 0
        %v1218 = vsel %vm860, %v1183, 0
        %v1221 = vsel %vm860, %v1184, 0
        %v1224 = vsel %vm860, %v1185, 0
        %v1227 = vsel %vm860, %v1186, 0
        %v1230 = vsel %vm860, %v1187, 0
        %v1233 = vsel %vm860, %v1188, 0
        %v1236 = vsel %vm860, %v1189, 0
        %1238 = vmatprep.subr.bf16.mxu0 0
        %1239 = vmatpush1.bf16.msra.mxu0 0
        %1240 = vmatprep.subr.bf16.mxu0 0
        %1241 = vmatpush1.bf16.msra.mxu0 0
        %1242 = vmatprep.subr.bf16.mxu0 0
        %1243 = vmatpush1.bf16.msra.mxu0 0
        %1244 = vmatprep.subr.bf16.mxu0 0
        %1245 = vmatpush1.bf16.msra.mxu0 0
        %1246 = vmatprep.subr.bf16.mxu0 0
        %1247 = vmatpush1.bf16.msra.mxu0 0
        %1248 = vmatprep.subr.bf16.mxu0 0
        %1249 = vmatpush1.bf16.msra.mxu0 0
        %1250 = vmatprep.subr.bf16.mxu0 0
        %1251 = vmatpush1.bf16.msra.mxu0 %v914
        %1252 = vmatprep.subr.bf16.mxu0 0
        %1253 = vmatpush1.bf16.msra.mxu0 %v857
        %1254 = vmatprep.subr.bf16.mxu0 0
        %1255 = vmatpush2.bf16.msra.mxu0 0
        %1256 = vmatprep.subr.bf16.mxu0 0
        %1257 = vmatpush2.bf16.msra.mxu0 0
        %1258 = vmatprep.subr.bf16.mxu0 0
        %1259 = vmatpush2.bf16.msra.mxu0 0
        %1260 = vmatprep.subr.bf16.mxu0 0
        %1261 = vmatpush2.bf16.msra.mxu0 0
        %1262 = vmatprep.subr.bf16.mxu0 0
        %1263 = vmatpush2.bf16.msra.mxu0 0
        %1264 = vmatprep.subr.bf16.mxu0 0
        %1265 = vmatpush2.bf16.msra.mxu0 0
        %1266 = vmatprep.subr.bf16.mxu0 0
        %1267 = vmatpush2.bf16.msra.mxu0 0
        %1268 = vmatprep.subr.bf16.mxu0 0
        %1269 = vmatpush2.bf16.msra.mxu0 0
        %1270 = vmatprep.mubr.bf16.mxu0 0
        %1271 = vmatmul.mubr.bf16.gmra.mxu0 %v1191
        %v1272 = vpop.f32.mrf.mxu0
        %v1273 = vadd.f32 %v767, %v1272
        %v1274 = vpop.f32.mrf.mxu0
        %v1275 = vpop.f32.mrf.mxu0
        %v1276 = vadd.f32 %v767, %v1275
        %v1277 = vpop.f32.mrf.mxu0
        %1278 = vmatprep.mubr.bf16.mxu0 0
        %1279 = vmatmul.mubr.bf16.gmra.mxu0 %v1194
        %v1280 = vpop.f32.mrf.mxu0
        %v1281 = vadd.f32 %v767, %v1280
        %v1282 = vpop.f32.mrf.mxu0
        %v1283 = vpop.f32.mrf.mxu0
        %v1284 = vadd.f32 %v767, %v1283
        %v1285 = vpop.f32.mrf.mxu0
        %1286 = vmatprep.mubr.bf16.mxu0 0
        %1287 = vmatmul.mubr.bf16.gmra.mxu0 %v1197
        %v1288 = vpop.f32.mrf.mxu0
        %v1289 = vadd.f32 %v767, %v1288
        %v1290 = vpop.f32.mrf.mxu0
        %v1291 = vpop.f32.mrf.mxu0
        %v1292 = vadd.f32 %v767, %v1291
        %v1293 = vpop.f32.mrf.mxu0
        %1294 = vmatprep.mubr.bf16.mxu0 0
        %1295 = vmatmul.mubr.bf16.gmra.mxu0 %v1200
        %v1296 = vpop.f32.mrf.mxu0
        %v1297 = vadd.f32 %v767, %v1296
        %v1298 = vpop.f32.mrf.mxu0
        %v1299 = vpop.f32.mrf.mxu0
        %v1300 = vadd.f32 %v767, %v1299
        %v1301 = vpop.f32.mrf.mxu0
        %1302 = vmatprep.mubr.bf16.mxu0 0
        %1303 = vmatmul.mubr.bf16.gmra.mxu0 %v1203
        %v1304 = vpop.f32.mrf.mxu0
        %v1305 = vadd.f32 %v767, %v1304
        %v1306 = vpop.f32.mrf.mxu0
        %v1307 = vpop.f32.mrf.mxu0
        %v1308 = vadd.f32 %v767, %v1307
        %v1309 = vpop.f32.mrf.mxu0
        %1310 = vmatprep.mubr.bf16.mxu0 0
        %1311 = vmatmul.mubr.bf16.gmra.mxu0 %v1206
        %v1312 = vpop.f32.mrf.mxu0
        %v1313 = vadd.f32 %v767, %v1312
        %v1314 = vpop.f32.mrf.mxu0
        %v1315 = vpop.f32.mrf.mxu0
        %v1316 = vadd.f32 %v767, %v1315
        %v1317 = vpop.f32.mrf.mxu0
        %1318 = vmatprep.mubr.bf16.mxu0 0
        %1319 = vmatmul.mubr.bf16.gmra.mxu0 %v1209
        %v1320 = vpop.f32.mrf.mxu0
        %v1321 = vadd.f32 %v767, %v1320
        %v1322 = vpop.f32.mrf.mxu0
        %v1323 = vpop.f32.mrf.mxu0
        %v1324 = vadd.f32 %v767, %v1323
        %v1325 = vpop.f32.mrf.mxu0
        %1326 = vmatprep.mubr.bf16.mxu0 0
        %1327 = vmatmul.mubr.bf16.gmra.mxu0 %v1212
        %v1328 = vpop.f32.mrf.mxu0
        %v1329 = vadd.f32 %v767, %v1328
        %v1330 = vpop.f32.mrf.mxu0
        %v1331 = vpop.f32.mrf.mxu0
        %v1332 = vadd.f32 %v767, %v1331
        %v1333 = vpop.f32.mrf.mxu0
        %1334 = vmatprep.mubr.bf16.mxu0 0
        %1335 = vmatmul.mubr.bf16.gmra.mxu0 %v1215
        %v1336 = vpop.f32.mrf.mxu0
        %v1337 = vadd.f32 %v767, %v1336
        %v1338 = vpop.f32.mrf.mxu0
        %v1339 = vpop.f32.mrf.mxu0
        %v1340 = vadd.f32 %v767, %v1339
        %v1341 = vpop.f32.mrf.mxu0
        %1342 = vmatprep.mubr.bf16.mxu0 0
        %1343 = vmatmul.mubr.bf16.gmra.mxu0 %v1218
        %v1344 = vpop.f32.mrf.mxu0
        %v1345 = vadd.f32 %v767, %v1344
        %v1346 = vpop.f32.mrf.mxu0
        %v1347 = vpop.f32.mrf.mxu0
        %v1348 = vadd.f32 %v767, %v1347
        %v1349 = vpop.f32.mrf.mxu0
        %1350 = vmatprep.mubr.bf16.mxu0 0
        %1351 = vmatmul.mubr.bf16.gmra.mxu0 %v1221
        %v1352 = vpop.f32.mrf.mxu0
        %v1353 = vadd.f32 %v767, %v1352
        %v1354 = vpop.f32.mrf.mxu0
        %v1355 = vpop.f32.mrf.mxu0
        %v1356 = vadd.f32 %v767, %v1355
        %v1357 = vpop.f32.mrf.mxu0
        %1358 = vmatprep.mubr.bf16.mxu0 0
        %1359 = vmatmul.mubr.bf16.gmra.mxu0 %v1224
        %v1360 = vpop.f32.mrf.mxu0
        %v1361 = vadd.f32 %v767, %v1360
        %v1362 = vpop.f32.mrf.mxu0
        %v1363 = vpop.f32.mrf.mxu0
        %v1364 = vadd.f32 %v767, %v1363
        %v1365 = vpop.f32.mrf.mxu0
        %1366 = vmatprep.mubr.bf16.mxu0 0
        %1367 = vmatmul.mubr.bf16.gmra.mxu0 %v1227
        %v1368 = vpop.f32.mrf.mxu0
        %v1369 = vadd.f32 %v767, %v1368
        %v1370 = vpop.f32.mrf.mxu0
        %v1371 = vpop.f32.mrf.mxu0
        %v1372 = vadd.f32 %v767, %v1371
        %v1373 = vpop.f32.mrf.mxu0
        %1374 = vmatprep.mubr.bf16.mxu0 0
        %1375 = vmatmul.mubr.bf16.gmra.mxu0 %v1230
        %v1376 = vpop.f32.mrf.mxu0
        %v1377 = vadd.f32 %v767, %v1376
        %v1378 = vpop.f32.mrf.mxu0
        %v1379 = vpop.f32.mrf.mxu0
        %v1380 = vadd.f32 %v767, %v1379
        %v1381 = vpop.f32.mrf.mxu0
        %1382 = vmatprep.mubr.bf16.mxu0 0
        %1383 = vmatmul.mubr.bf16.gmra.mxu0 %v1233
        %v1384 = vpop.f32.mrf.mxu0
        %v1385 = vadd.f32 %v767, %v1384
        %v1386 = vpop.f32.mrf.mxu0
        %v1387 = vpop.f32.mrf.mxu0
        %v1388 = vadd.f32 %v767, %v1387
        %v1389 = vpop.f32.mrf.mxu0
        %1390 = vmatprep.mubr.bf16.mxu0 0
        %1391 = vmatmul.mubr.bf16.gmra.mxu0 %v1236
        %v1392 = vpop.f32.mrf.mxu0
        %v1393 = vadd.f32 %v767, %v1392
        %v1394 = vpop.f32.mrf.mxu0
        %v1395 = vpop.f32.mrf.mxu0
        %v1396 = vadd.f32 %v767, %v1395
        %v1397 = vpop.f32.mrf.mxu0
        %1398 = vdwg.mxu0
        %v1399 = vmax.f32 %v951, %v1273
        %v1400 = vmax.f32 %v954, %v1276
        %v1401 = vmax.f32 %v959, %v1281
        %v1402 = vmax.f32 %v962, %v1284
        %v1403 = vmax.f32 %v967, %v1289
        %v1404 = vmax.f32 %v970, %v1292
        %v1405 = vmax.f32 %v975, %v1297
        %v1406 = vmax.f32 %v978, %v1300
        %v1407 = vmax.f32 %v983, %v1305
        %v1408 = vmax.f32 %v986, %v1308
        %v1409 = vmax.f32 %v991, %v1313
        %v1410 = vmax.f32 %v994, %v1316
        %v1411 = vmax.f32 %v999, %v1321
        %v1412 = vmax.f32 %v1002, %v1324
        %v1413 = vmax.f32 %v1007, %v1329
        %v1414 = vmax.f32 %v1010, %v1332
        %v1415 = vmax.f32 %v1015, %v1337
        %v1416 = vmax.f32 %v1018, %v1340
        %v1417 = vmax.f32 %v1023, %v1345
        %v1418 = vmax.f32 %v1026, %v1348
        %v1419 = vmax.f32 %v1031, %v1353
        %v1420 = vmax.f32 %v1034, %v1356
        %v1421 = vmax.f32 %v1039, %v1361
        %v1422 = vmax.f32 %v1042, %v1364
        %v1423 = vmax.f32 %v1047, %v1369
        %v1424 = vmax.f32 %v1050, %v1372
        %v1425 = vmax.f32 %v1055, %v1377
        %v1426 = vmax.f32 %v1058, %v1380
        %v1427 = vmax.f32 %v1063, %v1385
        %v1428 = vmax.f32 %v1066, %v1388
        %v1429 = vmax.f32 %v1071, %v1393
        %v1430 = vmax.f32 %v1074, %v1396
        %s1431 = scalar_lea.vmem %s697, 256 [#allocation2]
        %v1432 = vld [vmem:[%s1431] sm:$0xf]
        %v1433 = vld [vmem:[%s1431 + $0x4] sm:$0xf]
        %v1434 = vld [vmem:[%s1431 + $0x8] sm:$0xf]
        %v1435 = vld [vmem:[%s1431 + $0xc] sm:$0xf]
        %v1436 = vld [vmem:[%s1431 + $0x10] sm:$0xf]
        %v1437 = vld [vmem:[%s1431 + $0x14] sm:$0xf]
        %v1438 = vld [vmem:[%s1431 + $0x18] sm:$0xf]
        %v1439 = vld [vmem:[%s1431 + $0x1c] sm:$0xf]
        %v1440 = vld [vmem:[%s1431 + $0x20] sm:$0xf]
        %v1441 = vld [vmem:[%s1431 + $0x24] sm:$0xf]
        %v1442 = vld [vmem:[%s1431 + $0x28] sm:$0xf]
        %v1443 = vld [vmem:[%s1431 + $0x2c] sm:$0xf]
        %v1444 = vld [vmem:[%s1431 + $0x30] sm:$0xf]
        %v1445 = vld [vmem:[%s1431 + $0x34] sm:$0xf]
        %v1446 = vld [vmem:[%s1431 + $0x38] sm:$0xf]
        %v1447 = vld [vmem:[%s1431 + $0x3c] sm:$0xf]
        %v1448 = vld [vmem:[%s1431 + $0x40] sm:$0xf]
        %v1449 = vld [vmem:[%s1431 + $0x44] sm:$0xf]
        %v1450 = vld [vmem:[%s1431 + $0x48] sm:$0xf]
        %v1451 = vld [vmem:[%s1431 + $0x4c] sm:$0xf]
        %v1452 = vld [vmem:[%s1431 + $0x50] sm:$0xf]
        %v1453 = vld [vmem:[%s1431 + $0x54] sm:$0xf]
        %v1454 = vld [vmem:[%s1431 + $0x58] sm:$0xf]
        %v1455 = vld [vmem:[%s1431 + $0x5c] sm:$0xf]
        %v1456 = vld [vmem:[%s1431 + $0x60] sm:$0xf]
        %v1457 = vld [vmem:[%s1431 + $0x64] sm:$0xf]
        %v1458 = vld [vmem:[%s1431 + $0x68] sm:$0xf]
        %v1459 = vld [vmem:[%s1431 + $0x6c] sm:$0xf]
        %v1460 = vld [vmem:[%s1431 + $0x70] sm:$0xf]
        %v1461 = vld [vmem:[%s1431 + $0x74] sm:$0xf]
        %v1462 = vld [vmem:[%s1431 + $0x78] sm:$0xf]
        %v1463 = vld [vmem:[%s1431 + $0x7c] sm:$0xf]
        %v1496 = vunpack.c.l.b16 %v1432
        %v1497 = vunpack.c.l.b16 %v1433
        %v1498 = vunpack.c.l.b16 %v1434
        %v1499 = vunpack.c.l.b16 %v1435
        %v1500 = vunpack.c.l.b16 %v1436
        %v1501 = vunpack.c.l.b16 %v1437
        %v1502 = vunpack.c.l.b16 %v1438
        %v1503 = vunpack.c.l.b16 %v1439
        %v1504 = vunpack.c.l.b16 %v1440
        %v1505 = vunpack.c.l.b16 %v1441
        %v1506 = vunpack.c.l.b16 %v1442
        %v1507 = vunpack.c.l.b16 %v1443
        %v1508 = vunpack.c.l.b16 %v1444
        %v1509 = vunpack.c.l.b16 %v1445
        %v1510 = vunpack.c.l.b16 %v1446
        %v1511 = vunpack.c.l.b16 %v1447
        %v1512 = vunpack.c.l.b16 %v1448
        %v1513 = vunpack.c.l.b16 %v1449
        %v1514 = vunpack.c.l.b16 %v1450
        %v1515 = vunpack.c.l.b16 %v1451
        %v1516 = vunpack.c.l.b16 %v1452
        %v1517 = vunpack.c.l.b16 %v1453
        %v1518 = vunpack.c.l.b16 %v1454
        %v1519 = vunpack.c.l.b16 %v1455
        %v1520 = vunpack.c.l.b16 %v1456
        %v1521 = vunpack.c.l.b16 %v1457
        %v1522 = vunpack.c.l.b16 %v1458
        %v1523 = vunpack.c.l.b16 %v1459
        %v1524 = vunpack.c.l.b16 %v1460
        %v1525 = vunpack.c.l.b16 %v1461
        %v1526 = vunpack.c.l.b16 %v1462
        %v1527 = vunpack.c.l.b16 %v1463
        %v1528 = vpack.c.b16 %v1497, %v1496
        %v1529 = vpack.c.b16 %v1499, %v1498
        %v1530 = vpack.c.b16 %v1501, %v1500
        %v1531 = vpack.c.b16 %v1503, %v1502
        %v1532 = vpack.c.b16 %v1505, %v1504
        %v1533 = vpack.c.b16 %v1507, %v1506
        %v1534 = vpack.c.b16 %v1509, %v1508
        %v1535 = vpack.c.b16 %v1511, %v1510
        %v1536 = vpack.c.b16 %v1513, %v1512
        %v1537 = vpack.c.b16 %v1515, %v1514
        %v1538 = vpack.c.b16 %v1517, %v1516
        %v1539 = vpack.c.b16 %v1519, %v1518
        %v1540 = vpack.c.b16 %v1521, %v1520
        %v1541 = vpack.c.b16 %v1523, %v1522
        %v1542 = vpack.c.b16 %v1525, %v1524
        %v1543 = vpack.c.b16 %v1527, %v1526
        %v1545 = vsel %vm860, %v1528, 0
        %v1548 = vsel %vm860, %v1529, 0
        %v1551 = vsel %vm860, %v1530, 0
        %v1554 = vsel %vm860, %v1531, 0
        %v1557 = vsel %vm860, %v1532, 0
        %v1560 = vsel %vm860, %v1533, 0
        %v1563 = vsel %vm860, %v1534, 0
        %v1566 = vsel %vm860, %v1535, 0
        %v1569 = vsel %vm860, %v1536, 0
        %v1572 = vsel %vm860, %v1537, 0
        %v1575 = vsel %vm860, %v1538, 0
        %v1578 = vsel %vm860, %v1539, 0
        %v1581 = vsel %vm860, %v1540, 0
        %v1584 = vsel %vm860, %v1541, 0
        %v1587 = vsel %vm860, %v1542, 0
        %v1590 = vsel %vm860, %v1543, 0
        %1592 = vmatprep.subr.bf16.mxu0 0
        %1593 = vmatpush1.bf16.msra.mxu0 0
        %1594 = vmatprep.subr.bf16.mxu0 0
        %1595 = vmatpush1.bf16.msra.mxu0 0
        %1596 = vmatprep.subr.bf16.mxu0 0
        %1597 = vmatpush1.bf16.msra.mxu0 0
        %1598 = vmatprep.subr.bf16.mxu0 0
        %1599 = vmatpush1.bf16.msra.mxu0 0
        %1600 = vmatprep.subr.bf16.mxu0 0
        %1601 = vmatpush1.bf16.msra.mxu0 0
        %1602 = vmatprep.subr.bf16.mxu0 0
        %1603 = vmatpush1.bf16.msra.mxu0 0
        %1604 = vmatprep.subr.bf16.mxu0 0
        %1605 = vmatpush1.bf16.msra.mxu0 %v914
        %1606 = vmatprep.subr.bf16.mxu0 0
        %1607 = vmatpush1.bf16.msra.mxu0 %v857
        %1608 = vmatprep.subr.bf16.mxu0 0
        %1609 = vmatpush2.bf16.msra.mxu0 0
        %1610 = vmatprep.subr.bf16.mxu0 0
        %1611 = vmatpush2.bf16.msra.mxu0 0
        %1612 = vmatprep.subr.bf16.mxu0 0
        %1613 = vmatpush2.bf16.msra.mxu0 0
        %1614 = vmatprep.subr.bf16.mxu0 0
        %1615 = vmatpush2.bf16.msra.mxu0 0
        %1616 = vmatprep.subr.bf16.mxu0 0
        %1617 = vmatpush2.bf16.msra.mxu0 0
        %1618 = vmatprep.subr.bf16.mxu0 0
        %1619 = vmatpush2.bf16.msra.mxu0 0
        %1620 = vmatprep.subr.bf16.mxu0 0
        %1621 = vmatpush2.bf16.msra.mxu0 0
        %1622 = vmatprep.subr.bf16.mxu0 0
        %1623 = vmatpush2.bf16.msra.mxu0 0
        %1624 = vmatprep.mubr.bf16.mxu0 0
        %1625 = vmatmul.mubr.bf16.gmra.mxu0 %v1545
        %v1626 = vpop.f32.mrf.mxu0
        %v1627 = vadd.f32 %v767, %v1626
        %v1628 = vpop.f32.mrf.mxu0
        %v1629 = vpop.f32.mrf.mxu0
        %v1630 = vadd.f32 %v767, %v1629
        %v1631 = vpop.f32.mrf.mxu0
        %1632 = vmatprep.mubr.bf16.mxu0 0
        %1633 = vmatmul.mubr.bf16.gmra.mxu0 %v1548
        %v1634 = vpop.f32.mrf.mxu0
        %v1635 = vadd.f32 %v767, %v1634
        %v1636 = vpop.f32.mrf.mxu0
        %v1637 = vpop.f32.mrf.mxu0
        %v1638 = vadd.f32 %v767, %v1637
        %v1639 = vpop.f32.mrf.mxu0
        %1640 = vmatprep.mubr.bf16.mxu0 0
        %1641 = vmatmul.mubr.bf16.gmra.mxu0 %v1551
        %v1642 = vpop.f32.mrf.mxu0
        %v1643 = vadd.f32 %v767, %v1642
        %v1644 = vpop.f32.mrf.mxu0
        %v1645 = vpop.f32.mrf.mxu0
        %v1646 = vadd.f32 %v767, %v1645
        %v1647 = vpop.f32.mrf.mxu0
        %1648 = vmatprep.mubr.bf16.mxu0 0
        %1649 = vmatmul.mubr.bf16.gmra.mxu0 %v1554
        %v1650 = vpop.f32.mrf.mxu0
        %v1651 = vadd.f32 %v767, %v1650
        %v1652 = vpop.f32.mrf.mxu0
        %v1653 = vpop.f32.mrf.mxu0
        %v1654 = vadd.f32 %v767, %v1653
        %v1655 = vpop.f32.mrf.mxu0
        %1656 = vmatprep.mubr.bf16.mxu0 0
        %1657 = vmatmul.mubr.bf16.gmra.mxu0 %v1557
        %v1658 = vpop.f32.mrf.mxu0
        %v1659 = vadd.f32 %v767, %v1658
        %v1660 = vpop.f32.mrf.mxu0
        %v1661 = vpop.f32.mrf.mxu0
        %v1662 = vadd.f32 %v767, %v1661
        %v1663 = vpop.f32.mrf.mxu0
        %1664 = vmatprep.mubr.bf16.mxu0 0
        %1665 = vmatmul.mubr.bf16.gmra.mxu0 %v1560
        %v1666 = vpop.f32.mrf.mxu0
        %v1667 = vadd.f32 %v767, %v1666
        %v1668 = vpop.f32.mrf.mxu0
        %v1669 = vpop.f32.mrf.mxu0
        %v1670 = vadd.f32 %v767, %v1669
        %v1671 = vpop.f32.mrf.mxu0
        %1672 = vmatprep.mubr.bf16.mxu0 0
        %1673 = vmatmul.mubr.bf16.gmra.mxu0 %v1563
        %v1674 = vpop.f32.mrf.mxu0
        %v1675 = vadd.f32 %v767, %v1674
        %v1676 = vpop.f32.mrf.mxu0
        %v1677 = vpop.f32.mrf.mxu0
        %v1678 = vadd.f32 %v767, %v1677
        %v1679 = vpop.f32.mrf.mxu0
        %1680 = vmatprep.mubr.bf16.mxu0 0
        %1681 = vmatmul.mubr.bf16.gmra.mxu0 %v1566
        %v1682 = vpop.f32.mrf.mxu0
        %v1683 = vadd.f32 %v767, %v1682
        %v1684 = vpop.f32.mrf.mxu0
        %v1685 = vpop.f32.mrf.mxu0
        %v1686 = vadd.f32 %v767, %v1685
        %v1687 = vpop.f32.mrf.mxu0
        %1688 = vmatprep.mubr.bf16.mxu0 0
        %1689 = vmatmul.mubr.bf16.gmra.mxu0 %v1569
        %v1690 = vpop.f32.mrf.mxu0
        %v1691 = vadd.f32 %v767, %v1690
        %v1692 = vpop.f32.mrf.mxu0
        %v1693 = vpop.f32.mrf.mxu0
        %v1694 = vadd.f32 %v767, %v1693
        %v1695 = vpop.f32.mrf.mxu0
        %1696 = vmatprep.mubr.bf16.mxu0 0
        %1697 = vmatmul.mubr.bf16.gmra.mxu0 %v1572
        %v1698 = vpop.f32.mrf.mxu0
        %v1699 = vadd.f32 %v767, %v1698
        %v1700 = vpop.f32.mrf.mxu0
        %v1701 = vpop.f32.mrf.mxu0
        %v1702 = vadd.f32 %v767, %v1701
        %v1703 = vpop.f32.mrf.mxu0
        %1704 = vmatprep.mubr.bf16.mxu0 0
        %1705 = vmatmul.mubr.bf16.gmra.mxu0 %v1575
        %v1706 = vpop.f32.mrf.mxu0
        %v1707 = vadd.f32 %v767, %v1706
        %v1708 = vpop.f32.mrf.mxu0
        %v1709 = vpop.f32.mrf.mxu0
        %v1710 = vadd.f32 %v767, %v1709
        %v1711 = vpop.f32.mrf.mxu0
        %1712 = vmatprep.mubr.bf16.mxu0 0
        %1713 = vmatmul.mubr.bf16.gmra.mxu0 %v1578
        %v1714 = vpop.f32.mrf.mxu0
        %v1715 = vadd.f32 %v767, %v1714
        %v1716 = vpop.f32.mrf.mxu0
        %v1717 = vpop.f32.mrf.mxu0
        %v1718 = vadd.f32 %v767, %v1717
        %v1719 = vpop.f32.mrf.mxu0
        %1720 = vmatprep.mubr.bf16.mxu0 0
        %1721 = vmatmul.mubr.bf16.gmra.mxu0 %v1581
        %v1722 = vpop.f32.mrf.mxu0
        %v1723 = vadd.f32 %v767, %v1722
        %v1724 = vpop.f32.mrf.mxu0
        %v1725 = vpop.f32.mrf.mxu0
        %v1726 = vadd.f32 %v767, %v1725
        %v1727 = vpop.f32.mrf.mxu0
        %1728 = vmatprep.mubr.bf16.mxu0 0
        %1729 = vmatmul.mubr.bf16.gmra.mxu0 %v1584
        %v1730 = vpop.f32.mrf.mxu0
        %v1731 = vadd.f32 %v767, %v1730
        %v1732 = vpop.f32.mrf.mxu0
        %v1733 = vpop.f32.mrf.mxu0
        %v1734 = vadd.f32 %v767, %v1733
        %v1735 = vpop.f32.mrf.mxu0
        %1736 = vmatprep.mubr.bf16.mxu0 0
        %1737 = vmatmul.mubr.bf16.gmra.mxu0 %v1587
        %v1738 = vpop.f32.mrf.mxu0
        %v1739 = vadd.f32 %v767, %v1738
        %v1740 = vpop.f32.mrf.mxu0
        %v1741 = vpop.f32.mrf.mxu0
        %v1742 = vadd.f32 %v767, %v1741
        %v1743 = vpop.f32.mrf.mxu0
        %1744 = vmatprep.mubr.bf16.mxu0 0
        %1745 = vmatmul.mubr.bf16.gmra.mxu0 %v1590
        %v1746 = vpop.f32.mrf.mxu0
        %v1747 = vadd.f32 %v767, %v1746
        %v1748 = vpop.f32.mrf.mxu0
        %v1749 = vpop.f32.mrf.mxu0
        %v1750 = vadd.f32 %v767, %v1749
        %v1751 = vpop.f32.mrf.mxu0
        %1752 = vdwg.mxu0
        %s1753 = scalar_lea.vmem %s697, 384 [#allocation2]
        %v1754 = vld [vmem:[%s1753] sm:$0xf]
        %v1755 = vld [vmem:[%s1753 + $0x4] sm:$0xf]
        %v1756 = vld [vmem:[%s1753 + $0x8] sm:$0xf]
        %v1757 = vld [vmem:[%s1753 + $0xc] sm:$0xf]
        %v1758 = vld [vmem:[%s1753 + $0x10] sm:$0xf]
        %v1759 = vld [vmem:[%s1753 + $0x14] sm:$0xf]
        %v1760 = vld [vmem:[%s1753 + $0x18] sm:$0xf]
        %v1761 = vld [vmem:[%s1753 + $0x1c] sm:$0xf]
        %v1762 = vld [vmem:[%s1753 + $0x20] sm:$0xf]
        %v1763 = vld [vmem:[%s1753 + $0x24] sm:$0xf]
        %v1764 = vld [vmem:[%s1753 + $0x28] sm:$0xf]
        %v1765 = vld [vmem:[%s1753 + $0x2c] sm:$0xf]
        %v1766 = vld [vmem:[%s1753 + $0x30] sm:$0xf]
        %v1767 = vld [vmem:[%s1753 + $0x34] sm:$0xf]
        %v1768 = vld [vmem:[%s1753 + $0x38] sm:$0xf]
        %v1769 = vld [vmem:[%s1753 + $0x3c] sm:$0xf]
        %v1770 = vld [vmem:[%s1753 + $0x40] sm:$0xf]
        %v1771 = vld [vmem:[%s1753 + $0x44] sm:$0xf]
        %v1772 = vld [vmem:[%s1753 + $0x48] sm:$0xf]
        %v1773 = vld [vmem:[%s1753 + $0x4c] sm:$0xf]
        %v1774 = vld [vmem:[%s1753 + $0x50] sm:$0xf]
        %v1775 = vld [vmem:[%s1753 + $0x54] sm:$0xf]
        %v1776 = vld [vmem:[%s1753 + $0x58] sm:$0xf]
        %v1777 = vld [vmem:[%s1753 + $0x5c] sm:$0xf]
        %v1778 = vld [vmem:[%s1753 + $0x60] sm:$0xf]
        %v1779 = vld [vmem:[%s1753 + $0x64] sm:$0xf]
        %v1780 = vld [vmem:[%s1753 + $0x68] sm:$0xf]
        %v1781 = vld [vmem:[%s1753 + $0x6c] sm:$0xf]
        %v1782 = vld [vmem:[%s1753 + $0x70] sm:$0xf]
        %v1783 = vld [vmem:[%s1753 + $0x74] sm:$0xf]
        %v1784 = vld [vmem:[%s1753 + $0x78] sm:$0xf]
        %v1785 = vld [vmem:[%s1753 + $0x7c] sm:$0xf]
        %v1818 = vunpack.c.l.b16 %v1754
        %v1819 = vunpack.c.l.b16 %v1755
        %v1820 = vunpack.c.l.b16 %v1756
        %v1821 = vunpack.c.l.b16 %v1757
        %v1822 = vunpack.c.l.b16 %v1758
        %v1823 = vunpack.c.l.b16 %v1759
        %v1824 = vunpack.c.l.b16 %v1760
        %v1825 = vunpack.c.l.b16 %v1761
        %v1826 = vunpack.c.l.b16 %v1762
        %v1827 = vunpack.c.l.b16 %v1763
        %v1828 = vunpack.c.l.b16 %v1764
        %v1829 = vunpack.c.l.b16 %v1765
        %v1830 = vunpack.c.l.b16 %v1766
        %v1831 = vunpack.c.l.b16 %v1767
        %v1832 = vunpack.c.l.b16 %v1768
        %v1833 = vunpack.c.l.b16 %v1769
        %v1834 = vunpack.c.l.b16 %v1770
        %v1835 = vunpack.c.l.b16 %v1771
        %v1836 = vunpack.c.l.b16 %v1772
        %v1837 = vunpack.c.l.b16 %v1773
        %v1838 = vunpack.c.l.b16 %v1774
        %v1839 = vunpack.c.l.b16 %v1775
        %v1840 = vunpack.c.l.b16 %v1776
        %v1841 = vunpack.c.l.b16 %v1777
        %v1842 = vunpack.c.l.b16 %v1778
        %v1843 = vunpack.c.l.b16 %v1779
        %v1844 = vunpack.c.l.b16 %v1780
        %v1845 = vunpack.c.l.b16 %v1781
        %v1846 = vunpack.c.l.b16 %v1782
        %v1847 = vunpack.c.l.b16 %v1783
        %v1848 = vunpack.c.l.b16 %v1784
        %v1849 = vunpack.c.l.b16 %v1785
        %v1850 = vpack.c.b16 %v1819, %v1818
        %v1851 = vpack.c.b16 %v1821, %v1820
        %v1852 = vpack.c.b16 %v1823, %v1822
        %v1853 = vpack.c.b16 %v1825, %v1824
        %v1854 = vpack.c.b16 %v1827, %v1826
        %v1855 = vpack.c.b16 %v1829, %v1828
        %v1856 = vpack.c.b16 %v1831, %v1830
        %v1857 = vpack.c.b16 %v1833, %v1832
        %v1858 = vpack.c.b16 %v1835, %v1834
        %v1859 = vpack.c.b16 %v1837, %v1836
        %v1860 = vpack.c.b16 %v1839, %v1838
        %v1861 = vpack.c.b16 %v1841, %v1840
        %v1862 = vpack.c.b16 %v1843, %v1842
        %v1863 = vpack.c.b16 %v1845, %v1844
        %v1864 = vpack.c.b16 %v1847, %v1846
        %v1865 = vpack.c.b16 %v1849, %v1848
        %v1867 = vsel %vm860, %v1850, 0
        %v1870 = vsel %vm860, %v1851, 0
        %v1873 = vsel %vm860, %v1852, 0
        %v1876 = vsel %vm860, %v1853, 0
        %v1879 = vsel %vm860, %v1854, 0
        %v1882 = vsel %vm860, %v1855, 0
        %v1885 = vsel %vm860, %v1856, 0
        %v1888 = vsel %vm860, %v1857, 0
        %v1891 = vsel %vm860, %v1858, 0
        %v1894 = vsel %vm860, %v1859, 0
        %v1897 = vsel %vm860, %v1860, 0
        %v1900 = vsel %vm860, %v1861, 0
        %v1903 = vsel %vm860, %v1862, 0
        %v1906 = vsel %vm860, %v1863, 0
        %v1909 = vsel %vm860, %v1864, 0
        %v1912 = vsel %vm860, %v1865, 0
        %1914 = vmatprep.subr.bf16.mxu0 0
        %1915 = vmatpush1.bf16.msra.mxu0 0
        %1916 = vmatprep.subr.bf16.mxu0 0
        %1917 = vmatpush1.bf16.msra.mxu0 0
        %1918 = vmatprep.subr.bf16.mxu0 0
        %1919 = vmatpush1.bf16.msra.mxu0 0
        %1920 = vmatprep.subr.bf16.mxu0 0
        %1921 = vmatpush1.bf16.msra.mxu0 0
        %1922 = vmatprep.subr.bf16.mxu0 0
        %1923 = vmatpush1.bf16.msra.mxu0 0
        %1924 = vmatprep.subr.bf16.mxu0 0
        %1925 = vmatpush1.bf16.msra.mxu0 0
        %1926 = vmatprep.subr.bf16.mxu0 0
        %1927 = vmatpush1.bf16.msra.mxu0 %v914
        %1928 = vmatprep.subr.bf16.mxu0 0
        %1929 = vmatpush1.bf16.msra.mxu0 %v857
        %1930 = vmatprep.subr.bf16.mxu0 0
        %1931 = vmatpush2.bf16.msra.mxu0 0
        %1932 = vmatprep.subr.bf16.mxu0 0
        %1933 = vmatpush2.bf16.msra.mxu0 0
        %1934 = vmatprep.subr.bf16.mxu0 0
        %1935 = vmatpush2.bf16.msra.mxu0 0
        %1936 = vmatprep.subr.bf16.mxu0 0
        %1937 = vmatpush2.bf16.msra.mxu0 0
        %1938 = vmatprep.subr.bf16.mxu0 0
        %1939 = vmatpush2.bf16.msra.mxu0 0
        %1940 = vmatprep.subr.bf16.mxu0 0
        %1941 = vmatpush2.bf16.msra.mxu0 0
        %1942 = vmatprep.subr.bf16.mxu0 0
        %1943 = vmatpush2.bf16.msra.mxu0 0
        %1944 = vmatprep.subr.bf16.mxu0 0
        %1945 = vmatpush2.bf16.msra.mxu0 0
        %1946 = vmatprep.mubr.bf16.mxu0 0
        %1947 = vmatmul.mubr.bf16.gmra.mxu0 %v1867
        %v1948 = vpop.f32.mrf.mxu0
        %v1949 = vadd.f32 %v767, %v1948
        %v1950 = vpop.f32.mrf.mxu0
        %v1951 = vpop.f32.mrf.mxu0
        %v1952 = vadd.f32 %v767, %v1951
        %v1953 = vpop.f32.mrf.mxu0
        %1954 = vmatprep.mubr.bf16.mxu0 0
        %1955 = vmatmul.mubr.bf16.gmra.mxu0 %v1870
        %v1956 = vpop.f32.mrf.mxu0
        %v1957 = vadd.f32 %v767, %v1956
        %v1958 = vpop.f32.mrf.mxu0
        %v1959 = vpop.f32.mrf.mxu0
        %v1960 = vadd.f32 %v767, %v1959
        %v1961 = vpop.f32.mrf.mxu0
        %1962 = vmatprep.mubr.bf16.mxu0 0
        %1963 = vmatmul.mubr.bf16.gmra.mxu0 %v1873
        %v1964 = vpop.f32.mrf.mxu0
        %v1965 = vadd.f32 %v767, %v1964
        %v1966 = vpop.f32.mrf.mxu0
        %v1967 = vpop.f32.mrf.mxu0
        %v1968 = vadd.f32 %v767, %v1967
        %v1969 = vpop.f32.mrf.mxu0
        %1970 = vmatprep.mubr.bf16.mxu0 0
        %1971 = vmatmul.mubr.bf16.gmra.mxu0 %v1876
        %v1972 = vpop.f32.mrf.mxu0
        %v1973 = vadd.f32 %v767, %v1972
        %v1974 = vpop.f32.mrf.mxu0
        %v1975 = vpop.f32.mrf.mxu0
        %v1976 = vadd.f32 %v767, %v1975
        %v1977 = vpop.f32.mrf.mxu0
        %1978 = vmatprep.mubr.bf16.mxu0 0
        %1979 = vmatmul.mubr.bf16.gmra.mxu0 %v1879
        %v1980 = vpop.f32.mrf.mxu0
        %v1981 = vadd.f32 %v767, %v1980
        %v1982 = vpop.f32.mrf.mxu0
        %v1983 = vpop.f32.mrf.mxu0
        %v1984 = vadd.f32 %v767, %v1983
        %v1985 = vpop.f32.mrf.mxu0
        %1986 = vmatprep.mubr.bf16.mxu0 0
        %1987 = vmatmul.mubr.bf16.gmra.mxu0 %v1882
        %v1988 = vpop.f32.mrf.mxu0
        %v1989 = vadd.f32 %v767, %v1988
        %v1990 = vpop.f32.mrf.mxu0
        %v1991 = vpop.f32.mrf.mxu0
        %v1992 = vadd.f32 %v767, %v1991
        %v1993 = vpop.f32.mrf.mxu0
        %1994 = vmatprep.mubr.bf16.mxu0 0
        %1995 = vmatmul.mubr.bf16.gmra.mxu0 %v1885
        %v1996 = vpop.f32.mrf.mxu0
        %v1997 = vadd.f32 %v767, %v1996
        %v1998 = vpop.f32.mrf.mxu0
        %v1999 = vpop.f32.mrf.mxu0
        %v2000 = vadd.f32 %v767, %v1999
        %v2001 = vpop.f32.mrf.mxu0
        %2002 = vmatprep.mubr.bf16.mxu0 0
        %2003 = vmatmul.mubr.bf16.gmra.mxu0 %v1888
        %v2004 = vpop.f32.mrf.mxu0
        %v2005 = vadd.f32 %v767, %v2004
        %v2006 = vpop.f32.mrf.mxu0
        %v2007 = vpop.f32.mrf.mxu0
        %v2008 = vadd.f32 %v767, %v2007
        %v2009 = vpop.f32.mrf.mxu0
        %2010 = vmatprep.mubr.bf16.mxu0 0
        %2011 = vmatmul.mubr.bf16.gmra.mxu0 %v1891
        %v2012 = vpop.f32.mrf.mxu0
        %v2013 = vadd.f32 %v767, %v2012
        %v2014 = vpop.f32.mrf.mxu0
        %v2015 = vpop.f32.mrf.mxu0
        %v2016 = vadd.f32 %v767, %v2015
        %v2017 = vpop.f32.mrf.mxu0
        %2018 = vmatprep.mubr.bf16.mxu0 0
        %2019 = vmatmul.mubr.bf16.gmra.mxu0 %v1894
        %v2020 = vpop.f32.mrf.mxu0
        %v2021 = vadd.f32 %v767, %v2020
        %v2022 = vpop.f32.mrf.mxu0
        %v2023 = vpop.f32.mrf.mxu0
        %v2024 = vadd.f32 %v767, %v2023
        %v2025 = vpop.f32.mrf.mxu0
        %2026 = vmatprep.mubr.bf16.mxu0 0
        %2027 = vmatmul.mubr.bf16.gmra.mxu0 %v1897
        %v2028 = vpop.f32.mrf.mxu0
        %v2029 = vadd.f32 %v767, %v2028
        %v2030 = vpop.f32.mrf.mxu0
        %v2031 = vpop.f32.mrf.mxu0
        %v2032 = vadd.f32 %v767, %v2031
        %v2033 = vpop.f32.mrf.mxu0
        %2034 = vmatprep.mubr.bf16.mxu0 0
        %2035 = vmatmul.mubr.bf16.gmra.mxu0 %v1900
        %v2036 = vpop.f32.mrf.mxu0
        %v2037 = vadd.f32 %v767, %v2036
        %v2038 = vpop.f32.mrf.mxu0
        %v2039 = vpop.f32.mrf.mxu0
        %v2040 = vadd.f32 %v767, %v2039
        %v2041 = vpop.f32.mrf.mxu0
        %2042 = vmatprep.mubr.bf16.mxu0 0
        %2043 = vmatmul.mubr.bf16.gmra.mxu0 %v1903
        %v2044 = vpop.f32.mrf.mxu0
        %v2045 = vadd.f32 %v767, %v2044
        %v2046 = vpop.f32.mrf.mxu0
        %v2047 = vpop.f32.mrf.mxu0
        %v2048 = vadd.f32 %v767, %v2047
        %v2049 = vpop.f32.mrf.mxu0
        %2050 = vmatprep.mubr.bf16.mxu0 0
        %2051 = vmatmul.mubr.bf16.gmra.mxu0 %v1906
        %v2052 = vpop.f32.mrf.mxu0
        %v2053 = vadd.f32 %v767, %v2052
        %v2054 = vpop.f32.mrf.mxu0
        %v2055 = vpop.f32.mrf.mxu0
        %v2056 = vadd.f32 %v767, %v2055
        %v2057 = vpop.f32.mrf.mxu0
        %2058 = vmatprep.mubr.bf16.mxu0 0
        %2059 = vmatmul.mubr.bf16.gmra.mxu0 %v1909
        %v2060 = vpop.f32.mrf.mxu0
        %v2061 = vadd.f32 %v767, %v2060
        %v2062 = vpop.f32.mrf.mxu0
        %v2063 = vpop.f32.mrf.mxu0
        %v2064 = vadd.f32 %v767, %v2063
        %v2065 = vpop.f32.mrf.mxu0
        %2066 = vmatprep.mubr.bf16.mxu0 0
        %2067 = vmatmul.mubr.bf16.gmra.mxu0 %v1912
        %v2068 = vpop.f32.mrf.mxu0
        %v2069 = vadd.f32 %v767, %v2068
        %v2070 = vpop.f32.mrf.mxu0
        %v2071 = vpop.f32.mrf.mxu0
        %v2072 = vadd.f32 %v767, %v2071
        %v2073 = vpop.f32.mrf.mxu0
        %2074 = vdwg.mxu0
        %v2075 = vmax.f32 %v1627, %v1949
        %v2076 = vmax.f32 %v1630, %v1952
        %v2077 = vmax.f32 %v1635, %v1957
        %v2078 = vmax.f32 %v1638, %v1960
        %v2079 = vmax.f32 %v1643, %v1965
        %v2080 = vmax.f32 %v1646, %v1968
        %v2081 = vmax.f32 %v1651, %v1973
        %v2082 = vmax.f32 %v1654, %v1976
        %v2083 = vmax.f32 %v1659, %v1981
        %v2084 = vmax.f32 %v1662, %v1984
        %v2085 = vmax.f32 %v1667, %v1989
        %v2086 = vmax.f32 %v1670, %v1992
        %v2087 = vmax.f32 %v1675, %v1997
        %v2088 = vmax.f32 %v1678, %v2000
        %v2089 = vmax.f32 %v1683, %v2005
        %v2090 = vmax.f32 %v1686, %v2008
        %v2091 = vmax.f32 %v1691, %v2013
        %v2092 = vmax.f32 %v1694, %v2016
        %v2093 = vmax.f32 %v1699, %v2021
        %v2094 = vmax.f32 %v1702, %v2024
        %v2095 = vmax.f32 %v1707, %v2029
        %v2096 = vmax.f32 %v1710, %v2032
        %v2097 = vmax.f32 %v1715, %v2037
        %v2098 = vmax.f32 %v1718, %v2040
        %v2099 = vmax.f32 %v1723, %v2045
        %v2100 = vmax.f32 %v1726, %v2048
        %v2101 = vmax.f32 %v1731, %v2053
        %v2102 = vmax.f32 %v1734, %v2056
        %v2103 = vmax.f32 %v1739, %v2061
        %v2104 = vmax.f32 %v1742, %v2064
        %v2105 = vmax.f32 %v1747, %v2069
        %v2106 = vmax.f32 %v1750, %v2072
        %v2107 = vmax.f32 %v1399, %v2075
        %v2108 = vmax.f32 %v1400, %v2076
        %v2109 = vmax.f32 %v1401, %v2077
        %v2110 = vmax.f32 %v1402, %v2078
        %v2111 = vmax.f32 %v1403, %v2079
        %v2112 = vmax.f32 %v1404, %v2080
        %v2113 = vmax.f32 %v1405, %v2081
        %v2114 = vmax.f32 %v1406, %v2082
        %v2115 = vmax.f32 %v1407, %v2083
        %v2116 = vmax.f32 %v1408, %v2084
        %v2117 = vmax.f32 %v1409, %v2085
        %v2118 = vmax.f32 %v1410, %v2086
        %v2119 = vmax.f32 %v1411, %v2087
        %v2120 = vmax.f32 %v1412, %v2088
        %v2121 = vmax.f32 %v1413, %v2089
        %v2122 = vmax.f32 %v1414, %v2090
        %v2123 = vmax.f32 %v1415, %v2091
        %v2124 = vmax.f32 %v1416, %v2092
        %v2125 = vmax.f32 %v1417, %v2093
        %v2126 = vmax.f32 %v1418, %v2094
        %v2127 = vmax.f32 %v1419, %v2095
        %v2128 = vmax.f32 %v1420, %v2096
        %v2129 = vmax.f32 %v1421, %v2097
        %v2130 = vmax.f32 %v1422, %v2098
        %v2131 = vmax.f32 %v1423, %v2099
        %v2132 = vmax.f32 %v1424, %v2100
        %v2133 = vmax.f32 %v1425, %v2101
        %v2134 = vmax.f32 %v1426, %v2102
        %v2135 = vmax.f32 %v1427, %v2103
        %v2136 = vmax.f32 %v1428, %v2104
        %v2137 = vmax.f32 %v1429, %v2105
        %v2138 = vmax.f32 %v1430, %v2106
        %v2139 = vmax.f32 %v2107, 0.0
        %v2140 = vmax.f32 %v2108, 0.0
        %v2141 = vmax.f32 %v2109, 0.0
        %v2142 = vmax.f32 %v2110, 0.0
        %v2143 = vmax.f32 %v2111, 0.0
        %v2144 = vmax.f32 %v2112, 0.0
        %v2145 = vmax.f32 %v2113, 0.0
        %v2146 = vmax.f32 %v2114, 0.0
        %v2147 = vmax.f32 %v2115, 0.0
        %v2148 = vmax.f32 %v2116, 0.0
        %v2149 = vmax.f32 %v2117, 0.0
        %v2150 = vmax.f32 %v2118, 0.0
        %v2151 = vmax.f32 %v2119, 0.0
        %v2152 = vmax.f32 %v2120, 0.0
        %v2153 = vmax.f32 %v2121, 0.0
        %v2154 = vmax.f32 %v2122, 0.0
        %v2155 = vmax.f32 %v2123, 0.0
        %v2156 = vmax.f32 %v2124, 0.0
        %v2157 = vmax.f32 %v2125, 0.0
        %v2158 = vmax.f32 %v2126, 0.0
        %v2159 = vmax.f32 %v2127, 0.0
        %v2160 = vmax.f32 %v2128, 0.0
        %v2161 = vmax.f32 %v2129, 0.0
        %v2162 = vmax.f32 %v2130, 0.0
        %v2163 = vmax.f32 %v2131, 0.0
        %v2164 = vmax.f32 %v2132, 0.0
        %v2165 = vmax.f32 %v2133, 0.0
        %v2166 = vmax.f32 %v2134, 0.0
        %v2167 = vmax.f32 %v2135, 0.0
        %v2168 = vmax.f32 %v2136, 0.0
        %v2169 = vmax.f32 %v2137, 0.0
        %v2170 = vmax.f32 %v2138, 0.0
        %2171 = vst [vmem:[%s723] sm:$0xff] %v2139
        %2172 = vst [vmem:[%s723 + $0x8] sm:$0xff] %v2140
        %2173 = vst [vmem:[%s723 + $0x10] sm:$0xff] %v2141
        %2174 = vst [vmem:[%s723 + $0x18] sm:$0xff] %v2142
        %2175 = vst [vmem:[%s723 + $0x20] sm:$0xff] %v2143
        %2176 = vst [vmem:[%s723 + $0x28] sm:$0xff] %v2144
        %2177 = vst [vmem:[%s723 + $0x30] sm:$0xff] %v2145
        %2178 = vst [vmem:[%s723 + $0x38] sm:$0xff] %v2146
        %2179 = vst [vmem:[%s723 + $0x40] sm:$0xff] %v2147
        %2180 = vst [vmem:[%s723 + $0x48] sm:$0xff] %v2148
        %2181 = vst [vmem:[%s723 + $0x50] sm:$0xff] %v2149
        %2182 = vst [vmem:[%s723 + $0x58] sm:$0xff] %v2150
        %2183 = vst [vmem:[%s723 + $0x60] sm:$0xff] %v2151
        %2184 = vst [vmem:[%s723 + $0x68] sm:$0xff] %v2152
        %2185 = vst [vmem:[%s723 + $0x70] sm:$0xff] %v2153
        %2186 = vst [vmem:[%s723 + $0x78] sm:$0xff] %v2154
        %2187 = vst [vmem:[%s723 + $0x80] sm:$0xff] %v2155
        %2188 = vst [vmem:[%s723 + $0x88] sm:$0xff] %v2156
        %2189 = vst [vmem:[%s723 + $0x90] sm:$0xff] %v2157
        %2190 = vst [vmem:[%s723 + $0x98] sm:$0xff] %v2158
        %2191 = vst [vmem:[%s723 + $0xa0] sm:$0xff] %v2159
        %2192 = vst [vmem:[%s723 + $0xa8] sm:$0xff] %v2160
        %2193 = vst [vmem:[%s723 + $0xb0] sm:$0xff] %v2161
        %2194 = vst [vmem:[%s723 + $0xb8] sm:$0xff] %v2162
        %2195 = vst [vmem:[%s723 + $0xc0] sm:$0xff] %v2163
        %2196 = vst [vmem:[%s723 + $0xc8] sm:$0xff] %v2164
        %2197 = vst [vmem:[%s723 + $0xd0] sm:$0xff] %v2165
        %2198 = vst [vmem:[%s723 + $0xd8] sm:$0xff] %v2166
        %2199 = vst [vmem:[%s723 + $0xe0] sm:$0xff] %v2167
        %2200 = vst [vmem:[%s723 + $0xe8] sm:$0xff] %v2168
        %2201 = vst [vmem:[%s723 + $0xf0] sm:$0xff] %v2169
        %2202 = vst [vmem:[%s723 + $0xf8] sm:$0xff] %v2170
        %s2203 = smul.u32 32, %s14
        %p2204 = scmp.lt.s32.totalorder %s2203, 63
        %s2205 = scalar_select %p2204, %s2203, 63
        %s2206 = smul.addr %s2205, 8
        %s2207 = scalar_lea.vmem %s3, %s2206
        // Predicated region
        $region74: #{lenet_dropout_forward.3} parent=68 // pred_check
          %p2208 = pneg %p100
        $region75: #{lenet_dropout_forward.3} parent=68 // pred_check_branch
          %2210 = sbr.rel (%p2208) target = $region77
        $region76: #{lenet_dropout_forward.3} parent=68 // pred_region
          %s2211 = smul.u32 32, %s14
        $region77: #{lenet_dropout_forward.3} parent=68 // pred_fallthru
          _
      $region69: #{lenet_dropout_forward.3} parent=5 // pred_fallthru
        _
      %p2212 = scmp.le.s32.totalorder 2, %s9
      // Predicated region
      $region78: #{lenet_dropout_forward.3} parent=5 // pred_check
        %p2213 = pneg %p2212
      $region79: #{lenet_dropout_forward.3} parent=5 // pred_check_branch
        %2215 = sbr.rel (%p2213) target = $region81
      $region80: #{lenet_dropout_forward.3} parent=5 // pred_region
        %s2216 = ssub.s32 %s9, 2
        // Predicated region
        $region82: #{lenet_dropout_forward.3} parent=80 // pred_check
          %p2217 = pneg %p106
        $region83: #{lenet_dropout_forward.3} parent=80 // pred_check_branch
          %2219 = sbr.rel (%p2217) target = $region85
        $region84: #{lenet_dropout_forward.3} parent=80 // pred_region
          %s2220 = smul.u32 32, %s15
          %p2221 = scmp.lt.s32.totalorder %s2220, 63
          %s2222 = scalar_select %p2221, %s2220, 63
          %s2223 = smul.addr %s2222, 8
          %s2224 = scalar_lea.vmem %s3, %s2223
        $region85: #{lenet_dropout_forward.3} parent=80 // pred_fallthru
          _
      $region81: #{lenet_dropout_forward.3} parent=5 // pred_fallthru
        _
    $region6: #{lenet_dropout_forward.3} parent=1 // loop_footer
      %s13 = sadd.s32 1, %s9
    $region7: #{lenet_dropout_forward.3} parent=1 // loop_footer_branch
      %8 = sbr.rel target = $region3
    $region8: #{lenet_dropout_forward.3} parent=1 // loop_exit
      _

// kernel: lenet_dropout_forward.4
$region0: #{lenet_dropout_forward.4}
  #allocation0 [shape = 'u32[]', space=smem, size = 0x4, offset = 0x4, fixed_abs, tag = 'smem constant byte address 0x4 - core index']
  #allocation1 [shape = 'u32[144,128]{1,0:T(1,128)}', space=vmem, size = 0x12000, scoped, tag = 'internal scratch']
  %s0 = inlined_call_operand.vmem [shape: bf16[4,32,150], index: 0, kind: input, shape index: {}]
  %s1 = inlined_call_operand.vmem [shape: bf16[150,128], index: 1, kind: input, shape index: {}]
  %s2 = inlined_call_operand.vmem [shape: f32[1,128], index: 2, kind: input, shape index: {}]
  %s3 = inlined_call_operand.vmem [shape: f32[32,128], index: 3, kind: output, shape index: {}]
  %s4 = sld [smem:[#allocation0]]
  $region22: #{lenet_dropout_forward.4} parent=0
    _
  %s6 = ssub.s32 1, %s4
  %s7 = scalar_select 0, %s6, %s4
  // Predicated region
  $region2: #{lenet_dropout_forward.4} parent=0 // pred_check
    _
  $region3: #{lenet_dropout_forward.4} parent=0 // pred_check_branch
    %9 = sbr.rel (0) target = $region5
  $region4: #{lenet_dropout_forward.4} parent=0 // pred_region
    _
  $region5: #{lenet_dropout_forward.4} parent=0 // pred_fallthru
    _
  // Predicated region
  $region6: #{lenet_dropout_forward.4} parent=0 // pred_check
    _
  $region7: #{lenet_dropout_forward.4} parent=0 // pred_check_branch
    %11 = sbr.rel (0) target = $region9
  $region8: #{lenet_dropout_forward.4} parent=0 // pred_region
    _
  $region9: #{lenet_dropout_forward.4} parent=0 // pred_fallthru
    _
  // Predicated region
  $region10: #{lenet_dropout_forward.4} parent=0 // pred_check
    _
  $region11: #{lenet_dropout_forward.4} parent=0 // pred_check_branch
    %13 = sbr.rel (0) target = $region13
  $region12: #{lenet_dropout_forward.4} parent=0 // pred_region
    _
  $region13: #{lenet_dropout_forward.4} parent=0 // pred_fallthru
    _
  %v15 = vld [vmem:[%s1] sm:$0xf]
  %v16 = vld [vmem:[%s1 + $0x4] sm:$0xf]
  %v17 = vld [vmem:[%s1 + $0x8] sm:$0xf]
  %v18 = vld [vmem:[%s1 + $0xc] sm:$0xf]
  %v19 = vld [vmem:[%s1 + $0x10] sm:$0xf]
  %v20 = vld [vmem:[%s1 + $0x14] sm:$0xf]
  %v21 = vld [vmem:[%s1 + $0x18] sm:$0xf]
  %v22 = vld [vmem:[%s1 + $0x1c] sm:$0xf]
  %v23 = vld [vmem:[%s1 + $0x20] sm:$0xf]
  %v24 = vld [vmem:[%s1 + $0x24] sm:$0xf]
  %v25 = vld [vmem:[%s1 + $0x28] sm:$0xf]
  %v26 = vld [vmem:[%s1 + $0x2c] sm:$0xf]
  %v27 = vld [vmem:[%s1 + $0x30] sm:$0xf]
  %v28 = vld [vmem:[%s1 + $0x34] sm:$0xf]
  %v29 = vld [vmem:[%s1 + $0x38] sm:$0xf]
  %v30 = vld [vmem:[%s1 + $0x3c] sm:$0xf]
  %v31 = vld [vmem:[%s1 + $0x40] sm:$0xf]
  %v32 = vld [vmem:[%s1 + $0x44] sm:$0xf]
  %v33 = vld [vmem:[%s1 + $0x48] sm:$0x7]
  %v34 = vld [vmem:[%s2] sm:$0x1]
  %v35 = vld [vmem:[%s0] sm:$0xff]
  %v36 = vld [vmem:[%s0 + $0x8] sm:$0xff]
  %v37 = vld [vmem:[%s0 + $0x10] sm:$0xff]
  %v38 = vld [vmem:[%s0 + $0x18] sm:$0xff]
  %v40 = vlaneseq
  %v41 = vshrl.u32 %v40, 7
  %v42 = vsub.s32 0, %v41
  %v43 = vrot.slane %v34, %v42
  %v49 = vunpack.c.l.b16 %v35
  %v50 = vunpack.c.h.b16 %v35
  %v51 = vunpack.c.l.b16 %v36
  %v52 = vunpack.c.h.b16 %v36
  %v53 = vunpack.c.l.b16 %v37
  %v54 = vunpack.c.h.b16 %v37
  %v55 = vunpack.c.l.b16 %v38
  %v56 = vunpack.c.h.b16 %v38
  %v57 = vpack.c.b16 %v51, %v49
  %v58 = vpack.c.b16 %v52, %v50
  %v59 = vpack.c.b16 %v55, %v53
  %v60 = vpack.c.b16 %v56, %v54
  %v82 = vunpack.c.l.b16 %v15
  %v83 = vunpack.c.l.b16 %v16
  %v84 = vunpack.c.l.b16 %v17
  %v85 = vunpack.c.l.b16 %v18
  %v86 = vunpack.c.l.b16 %v19
  %v87 = vunpack.c.l.b16 %v20
  %v88 = vunpack.c.l.b16 %v21
  %v89 = vunpack.c.l.b16 %v22
  %v90 = vunpack.c.l.b16 %v23
  %v91 = vunpack.c.l.b16 %v24
  %v92 = vunpack.c.l.b16 %v25
  %v93 = vunpack.c.l.b16 %v26
  %v94 = vunpack.c.l.b16 %v27
  %v95 = vunpack.c.l.b16 %v28
  %v96 = vunpack.c.l.b16 %v29
  %v97 = vunpack.c.l.b16 %v30
  %v98 = vunpack.c.l.b16 %v31
  %v99 = vunpack.c.l.b16 %v32
  %v100 = vunpack.c.l.b16 %v33
  %v101 = vpack.c.b16 %v83, %v82
  %v102 = vpack.c.b16 %v85, %v84
  %v103 = vpack.c.b16 %v87, %v86
  %v104 = vpack.c.b16 %v89, %v88
  %v105 = vpack.c.b16 %v91, %v90
  %v106 = vpack.c.b16 %v93, %v92
  %v107 = vpack.c.b16 %v95, %v94
  %v108 = vpack.c.b16 %v97, %v96
  %v109 = vpack.c.b16 %v99, %v98
  %v110 = vpack.c.b16 %v100, %v100
  %vm120 = vcmask 179200
  %v122 = vsel %vm120, %v58, 0
  %v125 = vsel %vm120, %v60, 0
  %vm127 = vcmask 1042432
  %v129 = vsel %vm127, %v110, 0
  %131 = vmatprep.subr.bf16.mxu0 0
  %132 = vmatpush1.bf16.msra.mxu0 %v108
  %133 = vmatprep.subr.bf16.mxu0 0
  %134 = vmatpush1.bf16.msra.mxu0 %v107
  %135 = vmatprep.subr.bf16.mxu0 0
  %136 = vmatpush1.bf16.msra.mxu0 %v106
  %137 = vmatprep.subr.bf16.mxu0 0
  %138 = vmatpush1.bf16.msra.mxu0 %v105
  %139 = vmatprep.subr.bf16.mxu0 0
  %140 = vmatpush1.bf16.msra.mxu0 %v104
  %141 = vmatprep.subr.bf16.mxu0 0
  %142 = vmatpush1.bf16.msra.mxu0 %v103
  %143 = vmatprep.subr.bf16.mxu0 0
  %144 = vmatpush1.bf16.msra.mxu0 %v102
  %145 = vmatprep.subr.bf16.mxu0 0
  %146 = vmatpush1.bf16.msra.mxu0 %v101
  %147 = vmatprep.subr.bf16.mxu0 0
  %148 = vmatpush2.bf16.msra.mxu0 0
  %149 = vmatprep.subr.bf16.mxu0 0
  %150 = vmatpush2.bf16.msra.mxu0 0
  %151 = vmatprep.subr.bf16.mxu0 0
  %152 = vmatpush2.bf16.msra.mxu0 0
  %153 = vmatprep.subr.bf16.mxu0 0
  %154 = vmatpush2.bf16.msra.mxu0 0
  %155 = vmatprep.subr.bf16.mxu0 0
  %156 = vmatpush2.bf16.msra.mxu0 0
  %157 = vmatprep.subr.bf16.mxu0 0
  %158 = vmatpush2.bf16.msra.mxu0 0
  %159 = vmatprep.subr.bf16.mxu0 0
  %160 = vmatpush2.bf16.msra.mxu0 %v129
  %161 = vmatprep.subr.bf16.mxu0 0
  %162 = vmatpush2.bf16.msra.mxu0 %v109
  %163 = vmatprep.mubr.bf16.mxu0 %v122
  %164 = vmatmul.mubr.bf16.gmra.mxu0 %v57
  %v165 = vpop.f32.mrf.mxu0
  %v166 = vadd.f32 %v43, %v165
  %v167 = vpop.f32.mrf.mxu0
  %v168 = vpop.f32.mrf.mxu0
  %v169 = vadd.f32 %v43, %v168
  %v170 = vpop.f32.mrf.mxu0
  %171 = vmatprep.mubr.bf16.mxu0 %v125
  %172 = vmatmul.mubr.bf16.gmra.mxu0 %v59
  %v173 = vpop.f32.mrf.mxu0
  %v174 = vadd.f32 %v43, %v173
  %v175 = vpop.f32.mrf.mxu0
  %v176 = vpop.f32.mrf.mxu0
  %v177 = vadd.f32 %v43, %v176
  %v178 = vpop.f32.mrf.mxu0
  %179 = vdwg.mxu0
  %s180 = scalar_lea.vmem %s0, 32
  %v181 = vld [vmem:[%s180] sm:$0xff]
  %v182 = vld [vmem:[%s180 + $0x8] sm:$0xff]
  %v183 = vld [vmem:[%s180 + $0x10] sm:$0xff]
  %v184 = vld [vmem:[%s180 + $0x18] sm:$0xff]
  %v189 = vunpack.c.l.b16 %v181
  %v190 = vunpack.c.h.b16 %v181
  %v191 = vunpack.c.l.b16 %v182
  %v192 = vunpack.c.h.b16 %v182
  %v193 = vunpack.c.l.b16 %v183
  %v194 = vunpack.c.h.b16 %v183
  %v195 = vunpack.c.l.b16 %v184
  %v196 = vunpack.c.h.b16 %v184
  %v197 = vpack.c.b16 %v191, %v189
  %v198 = vpack.c.b16 %v192, %v190
  %v199 = vpack.c.b16 %v195, %v193
  %v200 = vpack.c.b16 %v196, %v194
  %v204 = vsel %vm120, %v198, 0
  %v207 = vsel %vm120, %v200, 0
  %209 = vmatprep.subr.bf16.mxu0 0
  %210 = vmatpush1.bf16.msra.mxu0 %v108
  %211 = vmatprep.subr.bf16.mxu0 0
  %212 = vmatpush1.bf16.msra.mxu0 %v107
  %213 = vmatprep.subr.bf16.mxu0 0
  %214 = vmatpush1.bf16.msra.mxu0 %v106
  %215 = vmatprep.subr.bf16.mxu0 0
  %216 = vmatpush1.bf16.msra.mxu0 %v105
  %217 = vmatprep.subr.bf16.mxu0 0
  %218 = vmatpush1.bf16.msra.mxu0 %v104
  %219 = vmatprep.subr.bf16.mxu0 0
  %220 = vmatpush1.bf16.msra.mxu0 %v103
  %221 = vmatprep.subr.bf16.mxu0 0
  %222 = vmatpush1.bf16.msra.mxu0 %v102
  %223 = vmatprep.subr.bf16.mxu0 0
  %224 = vmatpush1.bf16.msra.mxu0 %v101
  %225 = vmatprep.subr.bf16.mxu0 0
  %226 = vmatpush2.bf16.msra.mxu0 0
  %227 = vmatprep.subr.bf16.mxu0 0
  %228 = vmatpush2.bf16.msra.mxu0 0
  %229 = vmatprep.subr.bf16.mxu0 0
  %230 = vmatpush2.bf16.msra.mxu0 0
  %231 = vmatprep.subr.bf16.mxu0 0
  %232 = vmatpush2.bf16.msra.mxu0 0
  %233 = vmatprep.subr.bf16.mxu0 0
  %234 = vmatpush2.bf16.msra.mxu0 0
  %235 = vmatprep.subr.bf16.mxu0 0
  %236 = vmatpush2.bf16.msra.mxu0 0
  %237 = vmatprep.subr.bf16.mxu0 0
  %238 = vmatpush2.bf16.msra.mxu0 %v129
  %239 = vmatprep.subr.bf16.mxu0 0
  %240 = vmatpush2.bf16.msra.mxu0 %v109
  %241 = vmatprep.mubr.bf16.mxu0 %v204
  %242 = vmatmul.mubr.bf16.gmra.mxu0 %v197
  %v243 = vpop.f32.mrf.mxu0
  %v244 = vadd.f32 %v43, %v243
  %v245 = vpop.f32.mrf.mxu0
  %v246 = vpop.f32.mrf.mxu0
  %v247 = vadd.f32 %v43, %v246
  %v248 = vpop.f32.mrf.mxu0
  %249 = vmatprep.mubr.bf16.mxu0 %v207
  %250 = vmatmul.mubr.bf16.gmra.mxu0 %v199
  %v251 = vpop.f32.mrf.mxu0
  %v252 = vadd.f32 %v43, %v251
  %v253 = vpop.f32.mrf.mxu0
  %v254 = vpop.f32.mrf.mxu0
  %v255 = vadd.f32 %v43, %v254
  %v256 = vpop.f32.mrf.mxu0
  %257 = vdwg.mxu0
  %v258 = vmax.f32 %v166, %v244
  %v259 = vmax.f32 %v169, %v247
  %v260 = vmax.f32 %v174, %v252
  %v261 = vmax.f32 %v177, %v255
  %s262 = scalar_lea.vmem %s0, 64
  %v263 = vld [vmem:[%s262] sm:$0xff]
  %v264 = vld [vmem:[%s262 + $0x8] sm:$0xff]
  %v265 = vld [vmem:[%s262 + $0x10] sm:$0xff]
  %v266 = vld [vmem:[%s262 + $0x18] sm:$0xff]
  %v271 = vunpack.c.l.b16 %v263
  %v272 = vunpack.c.h.b16 %v263
  %v273 = vunpack.c.l.b16 %v264
  %v274 = vunpack.c.h.b16 %v264
  %v275 = vunpack.c.l.b16 %v265
  %v276 = vunpack.c.h.b16 %v265
  %v277 = vunpack.c.l.b16 %v266
  %v278 = vunpack.c.h.b16 %v266
  %v279 = vpack.c.b16 %v273, %v271
  %v280 = vpack.c.b16 %v274, %v272
  %v281 = vpack.c.b16 %v277, %v275
  %v282 = vpack.c.b16 %v278, %v276
  %v286 = vsel %vm120, %v280, 0
  %v289 = vsel %vm120, %v282, 0
  %291 = vmatprep.subr.bf16.mxu0 0
  %292 = vmatpush1.bf16.msra.mxu0 %v108
  %293 = vmatprep.subr.bf16.mxu0 0
  %294 = vmatpush1.bf16.msra.mxu0 %v107
  %295 = vmatprep.subr.bf16.mxu0 0
  %296 = vmatpush1.bf16.msra.mxu0 %v106
  %297 = vmatprep.subr.bf16.mxu0 0
  %298 = vmatpush1.bf16.msra.mxu0 %v105
  %299 = vmatprep.subr.bf16.mxu0 0
  %300 = vmatpush1.bf16.msra.mxu0 %v104
  %301 = vmatprep.subr.bf16.mxu0 0
  %302 = vmatpush1.bf16.msra.mxu0 %v103
  %303 = vmatprep.subr.bf16.mxu0 0
  %304 = vmatpush1.bf16.msra.mxu0 %v102
  %305 = vmatprep.subr.bf16.mxu0 0
  %306 = vmatpush1.bf16.msra.mxu0 %v101
  %307 = vmatprep.subr.bf16.mxu0 0
  %308 = vmatpush2.bf16.msra.mxu0 0
  %309 = vmatprep.subr.bf16.mxu0 0
  %310 = vmatpush2.bf16.msra.mxu0 0
  %311 = vmatprep.subr.bf16.mxu0 0
  %312 = vmatpush2.bf16.msra.mxu0 0
  %313 = vmatprep.subr.bf16.mxu0 0
  %314 = vmatpush2.bf16.msra.mxu0 0
  %315 = vmatprep.subr.bf16.mxu0 0
  %316 = vmatpush2.bf16.msra.mxu0 0
  %317 = vmatprep.subr.bf16.mxu0 0
  %318 = vmatpush2.bf16.msra.mxu0 0
  %319 = vmatprep.subr.bf16.mxu0 0
  %320 = vmatpush2.bf16.msra.mxu0 %v129
  %321 = vmatprep.subr.bf16.mxu0 0
  %322 = vmatpush2.bf16.msra.mxu0 %v109
  %323 = vmatprep.mubr.bf16.mxu0 %v286
  %324 = vmatmul.mubr.bf16.gmra.mxu0 %v279
  %v325 = vpop.f32.mrf.mxu0
  %v326 = vadd.f32 %v43, %v325
  %v327 = vpop.f32.mrf.mxu0
  %v328 = vpop.f32.mrf.mxu0
  %v329 = vadd.f32 %v43, %v328
  %v330 = vpop.f32.mrf.mxu0
  %331 = vmatprep.mubr.bf16.mxu0 %v289
  %332 = vmatmul.mubr.bf16.gmra.mxu0 %v281
  %v333 = vpop.f32.mrf.mxu0
  %v334 = vadd.f32 %v43, %v333
  %v335 = vpop.f32.mrf.mxu0
  %v336 = vpop.f32.mrf.mxu0
  %v337 = vadd.f32 %v43, %v336
  %v338 = vpop.f32.mrf.mxu0
  %339 = vdwg.mxu0
  %s340 = scalar_lea.vmem %s0, 96
  %v341 = vld [vmem:[%s340] sm:$0xff]
  %v342 = vld [vmem:[%s340 + $0x8] sm:$0xff]
  %v343 = vld [vmem:[%s340 + $0x10] sm:$0xff]
  %v344 = vld [vmem:[%s340 + $0x18] sm:$0xff]
  %v349 = vunpack.c.l.b16 %v341
  %v350 = vunpack.c.h.b16 %v341
  %v351 = vunpack.c.l.b16 %v342
  %v352 = vunpack.c.h.b16 %v342
  %v353 = vunpack.c.l.b16 %v343
  %v354 = vunpack.c.h.b16 %v343
  %v355 = vunpack.c.l.b16 %v344
  %v356 = vunpack.c.h.b16 %v344
  %v357 = vpack.c.b16 %v351, %v349
  %v358 = vpack.c.b16 %v352, %v350
  %v359 = vpack.c.b16 %v355, %v353
  %v360 = vpack.c.b16 %v356, %v354
  %v364 = vsel %vm120, %v358, 0
  %v367 = vsel %vm120, %v360, 0
  %369 = vmatprep.subr.bf16.mxu0 0
  %370 = vmatpush1.bf16.msra.mxu0 %v108
  %371 = vmatprep.subr.bf16.mxu0 0
  %372 = vmatpush1.bf16.msra.mxu0 %v107
  %373 = vmatprep.subr.bf16.mxu0 0
  %374 = vmatpush1.bf16.msra.mxu0 %v106
  %375 = vmatprep.subr.bf16.mxu0 0
  %376 = vmatpush1.bf16.msra.mxu0 %v105
  %377 = vmatprep.subr.bf16.mxu0 0
  %378 = vmatpush1.bf16.msra.mxu0 %v104
  %379 = vmatprep.subr.bf16.mxu0 0
  %380 = vmatpush1.bf16.msra.mxu0 %v103
  %381 = vmatprep.subr.bf16.mxu0 0
  %382 = vmatpush1.bf16.msra.mxu0 %v102
  %383 = vmatprep.subr.bf16.mxu0 0
  %384 = vmatpush1.bf16.msra.mxu0 %v101
  %385 = vmatprep.subr.bf16.mxu0 0
  %386 = vmatpush2.bf16.msra.mxu0 0
  %387 = vmatprep.subr.bf16.mxu0 0
  %388 = vmatpush2.bf16.msra.mxu0 0
  %389 = vmatprep.subr.bf16.mxu0 0
  %390 = vmatpush2.bf16.msra.mxu0 0
  %391 = vmatprep.subr.bf16.mxu0 0
  %392 = vmatpush2.bf16.msra.mxu0 0
  %393 = vmatprep.subr.bf16.mxu0 0
  %394 = vmatpush2.bf16.msra.mxu0 0
  %395 = vmatprep.subr.bf16.mxu0 0
  %396 = vmatpush2.bf16.msra.mxu0 0
  %397 = vmatprep.subr.bf16.mxu0 0
  %398 = vmatpush2.bf16.msra.mxu0 %v129
  %399 = vmatprep.subr.bf16.mxu0 0
  %400 = vmatpush2.bf16.msra.mxu0 %v109
  %401 = vmatprep.mubr.bf16.mxu0 %v364
  %402 = vmatmul.mubr.bf16.gmra.mxu0 %v357
  %v403 = vpop.f32.mrf.mxu0
  %v404 = vadd.f32 %v43, %v403
  %v405 = vpop.f32.mrf.mxu0
  %v406 = vpop.f32.mrf.mxu0
  %v407 = vadd.f32 %v43, %v406
  %v408 = vpop.f32.mrf.mxu0
  %409 = vmatprep.mubr.bf16.mxu0 %v367
  %410 = vmatmul.mubr.bf16.gmra.mxu0 %v359
  %v411 = vpop.f32.mrf.mxu0
  %v412 = vadd.f32 %v43, %v411
  %v413 = vpop.f32.mrf.mxu0
  %v414 = vpop.f32.mrf.mxu0
  %v415 = vadd.f32 %v43, %v414
  %v416 = vpop.f32.mrf.mxu0
  %417 = vdwg.mxu0
  %v418 = vmax.f32 %v326, %v404
  %v419 = vmax.f32 %v329, %v407
  %v420 = vmax.f32 %v334, %v412
  %v421 = vmax.f32 %v337, %v415
  %v422 = vmax.f32 %v258, %v418
  %v423 = vmax.f32 %v259, %v419
  %v424 = vmax.f32 %v260, %v420
  %v425 = vmax.f32 %v261, %v421
  %v426 = vmax.f32 %v422, 0.0
  %v427 = vmax.f32 %v423, 0.0
  %v428 = vmax.f32 %v424, 0.0
  %v429 = vmax.f32 %v425, 0.0
  %430 = vst [vmem:[%s3] sm:$0xff] %v426
  %431 = vst [vmem:[%s3 + $0x8] sm:$0xff] %v427
  %432 = vst [vmem:[%s3 + $0x10] sm:$0xff] %v428
  %433 = vst [vmem:[%s3 + $0x18] sm:$0xff] %v429
  // Predicated region
  $region14: #{lenet_dropout_forward.4} parent=0 // pred_check
    _
  $region15: #{lenet_dropout_forward.4} parent=0 // pred_check_branch
    %435 = sbr.rel (0) target = $region17
  $region16: #{lenet_dropout_forward.4} parent=0 // pred_region
    _
  $region17: #{lenet_dropout_forward.4} parent=0 // pred_fallthru
    _
  // Predicated region
  $region18: #{lenet_dropout_forward.4} parent=0 // pred_check
    _
  $region19: #{lenet_dropout_forward.4} parent=0 // pred_check_branch
    %437 = sbr.rel (0) target = $region21
  $region20: #{lenet_dropout_forward.4} parent=0 // pred_region
    _
  $region21: #{lenet_dropout_forward.4} parent=0 // pred_fallthru
    _

// kernel: lenet_dropout_forward.5
$region0: #{lenet_dropout_forward.5}
  #allocation0 [shape = 'u32[]', space=smem, size = 0x4, offset = 0x4, fixed_abs, tag = 'smem constant byte address 0x4 - core index']
  #allocation1 [shape = 'u32[144,128]{1,0:T(1,128)}', space=vmem, size = 0x12000, scoped, tag = 'internal scratch']
  %s0 = inlined_call_operand.vmem [shape: bf16[16,256], index: 0, kind: input, shape index: {}]
  %s1 = inlined_call_operand.vmem [shape: bf16[256,128], index: 1, kind: input, shape index: {}]
  %s2 = inlined_call_operand.vmem [shape: f32[1,128], index: 2, kind: input, shape index: {}]
  %s3 = inlined_call_operand.vmem [shape: bf16[128,128], index: 3, kind: input, shape index: {}]
  %s4 = inlined_call_operand.vmem [shape: f32[1,128], index: 4, kind: input, shape index: {}]
  %s5 = inlined_call_operand.vmem [shape: bf16[128,128], index: 5, kind: input, shape index: {}]
  %s6 = inlined_call_operand.vmem [shape: f32[1,128], index: 6, kind: input, shape index: {}]
  %s7 = inlined_call_operand.vmem [shape: f32[16,128], index: 7, kind: output, shape index: {0}]
  %s8 = inlined_call_operand.vmem [shape: f32[16,128], index: 8, kind: output, shape index: {1}]
  %s9 = inlined_call_operand.vmem [shape: f32[16,128], index: 9, kind: output, shape index: {2}]
  %s10 = inlined_call_operand.vmem [shape: f32[16,128], index: 10, kind: output, shape index: {3}]
  %11 = xla_tuple %s7, %s8, %s9, %s10
  %s12 = sld [smem:[#allocation0]]
  $region62: #{lenet_dropout_forward.5} parent=0
    _
  %s14 = ssub.s32 1, %s12
  %s15 = scalar_select 0, %s14, %s12
  // Predicated region
  $region2: #{lenet_dropout_forward.5} parent=0 // pred_check
    _
  $region3: #{lenet_dropout_forward.5} parent=0 // pred_check_branch
    %17 = sbr.rel (0) target = $region5
  $region4: #{lenet_dropout_forward.5} parent=0 // pred_region
    _
  $region5: #{lenet_dropout_forward.5} parent=0 // pred_fallthru
    _
  // Predicated region
  $region6: #{lenet_dropout_forward.5} parent=0 // pred_check
    _
  $region7: #{lenet_dropout_forward.5} parent=0 // pred_check_branch
    %19 = sbr.rel (0) target = $region9
  $region8: #{lenet_dropout_forward.5} parent=0 // pred_region
    _
  $region9: #{lenet_dropout_forward.5} parent=0 // pred_fallthru
    _
  // Predicated region
  $region10: #{lenet_dropout_forward.5} parent=0 // pred_check
    _
  $region11: #{lenet_dropout_forward.5} parent=0 // pred_check_branch
    %21 = sbr.rel (0) target = $region13
  $region12: #{lenet_dropout_forward.5} parent=0 // pred_region
    _
  $region13: #{lenet_dropout_forward.5} parent=0 // pred_fallthru
    _
  // Predicated region
  $region14: #{lenet_dropout_forward.5} parent=0 // pred_check
    _
  $region15: #{lenet_dropout_forward.5} parent=0 // pred_check_branch
    %23 = sbr.rel (0) target = $region17
  $region16: #{lenet_dropout_forward.5} parent=0 // pred_region
    _
  $region17: #{lenet_dropout_forward.5} parent=0 // pred_fallthru
    _
  // Predicated region
  $region18: #{lenet_dropout_forward.5} parent=0 // pred_check
    _
  $region19: #{lenet_dropout_forward.5} parent=0 // pred_check_branch
    %25 = sbr.rel (0) target = $region21
  $region20: #{lenet_dropout_forward.5} parent=0 // pred_region
    _
  $region21: #{lenet_dropout_forward.5} parent=0 // pred_fallthru
    _
  // Predicated region
  $region22: #{lenet_dropout_forward.5} parent=0 // pred_check
    _
  $region23: #{lenet_dropout_forward.5} parent=0 // pred_check_branch
    %27 = sbr.rel (0) target = $region25
  $region24: #{lenet_dropout_forward.5} parent=0 // pred_region
    _
  $region25: #{lenet_dropout_forward.5} parent=0 // pred_fallthru
    _
  // Predicated region
  $region26: #{lenet_dropout_forward.5} parent=0 // pred_check
    _
  $region27: #{lenet_dropout_forward.5} parent=0 // pred_check_branch
    %29 = sbr.rel (0) target = $region29
  $region28: #{lenet_dropout_forward.5} parent=0 // pred_region
    _
  $region29: #{lenet_dropout_forward.5} parent=0 // pred_fallthru
    _
  %v31 = vld [vmem:[%s0] sm:$0xff]
  %v32 = vld [vmem:[%s0 + $0x8] sm:$0xff]
  %v33 = vld [vmem:[%s1] sm:$0xf]
  %v34 = vld [vmem:[%s1 + $0x4] sm:$0xf]
  %v35 = vld [vmem:[%s1 + $0x8] sm:$0xf]
  %v36 = vld [vmem:[%s1 + $0xc] sm:$0xf]
  %v37 = vld [vmem:[%s1 + $0x10] sm:$0xf]
  %v38 = vld [vmem:[%s1 + $0x14] sm:$0xf]
  %v39 = vld [vmem:[%s1 + $0x18] sm:$0xf]
  %v40 = vld [vmem:[%s1 + $0x1c] sm:$0xf]
  %v41 = vld [vmem:[%s1 + $0x20] sm:$0xf]
  %v42 = vld [vmem:[%s1 + $0x24] sm:$0xf]
  %v43 = vld [vmem:[%s1 + $0x28] sm:$0xf]
  %v44 = vld [vmem:[%s1 + $0x2c] sm:$0xf]
  %v45 = vld [vmem:[%s1 + $0x30] sm:$0xf]
  %v46 = vld [vmem:[%s1 + $0x34] sm:$0xf]
  %v47 = vld [vmem:[%s1 + $0x38] sm:$0xf]
  %v48 = vld [vmem:[%s1 + $0x3c] sm:$0xf]
  %v49 = vld [vmem:[%s1 + $0x40] sm:$0xf]
  %v50 = vld [vmem:[%s1 + $0x44] sm:$0xf]
  %v51 = vld [vmem:[%s1 + $0x48] sm:$0xf]
  %v52 = vld [vmem:[%s1 + $0x4c] sm:$0xf]
  %v53 = vld [vmem:[%s1 + $0x50] sm:$0xf]
  %v54 = vld [vmem:[%s1 + $0x54] sm:$0xf]
  %v55 = vld [vmem:[%s1 + $0x58] sm:$0xf]
  %v56 = vld [vmem:[%s1 + $0x5c] sm:$0xf]
  %v57 = vld [vmem:[%s1 + $0x60] sm:$0xf]
  %v58 = vld [vmem:[%s1 + $0x64] sm:$0xf]
  %v59 = vld [vmem:[%s1 + $0x68] sm:$0xf]
  %v60 = vld [vmem:[%s1 + $0x6c] sm:$0xf]
  %v61 = vld [vmem:[%s1 + $0x70] sm:$0xf]
  %v62 = vld [vmem:[%s1 + $0x74] sm:$0xf]
  %v63 = vld [vmem:[%s1 + $0x78] sm:$0xf]
  %v64 = vld [vmem:[%s1 + $0x7c] sm:$0xf]
  %v65 = vld [vmem:[%s2] sm:$0x1]
  %v67 = vlaneseq
  %v68 = vshrl.u32 %v67, 7
  %v69 = vsub.s32 0, %v68
  %v70 = vrot.slane %v65, %v69
  %v74 = vunpack.c.l.b16 %v31
  %v75 = vunpack.c.h.b16 %v31
  %v76 = vunpack.c.l.b16 %v32
  %v77 = vunpack.c.h.b16 %v32
  %v78 = vpack.c.b16 %v76, %v74
  %v79 = vpack.c.b16 %v77, %v75
  %v114 = vunpack.c.l.b16 %v33
  %v115 = vunpack.c.l.b16 %v34
  %v116 = vunpack.c.l.b16 %v35
  %v117 = vunpack.c.l.b16 %v36
  %v118 = vunpack.c.l.b16 %v37
  %v119 = vunpack.c.l.b16 %v38
  %v120 = vunpack.c.l.b16 %v39
  %v121 = vunpack.c.l.b16 %v40
  %v122 = vunpack.c.l.b16 %v41
  %v123 = vunpack.c.l.b16 %v42
  %v124 = vunpack.c.l.b16 %v43
  %v125 = vunpack.c.l.b16 %v44
  %v126 = vunpack.c.l.b16 %v45
  %v127 = vunpack.c.l.b16 %v46
  %v128 = vunpack.c.l.b16 %v47
  %v129 = vunpack.c.l.b16 %v48
  %v130 = vunpack.c.l.b16 %v49
  %v131 = vunpack.c.l.b16 %v50
  %v132 = vunpack.c.l.b16 %v51
  %v133 = vunpack.c.l.b16 %v52
  %v134 = vunpack.c.l.b16 %v53
  %v135 = vunpack.c.l.b16 %v54
  %v136 = vunpack.c.l.b16 %v55
  %v137 = vunpack.c.l.b16 %v56
  %v138 = vunpack.c.l.b16 %v57
  %v139 = vunpack.c.l.b16 %v58
  %v140 = vunpack.c.l.b16 %v59
  %v141 = vunpack.c.l.b16 %v60
  %v142 = vunpack.c.l.b16 %v61
  %v143 = vunpack.c.l.b16 %v62
  %v144 = vunpack.c.l.b16 %v63
  %v145 = vunpack.c.l.b16 %v64
  %v146 = vpack.c.b16 %v115, %v114
  %v147 = vpack.c.b16 %v117, %v116
  %v148 = vpack.c.b16 %v119, %v118
  %v149 = vpack.c.b16 %v121, %v120
  %v150 = vpack.c.b16 %v123, %v122
  %v151 = vpack.c.b16 %v125, %v124
  %v152 = vpack.c.b16 %v127, %v126
  %v153 = vpack.c.b16 %v129, %v128
  %v154 = vpack.c.b16 %v131, %v130
  %v155 = vpack.c.b16 %v133, %v132
  %v156 = vpack.c.b16 %v135, %v134
  %v157 = vpack.c.b16 %v137, %v136
  %v158 = vpack.c.b16 %v139, %v138
  %v159 = vpack.c.b16 %v141, %v140
  %v160 = vpack.c.b16 %v143, %v142
  %v161 = vpack.c.b16 %v145, %v144
  %178 = vmatprep.subr.bf16.mxu0 0
  %179 = vmatpush1.bf16.msra.mxu0 %v153
  %180 = vmatprep.subr.bf16.mxu0 0
  %181 = vmatpush1.bf16.msra.mxu0 %v152
  %182 = vmatprep.subr.bf16.mxu0 0
  %183 = vmatpush1.bf16.msra.mxu0 %v151
  %184 = vmatprep.subr.bf16.mxu0 0
  %185 = vmatpush1.bf16.msra.mxu0 %v150
  %186 = vmatprep.subr.bf16.mxu0 0
  %187 = vmatpush1.bf16.msra.mxu0 %v149
  %188 = vmatprep.subr.bf16.mxu0 0
  %189 = vmatpush1.bf16.msra.mxu0 %v148
  %190 = vmatprep.subr.bf16.mxu0 0
  %191 = vmatpush1.bf16.msra.mxu0 %v147
  %192 = vmatprep.subr.bf16.mxu0 0
  %193 = vmatpush1.bf16.msra.mxu0 %v146
  %194 = vmatprep.subr.bf16.mxu0 0
  %195 = vmatpush2.bf16.msra.mxu0 %v161
  %196 = vmatprep.subr.bf16.mxu0 0
  %197 = vmatpush2.bf16.msra.mxu0 %v160
  %198 = vmatprep.subr.bf16.mxu0 0
  %199 = vmatpush2.bf16.msra.mxu0 %v159
  %200 = vmatprep.subr.bf16.mxu0 0
  %201 = vmatpush2.bf16.msra.mxu0 %v158
  %202 = vmatprep.subr.bf16.mxu0 0
  %203 = vmatpush2.bf16.msra.mxu0 %v157
  %204 = vmatprep.subr.bf16.mxu0 0
  %205 = vmatpush2.bf16.msra.mxu0 %v156
  %206 = vmatprep.subr.bf16.mxu0 0
  %207 = vmatpush2.bf16.msra.mxu0 %v155
  %208 = vmatprep.subr.bf16.mxu0 0
  %209 = vmatpush2.bf16.msra.mxu0 %v154
  %210 = vmatprep.mubr.bf16.mxu0 %v79
  %211 = vmatmul.mubr.bf16.gmra.mxu0 %v78
  %v212 = vpop.f32.mrf.mxu0
  %v213 = vadd.f32 %v70, %v212
  %v214 = vpop.f32.mrf.mxu0
  %v215 = vpop.f32.mrf.mxu0
  %v216 = vadd.f32 %v70, %v215
  %v217 = vpop.f32.mrf.mxu0
  %218 = vdwg.mxu0
  %v219 = vmax.f32 %v213, 0.0
  %v220 = vmax.f32 %v216, 0.0
  %v221 = vpack.c.bf16 %v220, %v219
  %v222 = vld [vmem:[%s3] sm:$0xf]
  %v223 = vld [vmem:[%s3 + $0x4] sm:$0xf]
  %v224 = vld [vmem:[%s3 + $0x8] sm:$0xf]
  %v225 = vld [vmem:[%s3 + $0xc] sm:$0xf]
  %v226 = vld [vmem:[%s3 + $0x10] sm:$0xf]
  %v227 = vld [vmem:[%s3 + $0x14] sm:$0xf]
  %v228 = vld [vmem:[%s3 + $0x18] sm:$0xf]
  %v229 = vld [vmem:[%s3 + $0x1c] sm:$0xf]
  %v230 = vld [vmem:[%s3 + $0x20] sm:$0xf]
  %v231 = vld [vmem:[%s3 + $0x24] sm:$0xf]
  %v232 = vld [vmem:[%s3 + $0x28] sm:$0xf]
  %v233 = vld [vmem:[%s3 + $0x2c] sm:$0xf]
  %v234 = vld [vmem:[%s3 + $0x30] sm:$0xf]
  %v235 = vld [vmem:[%s3 + $0x34] sm:$0xf]
  %v236 = vld [vmem:[%s3 + $0x38] sm:$0xf]
  %v237 = vld [vmem:[%s3 + $0x3c] sm:$0xf]
  %v238 = vld [vmem:[%s4] sm:$0x1]
  %v240 = vlaneseq
  %v241 = vshrl.u32 %v240, 7
  %v242 = vsub.s32 0, %v241
  %v243 = vrot.slane %v238, %v242
  %v261 = vunpack.c.l.b16 %v222
  %v262 = vunpack.c.l.b16 %v223
  %v263 = vunpack.c.l.b16 %v224
  %v264 = vunpack.c.l.b16 %v225
  %v265 = vunpack.c.l.b16 %v226
  %v266 = vunpack.c.l.b16 %v227
  %v267 = vunpack.c.l.b16 %v228
  %v268 = vunpack.c.l.b16 %v229
  %v269 = vunpack.c.l.b16 %v230
  %v270 = vunpack.c.l.b16 %v231
  %v271 = vunpack.c.l.b16 %v232
  %v272 = vunpack.c.l.b16 %v233
  %v273 = vunpack.c.l.b16 %v234
  %v274 = vunpack.c.l.b16 %v235
  %v275 = vunpack.c.l.b16 %v236
  %v276 = vunpack.c.l.b16 %v237
  %v277 = vpack.c.b16 %v262, %v261
  %v278 = vpack.c.b16 %v264, %v263
  %v279 = vpack.c.b16 %v266, %v265
  %v280 = vpack.c.b16 %v268, %v267
  %v281 = vpack.c.b16 %v270, %v269
  %v282 = vpack.c.b16 %v272, %v271
  %v283 = vpack.c.b16 %v274, %v273
  %v284 = vpack.c.b16 %v276, %v275
  %293 = vmatprep.subr.bf16.mxu0 0
  %294 = vmatpush1.bf16.msra.mxu0 %v284
  %295 = vmatprep.subr.bf16.mxu0 0
  %296 = vmatpush1.bf16.msra.mxu0 %v283
  %297 = vmatprep.subr.bf16.mxu0 0
  %298 = vmatpush1.bf16.msra.mxu0 %v282
  %299 = vmatprep.subr.bf16.mxu0 0
  %300 = vmatpush1.bf16.msra.mxu0 %v281
  %301 = vmatprep.subr.bf16.mxu0 0
  %302 = vmatpush1.bf16.msra.mxu0 %v280
  %303 = vmatprep.subr.bf16.mxu0 0
  %304 = vmatpush1.bf16.msra.mxu0 %v279
  %305 = vmatprep.subr.bf16.mxu0 0
  %306 = vmatpush1.bf16.msra.mxu0 %v278
  %307 = vmatprep.subr.bf16.mxu0 0
  %308 = vmatpush1.bf16.msra.mxu0 %v277
  %309 = vmatprep.subr.bf16.mxu0 0
  %310 = vmatpush2.bf16.msra.mxu0 0
  %311 = vmatprep.subr.bf16.mxu0 0
  %312 = vmatpush2.bf16.msra.mxu0 0
  %313 = vmatprep.subr.bf16.mxu0 0
  %314 = vmatpush2.bf16.msra.mxu0 0
  %315 = vmatprep.subr.bf16.mxu0 0
  %316 = vmatpush2.bf16.msra.mxu0 0
  %317 = vmatprep.subr.bf16.mxu0 0
  %318 = vmatpush2.bf16.msra.mxu0 0
  %319 = vmatprep.subr.bf16.mxu0 0
  %320 = vmatpush2.bf16.msra.mxu0 0
  %321 = vmatprep.subr.bf16.mxu0 0
  %322 = vmatpush2.bf16.msra.mxu0 0
  %323 = vmatprep.subr.bf16.mxu0 0
  %324 = vmatpush2.bf16.msra.mxu0 0
  %325 = vmatprep.mubr.bf16.mxu0 0
  %326 = vmatmul.mubr.bf16.gmra.mxu0 %v221
  %v327 = vpop.f32.mrf.mxu0
  %v328 = vadd.f32 %v243, %v327
  %v329 = vpop.f32.mrf.mxu0
  %v330 = vpop.f32.mrf.mxu0
  %v331 = vadd.f32 %v243, %v330
  %v332 = vpop.f32.mrf.mxu0
  %333 = vdwg.mxu0
  %v334 = vmax.f32 %v328, 0.0
  %v335 = vmax.f32 %v331, 0.0
  %336 = vst [vmem:[%s7] sm:$0xff] %v334
  %337 = vst [vmem:[%s7 + $0x8] sm:$0xff] %v335
  %v338 = vpack.c.bf16 %v335, %v334
  %v339 = vld [vmem:[%s5] sm:$0xf]
  %v340 = vld [vmem:[%s5 + $0x4] sm:$0xf]
  %v341 = vld [vmem:[%s5 + $0x8] sm:$0xf]
  %v342 = vld [vmem:[%s5 + $0xc] sm:$0xf]
  %v343 = vld [vmem:[%s5 + $0x10] sm:$0xf]
  %v344 = vld [vmem:[%s5 + $0x14] sm:$0xf]
  %v345 = vld [vmem:[%s5 + $0x18] sm:$0xf]
  %v346 = vld [vmem:[%s5 + $0x1c] sm:$0xf]
  %v347 = vld [vmem:[%s5 + $0x20] sm:$0xf]
  %v348 = vld [vmem:[%s5 + $0x24] sm:$0xf]
  %v349 = vld [vmem:[%s5 + $0x28] sm:$0xf]
  %v350 = vld [vmem:[%s5 + $0x2c] sm:$0xf]
  %v351 = vld [vmem:[%s5 + $0x30] sm:$0xf]
  %v352 = vld [vmem:[%s5 + $0x34] sm:$0xf]
  %v353 = vld [vmem:[%s5 + $0x38] sm:$0xf]
  %v354 = vld [vmem:[%s5 + $0x3c] sm:$0xf]
  %v355 = vld [vmem:[%s6] sm:$0x1]
  %v357 = vlaneseq
  %v358 = vshrl.u32 %v357, 7
  %v359 = vsub.s32 0, %v358
  %v360 = vrot.slane %v355, %v359
  %v378 = vunpack.c.l.b16 %v339
  %v379 = vunpack.c.l.b16 %v340
  %v380 = vunpack.c.l.b16 %v341
  %v381 = vunpack.c.l.b16 %v342
  %v382 = vunpack.c.l.b16 %v343
  %v383 = vunpack.c.l.b16 %v344
  %v384 = vunpack.c.l.b16 %v345
  %v385 = vunpack.c.l.b16 %v346
  %v386 = vunpack.c.l.b16 %v347
  %v387 = vunpack.c.l.b16 %v348
  %v388 = vunpack.c.l.b16 %v349
  %v389 = vunpack.c.l.b16 %v350
  %v390 = vunpack.c.l.b16 %v351
  %v391 = vunpack.c.l.b16 %v352
  %v392 = vunpack.c.l.b16 %v353
  %v393 = vunpack.c.l.b16 %v354
  %v394 = vpack.c.b16 %v379, %v378
  %v395 = vpack.c.b16 %v381, %v380
  %v396 = vpack.c.b16 %v383, %v382
  %v397 = vpack.c.b16 %v385, %v384
  %v398 = vpack.c.b16 %v387, %v386
  %v399 = vpack.c.b16 %v389, %v388
  %v400 = vpack.c.b16 %v391, %v390
  %v401 = vpack.c.b16 %v393, %v392
  %410 = vmatprep.subr.bf16.mxu0 0
  %411 = vmatpush1.bf16.msra.mxu0 %v401
  %412 = vmatprep.subr.bf16.mxu0 0
  %413 = vmatpush1.bf16.msra.mxu0 %v400
  %414 = vmatprep.subr.bf16.mxu0 0
  %415 = vmatpush1.bf16.msra.mxu0 %v399
  %416 = vmatprep.subr.bf16.mxu0 0
  %417 = vmatpush1.bf16.msra.mxu0 %v398
  %418 = vmatprep.subr.bf16.mxu0 0
  %419 = vmatpush1.bf16.msra.mxu0 %v397
  %420 = vmatprep.subr.bf16.mxu0 0
  %421 = vmatpush1.bf16.msra.mxu0 %v396
  %422 = vmatprep.subr.bf16.mxu0 0
  %423 = vmatpush1.bf16.msra.mxu0 %v395
  %424 = vmatprep.subr.bf16.mxu0 0
  %425 = vmatpush1.bf16.msra.mxu0 %v394
  %426 = vmatprep.subr.bf16.mxu0 0
  %427 = vmatpush2.bf16.msra.mxu0 0
  %428 = vmatprep.subr.bf16.mxu0 0
  %429 = vmatpush2.bf16.msra.mxu0 0
  %430 = vmatprep.subr.bf16.mxu0 0
  %431 = vmatpush2.bf16.msra.mxu0 0
  %432 = vmatprep.subr.bf16.mxu0 0
  %433 = vmatpush2.bf16.msra.mxu0 0
  %434 = vmatprep.subr.bf16.mxu0 0
  %435 = vmatpush2.bf16.msra.mxu0 0
  %436 = vmatprep.subr.bf16.mxu0 0
  %437 = vmatpush2.bf16.msra.mxu0 0
  %438 = vmatprep.subr.bf16.mxu0 0
  %439 = vmatpush2.bf16.msra.mxu0 0
  %440 = vmatprep.subr.bf16.mxu0 0
  %441 = vmatpush2.bf16.msra.mxu0 0
  %442 = vmatprep.mubr.bf16.mxu0 0
  %443 = vmatmul.mubr.bf16.gmra.mxu0 %v338
  %v444 = vpop.f32.mrf.mxu0
  %v445 = vadd.f32 %v360, %v444
  %v446 = vpop.f32.mrf.mxu0
  %v447 = vpop.f32.mrf.mxu0
  %v448 = vadd.f32 %v360, %v447
  %v449 = vpop.f32.mrf.mxu0
  %450 = vdwg.mxu0
  %451 = vst [vmem:[%s8] sm:$0xff] %v445
  %452 = vst [vmem:[%s8 + $0x8] sm:$0xff] %v448
  %v453 = vlaneseq
  %v454 = vand.u32 %v453, 127
  %vm455 = vcmp.lt.s32.totalorder %v454, 3
  %v456 = vsel %vm455, %v445, -1e+30
  %v457 = vsel %vm455, %v448, -1e+30
  %458 = vmax.xlane.f32.xlu0 %v456
  %v459 = vpop.xlane.xlu0 %458
  %460 = vmax.xlane.f32.xlu0 %v457
  %v461 = vpop.xlane.xlu0 %460
  %v462 = vsub.f32 %v445, %v459
  %v463 = vsub.f32 %v448, %v461
  %v464 = vmul.f32 %v462, 1.442695
  %v465 = vpow.pop %v464
  %v466 = vmul.f32 %v463, 1.442695
  %v467 = vpow.pop %v466
  %v468 = vsel %vm455, %v465, 0.0
  %v469 = vsel %vm455, %v467, 0.0
  %470 = vadd.xlane.f32.xlu0 %v468
  %v471 = vpop.xlane.xlu0 %470
  %472 = vadd.xlane.f32.xlu0 %v469
  %v473 = vpop.xlane.xlu0 %472
  %v474 = vrcp.pop %v471
  %v475 = vrcp.pop %v473
  %v476 = vmul.f32 %v468, %v474
  %v477 = vmul.f32 %v469, %v475
  %478 = vst [vmem:[%s9] sm:$0xff] %v476
  %479 = vst [vmem:[%s9 + $0x8] sm:$0xff] %v477
  %v480 = vlog2.pop %v471
  %v481 = vmul.f32 %v480, 0.6931472
  %v482 = vlog2.pop %v473
  %v483 = vmul.f32 %v482, 0.6931472
  %v484 = vsub.f32 %v462, %v481
  %v485 = vsub.f32 %v463, %v483
  %486 = vst [vmem:[%s10] sm:$0xff] %v484
  %487 = vst [vmem:[%s10 + $0x8] sm:$0xff] %v485
  // Predicated region
  $region30: #{lenet_dropout_forward.5} parent=0 // pred_check
    _
  $region31: #{lenet_dropout_forward.5} parent=0 // pred_check_branch
    %489 = sbr.rel (0) target = $region33
  $region32: #{lenet_dropout_forward.5} parent=0 // pred_region
    _
  $region33: #{lenet_dropout_forward.5} parent=0 // pred_fallthru
    _
  // Predicated region
  $region34: #{lenet_dropout_forward.5} parent=0 // pred_check
    _
  $region35: #{lenet_dropout_forward.5} parent=0 // pred_check_branch
    %491 = sbr.rel (0) target = $region37
  $region36: #{lenet_dropout_forward.5} parent=0 // pred_region
    _
  $region37: #{lenet_dropout_forward.5} parent=0 // pred_fallthru
    _
  // Predicated region
  $region38: #{lenet_dropout_forward.5} parent=0 // pred_check
    _
  $region39: #{lenet_dropout_forward.5} parent=0 // pred_check_branch
    %493 = sbr.rel (0) target = $region41
  $region40: #{lenet_dropout_forward.5} parent=0 // pred_region
    _
  $region41: #{lenet_dropout_forward.5} parent=0 // pred_fallthru
    _
  // Predicated region
  $region42: #{lenet_dropout_forward.5} parent=0 // pred_check
    _
  $region43: #{lenet_dropout_forward.5} parent=0 // pred_check_branch
    %495 = sbr.rel (0) target = $region45
  $region44: #{lenet_dropout_forward.5} parent=0 // pred_region
    _
  $region45: #{lenet_dropout_forward.5} parent=0 // pred_fallthru
    _
  // Predicated region
  $region46: #{lenet_dropout_forward.5} parent=0 // pred_check
    _
  $region47: #{lenet_dropout_forward.5} parent=0 // pred_check_branch
    %497 = sbr.rel (0) target = $region49
  $region48: #{lenet_dropout_forward.5} parent=0 // pred_region
    _
  $region49: #{lenet_dropout_forward.5} parent=0 // pred_fallthru
    _
  // Predicated region
  $region50: #{lenet_dropout_forward.5} parent=0 // pred_check
    _
  $region51: #{lenet_dropout_forward.5} parent=0 // pred_check_branch
    %499 = sbr.rel (0) target = $region53
  $region52: #{lenet_dropout_forward.5} parent=0 // pred_region
    _
  $region53: #{lenet_dropout_forward.5} parent=0 // pred_fallthru
    _
  // Predicated region
  $region54: #{lenet_dropout_forward.5} parent=0 // pred_check
    _
  $region55: #{lenet_dropout_forward.5} parent=0 // pred_check_branch
    %501 = sbr.rel (0) target = $region57
  $region56: #{lenet_dropout_forward.5} parent=0 // pred_region
    _
  $region57: #{lenet_dropout_forward.5} parent=0 // pred_fallthru
    _
  // Predicated region
  $region58: #{lenet_dropout_forward.5} parent=0 // pred_check
    _
  $region59: #{lenet_dropout_forward.5} parent=0 // pred_check_branch
    %503 = sbr.rel (0) target = $region61
  $region60: #{lenet_dropout_forward.5} parent=0 // pred_region
    _
  $region61: #{lenet_dropout_forward.5} parent=0 // pred_fallthru
    _

</llo_original>
